<compile_context>
chip_gen: v5e
topology: v5e:2x2
jax: 0.10.0
libtpu: 0.0.40
codegen_flags: <defaults>
</compile_context>

<pallas_src>
import jax
import jax.numpy as jnp
import numpy as np
from jax.experimental import pallas as pl
from jax.experimental.pallas import tpu as pltpu


def _round_up(x, m):
    return (x + m - 1) // m * m


# --------------------------------------------------------------------------- #
# Kernel
# --------------------------------------------------------------------------- #
def _gru_kernel(x_ref, h0_ref, w_i_ref, w_h_ref, b_i_ref, b_hn_ref,
                w_out_ref, b_out_ref, o_ref):
    """One tile of TN slates: full GRU recurrence + fused Linear(D->1) head.

    x_ref   : (L, TN, D)   time-major item embeddings for this tile
    h0_ref  : (TN, Hp)     initial hidden state (user embeddings), lane-padded
    w_i_ref : (D, 3Hp)     fused input-gate weights (r|z|n), lane-padded per gate
    w_h_ref : (Hp, 3Hp)    fused recurrent weights
    b_i_ref : (1, 3Hp)     b_i with b_hr/b_hz folded in
    b_hn_ref: (1, Hp)      recurrent bias of the candidate gate (stays inside r*(...))
    w_out_ref:(1, Hp)      Linear(D->1) weight row (zero in padded lanes)
    b_out_ref:(1, 1)       Linear bias
    o_ref   : (TN, L)      per-item logits (slate-major)
    """
    L, TN, D = x_ref.shape
    Hp = h0_ref.shape[-1]

    # Constant weights / biases: read once per tile (single-buffered blocks).
    w_h = w_h_ref[...]                                     # (Hp, 3Hp)
    b_hn = b_hn_ref[...]                                   # (1, Hp)
    w_out = w_out_ref[...]                                 # (1, Hp)
    b_out = b_out_ref[0, 0]

    # Hoisted input projection: one (L*TN, D) @ (D, 3Hp) matmul for all steps.
    x_all = x_ref[...].reshape(L * TN, D)
    gx_all = (jnp.dot(x_all, w_i_ref[...], preferred_element_type=jnp.float32)
              + b_i_ref[...]).reshape(L, TN, 3 * Hp)

    # Lane index row used to place each step's logit column into the (TN, L) output.
    t_lane = jax.lax.broadcasted_iota(jnp.int32, (1, L), 1)

    # Serial GRU recurrence (torch gate order r, z, n).  L is small and static,
    # so fully unroll: MXU pushes, EUP sigmoid/tanh, VPU blends and the XLU
    # head-reduce interleave across timesteps.
    h = h0_ref[...]                                        # (TN, Hp) f32
    logits = jnp.zeros((TN, L), jnp.float32)
    for t in range(L):
        gh = jnp.dot(h, w_h, preferred_element_type=jnp.float32)       # (TN, 3Hp)
        gx = gx_all[t]                                                  # slab select
        r = jax.nn.sigmoid(gx[:, :Hp] + gh[:, :Hp])
        z = jax.nn.sigmoid(gx[:, Hp:2 * Hp] + gh[:, Hp:2 * Hp])
        n = jnp.tanh(gx[:, 2 * Hp:] + r * (gh[:, 2 * Hp:] + b_hn))
        h = (1.0 - z) * n + z * h
        # Output head Linear(D->1) for this step: elementwise mul + lane reduce
        # (XLU) — no width-1 MXU matmul, no hidden-state scratch.
        col = jnp.sum(h * w_out, axis=-1, keepdims=True)                # (TN, 1)
        logits = logits + jnp.where(t_lane == t, col, 0.0)
    o_ref[...] = logits + b_out                                         # one store


# --------------------------------------------------------------------------- #
# Wrapper-side parameter fusion / lane padding
# --------------------------------------------------------------------------- #
def _fuse_and_pad_params(params, H):
    """Pad each fused gate segment to a 128-lane boundary and fold b_hr/b_hz into b_i.

    Padded lanes carry zero weights/biases, so padded hidden lanes stay exactly
    zero through the recurrence and never contribute to the logits.
    """
    Hp = _round_up(H, 128)
    pad = Hp - H

    def split3(a):
        return a[:, :H], a[:, H:2 * H], a[:, 2 * H:]

    def padlane(a):
        if pad == 0:
            return a
        return jnp.pad(a, [(0, 0)] * (a.ndim - 1) + [(0, pad)])

    wir, wiz, win = split3(params["w_i"])
    whr, whz, whn = split3(params["w_h"])
    bir, biz, bin_ = split3(params["b_i"])
    bhr, bhz, bhn = split3(params["b_h"])

    w_i_p = jnp.concatenate([padlane(wir), padlane(wiz), padlane(win)], axis=1)   # (D, 3Hp)
    w_h_p = jnp.concatenate([padlane(whr), padlane(whz), padlane(whn)], axis=1)   # (H, 3Hp)
    if pad:
        w_h_p = jnp.pad(w_h_p, ((0, pad), (0, 0)))                                # (Hp, 3Hp)
    # Fold b_hr / b_hz into the input bias; b_hn must stay inside r*(...).
    b_i_p = jnp.concatenate(
        [padlane(bir + bhr), padlane(biz + bhz), padlane(bin_)], axis=1)          # (1, 3Hp)
    b_hn_p = padlane(bhn)                                                         # (1, Hp)
    w_out_p = padlane(params["w_out"])                                            # (1, Hp)
    return Hp, w_i_p, w_h_p, b_i_p, b_hn_p, w_out_p


def _choose_tile_n(N, tile_n):
    if N >= 2 * tile_n:
        return tile_n
    if N > 8:
        # Split into >= 2 grid steps so a v7x megacore can use both TensorCores.
        return _round_up((N + 1) // 2, 8)
    return _round_up(max(N, 1), 8)


def _vmem_limit_bytes(L, TN, D, Hp):
    f = 4
    lane = lambda d: _round_up(d, 128)
    est = (2 * L * TN * lane(D) * f                 # x tile (double-buffered)
           + 2 * TN * lane(Hp) * f                  # h0 tile (double-buffered)
           + 2 * TN * lane(L) * f                   # out tile (double-buffered)
           + (D * 3 * Hp + Hp * 3 * Hp + 5 * Hp + 128) * f   # single-buffered weights
           + (L * TN * 3 * Hp + 3 * TN * 3 * Hp + 6 * TN * Hp) * f)  # gx_all + gate temps
    return max(32 * 1024 * 1024, min(96 * 1024 * 1024, int(1.25 * est)))


# --------------------------------------------------------------------------- #
# Forward
# --------------------------------------------------------------------------- #
def slatewise_gru_forward(item_embs, user_embs, params, *, tile_n=256):
    """item_embs: (B, S, L, D), user_embs: (B, S, D) -> (B, S, L).

    tile_n: slate-tile width.  256 fills the 256-wide MXUs on v6e/v7x; use 128 on v5e.
    """
    B, S, L, D = item_embs.shape
    H = D
    N = B * S

    Hp, w_i_p, w_h_p, b_i_p, b_hn_p, w_out_p = _fuse_and_pad_params(params, H)
    b_out = params["b_out"]

    # Time-major x so the per-step gate slice inside the kernel is a cheap slab
    # select (no cross-sublane relayout in the serial recurrence).
    x = jnp.transpose(item_embs.reshape(N, L, D).astype(jnp.float32), (1, 0, 2))  # (L, N, D)
    h0 = user_embs.reshape(N, D).astype(jnp.float32)
    if Hp != H:
        h0 = jnp.pad(h0, ((0, 0), (0, Hp - H)))                                   # (N, Hp)

    TN = _choose_tile_n(N, tile_n)
    N_pad = _round_up(N, TN)
    if N_pad != N:
        # Pad only when the last tile is ragged.  Padded slates are independent
        # garbage columns and are dropped by out[:N] below — safe as long as no
        # cross-slate reduction is ever added to the kernel.
        x = jnp.pad(x, ((0, 0), (0, N_pad - N), (0, 0)))
        h0 = jnp.pad(h0, ((0, N_pad - N), (0, 0)))
    grid = (N_pad // TN,)

    cost = pl.CostEstimate(
        flops=int(N_pad * L * (2 * D * 3 * Hp + 2 * Hp * 3 * Hp + 14 * Hp)),
        transcendentals=int(3 * N_pad * L * Hp),
        bytes_accessed=int(4 * (x.size + h0.size + N_pad * L + w_i_p.size
                                + w_h_p.size + b_i_p.size + b_hn_p.size
                                + w_out_p.size + 1)),
    )

    def call(single_buffer_weights):
        if single_buffer_weights:
            # Constant-index weight/bias blocks: a single VMEM buffer is enough;
            # default double-buffering would only waste VMEM (matters on v7x).
            def const_spec(a):
                return pl.BlockSpec(a.shape, lambda i: (0,) * a.ndim,
                                    pipeline_mode=pl.Buffered(1))
        else:
            def const_spec(a):
                return pl.BlockSpec(a.shape, lambda i: (0,) * a.ndim)

        return pl.pallas_call(
            _gru_kernel,
            grid=grid,
            in_specs=[
                pl.BlockSpec((L, TN, D), lambda i: (0, i, 0)),    # x tile
                pl.BlockSpec((TN, Hp), lambda i: (i, 0)),         # h0 tile
                const_spec(w_i_p),                                # (D, 3Hp)
                const_spec(w_h_p),                                # (Hp, 3Hp)
                const_spec(b_i_p),                                # (1, 3Hp)
                const_spec(b_hn_p),                               # (1, Hp)
                const_spec(w_out_p),                              # (1, Hp)
                const_spec(b_out),                                # (1, 1)
            ],
            out_specs=pl.BlockSpec((TN, L), lambda i: (i, 0)),
            out_shape=jax.ShapeDtypeStruct((N_pad, L), jnp.float32),
            compiler_params=pltpu.CompilerParams(
                dimension_semantics=("parallel",),
                vmem_limit_bytes=_vmem_limit_bytes(L, TN, D, Hp),
            ),
            cost_estimate=cost,
        )(x, h0, w_i_p, w_h_p, b_i_p, b_hn_p, w_out_p, b_out)

    try:
        out = jax.block_until_ready(call(True))
    except Exception:
        # TODO(synk): pipeline_mode=pl.Buffered(1) not available in this JAX —
        # fall back to default double-buffered weight blocks (correctness identical).
        out = jax.block_until_ready(call(False))

    # Slate-major output: (N_pad, L) -> (B, S, L), no transpose needed.
    return out[:N].reshape(B, S, L)


# --------------------------------------------------------------------------- #
# Pure-JAX reference (torch.nn.GRU + Linear semantics, unfused/unpadded params)
# --------------------------------------------------------------------------- #
def slatewise_gru_reference(item_embs, user_embs, params):
    B, S, L, D = item_embs.shape
    H = D
    N = B * S
    x = item_embs.reshape(N, L, D)
    h = user_embs.reshape(N, D)
    hi = jax.lax.Precision.HIGHEST
    w_i, w_h = params["w_i"], params["w_h"]
    b_i, b_h = params["b_i"], params["b_h"]
    outs = []
    for t in range(L):
        gx = jnp.dot(x[:, t, :], w_i, precision=hi) + b_i
        gh = jnp.dot(h, w_h, precision=hi) + b_h
        r = jax.nn.sigmoid(gx[:, :H] + gh[:, :H])
        z = jax.nn.sigmoid(gx[:, H:2 * H] + gh[:, H:2 * H])
        n = jnp.tanh(gx[:, 2 * H:] + r * gh[:, 2 * H:])
        h = (1.0 - z) * n + z * h
        outs.append(jnp.sum(h * params["w_out"], axis=-1) + params["b_out"][0, 0])
    return jnp.stack(outs, axis=1).reshape(B, S, L)


def make_params(key, emb_dim):
    """Deterministic GRU + Linear parameters, gate-fused (torch r,z,n order)."""
    H = emb_dim
    k = 1.0 / np.sqrt(H)
    keys = jax.random.split(key, 14)
    u = lambda kk, shape: jax.random.uniform(kk, shape, jnp.float32, -k, k)
    w_ir, w_iz, w_in = u(keys[0], (H, H)), u(keys[1], (H, H)), u(keys[2], (H, H))
    w_hr, w_hz, w_hn = u(keys[3], (H, H)), u(keys[4], (H, H)), u(keys[5], (H, H))
    b_ir, b_iz, b_in = u(keys[6], (1, H)), u(keys[7], (1, H)), u(keys[8], (1, H))
    b_hr, b_hz, b_hn = u(keys[9], (1, H)), u(keys[10], (1, H)), u(keys[11], (1, H))
    return dict(
        w_i=jnp.concatenate([w_ir, w_iz, w_in], axis=1),    # (D, 3H)
        w_h=jnp.concatenate([w_hr, w_hz, w_hn], axis=1),    # (D, 3H)
        b_i=jnp.concatenate([b_ir, b_iz, b_in], axis=1),    # (1, 3H)
        b_h=jnp.concatenate([b_hr, b_hz, b_hn], axis=1),    # (1, 3H)
        w_out=u(keys[12], (1, H)),                          # Linear(D->1) weight row
        b_out=u(keys[13], (1, 1)),                          # Linear bias
    )


if __name__ == "__main__":
    B, S, L, D = 2, 3, 8, 32   # batch, slates-per-batch, slate length, embedding dim

    root = jax.random.PRNGKey(0)
    k_item, k_user, k_par = jax.random.split(root, 3)

    item_embs = jax.random.normal(k_item, (B, S, L, D), jnp.float32)
    user_embs = jax.random.normal(k_user, (B, S, D), jnp.float32)
    params = make_params(k_par, D)

    out = jax.block_until_ready(slatewise_gru_forward(item_embs, user_embs, params))
    ref = jax.block_until_ready(slatewise_gru_reference(item_embs, user_embs, params))

    assert out.shape == (B, S, L), out.shape
    # Kernel matmuls use default Mosaic f32 (multi-pass) precision vs HIGHEST in
    # the reference; at D=32 the error is well below 1e-4.  For large D either
    # pass precision=HIGHEST in-kernel or loosen further when moving to bf16.
    np.testing.assert_allclose(np.asarray(out), np.asarray(ref), rtol=1e-4, atol=1e-4)
    print("KERNEL_OK")
</pallas_src>

<mosaic_0001>
module attributes {stable_mosaic.version = 11 : i64} {
  func.func @_gru_kernel(%arg0: i32, %arg1: memref<8x8x32xf32, #tpu.memory_space<vmem>>, %arg2: memref<8x128xf32, #tpu.memory_space<vmem>>, %arg3: memref<32x384xf32, #tpu.memory_space<vmem>>, %arg4: memref<128x384xf32, #tpu.memory_space<vmem>>, %arg5: memref<1x384xf32, #tpu.memory_space<vmem>>, %arg6: memref<1x128xf32, #tpu.memory_space<vmem>>, %arg7: memref<1x128xf32, #tpu.memory_space<vmem>>, %arg8: memref<1x1xf32, #tpu.memory_space<vmem>>, %arg9: memref<8x8xf32, #tpu.memory_space<vmem>>) attributes {dimension_semantics = [#tpu.dimension_semantics<parallel>], iteration_bounds = array<i64: 1>, scalar_prefetch = 0 : i64, scratch_operands = 0 : i64, tpu.core_type = #tpu.core_type<tc>, window_params = [{transform_indices = @transform_0, window_bounds = array<i64: 8, 8, 32>}, {transform_indices = @transform_1, window_bounds = array<i64: 8, 128>}, {pipeline_mode = #tpu.pipeline_mode<synchronous>, transform_indices = @transform_2, window_bounds = array<i64: 32, 384>}, {pipeline_mode = #tpu.pipeline_mode<synchronous>, transform_indices = @transform_3, window_bounds = array<i64: 128, 384>}, {pipeline_mode = #tpu.pipeline_mode<synchronous>, transform_indices = @transform_4, window_bounds = array<i64: 1, 384>}, {pipeline_mode = #tpu.pipeline_mode<synchronous>, transform_indices = @transform_5, window_bounds = array<i64: 1, 128>}, {pipeline_mode = #tpu.pipeline_mode<synchronous>, transform_indices = @transform_6, window_bounds = array<i64: 1, 128>}, {pipeline_mode = #tpu.pipeline_mode<synchronous>, transform_indices = @transform_7, window_bounds = array<i64: 1, 1>}, {transform_indices = @transform_8, window_bounds = array<i64: 8, 8>}]} {
    %c0 = arith.constant 0 : index
    %c0_0 = arith.constant 0 : index
    %0 = vector.load %arg4[%c0, %c0_0] : memref<128x384xf32, #tpu.memory_space<vmem>>, vector<128x384xf32>
    %c0_1 = arith.constant 0 : index
    %c0_2 = arith.constant 0 : index
    %1 = vector.load %arg6[%c0_1, %c0_2] : memref<1x128xf32, #tpu.memory_space<vmem>>, vector<1x128xf32>
    %c0_3 = arith.constant 0 : index
    %c0_4 = arith.constant 0 : index
    %2 = vector.load %arg7[%c0_3, %c0_4] : memref<1x128xf32, #tpu.memory_space<vmem>>, vector<1x128xf32>
    %c0_5 = arith.constant 0 : index
    %c0_6 = arith.constant 0 : index
    %3 = vector.load %arg8[%c0_5, %c0_6] : memref<1x1xf32, #tpu.memory_space<vmem>>, vector<1x1xf32>
    %4 = vector.extract %3[0, 0] : f32 from vector<1x1xf32>
    %c0_7 = arith.constant 0 : index
    %c0_8 = arith.constant 0 : index
    %c0_9 = arith.constant 0 : index
    %5 = vector.load %arg1[%c0_7, %c0_8, %c0_9] : memref<8x8x32xf32, #tpu.memory_space<vmem>>, vector<8x8x32xf32>
    %6 = vector.shape_cast %5 : vector<8x8x32xf32> to vector<64x32xf32>
    %c0_10 = arith.constant 0 : index
    %c0_11 = arith.constant 0 : index
    %7 = vector.load %arg3[%c0_10, %c0_11] : memref<32x384xf32, #tpu.memory_space<vmem>>, vector<32x384xf32>
    %cst = arith.constant dense<0.000000e+00> : vector<64x384xf32>
    %8 = tpu.matmul %6, %7, %cst {dimension_numbers = #tpu.dot_dimension_numbers<[1], [0], [0], [1], [0, 0, 1, 1], [], []>} : vector<64x32xf32>, vector<32x384xf32>, vector<64x384xf32> -> vector<64x384xf32>
    %c0_12 = arith.constant 0 : index
    %c0_13 = arith.constant 0 : index
    %9 = vector.load %arg5[%c0_12, %c0_13] : memref<1x384xf32, #tpu.memory_space<vmem>>, vector<1x384xf32>
    %10 = vector.broadcast %9 : vector<1x384xf32> to vector<64x384xf32>
    %11 = arith.addf %8, %10 : vector<64x384xf32>
    %12 = vector.shape_cast %11 : vector<64x384xf32> to vector<8x8x384xf32>
    %13 = tpu.iota {dimensions = array<i32: 1>} : vector<1x8xi32>
    %c0_14 = arith.constant 0 : index
    %c0_15 = arith.constant 0 : index
    %14 = vector.load %arg2[%c0_14, %c0_15] : memref<8x128xf32, #tpu.memory_space<vmem>>, vector<8x128xf32>
    %cst_16 = arith.constant 0.000000e+00 : f32
    %15 = vector.broadcast %cst_16 : f32 to vector<8x8xf32>
    %cst_17 = arith.constant dense<0.000000e+00> : vector<8x384xf32>
    %16 = tpu.matmul %14, %0, %cst_17 {dimension_numbers = #tpu.dot_dimension_numbers<[1], [0], [0], [1], [0, 0, 1, 1], [], []>} : vector<8x128xf32>, vector<128x384xf32>, vector<8x384xf32> -> vector<8x384xf32>
    %17 = vector.extract_strided_slice %12 {offsets = [0, 0, 0], sizes = [1, 8, 384], strides = [1, 1, 1]} : vector<8x8x384xf32> to vector<1x8x384xf32>
    %18 = vector.shape_cast %17 : vector<1x8x384xf32> to vector<8x384xf32>
    %19 = vector.extract_strided_slice %18 {offsets = [0, 0], sizes = [8, 128], strides = [1, 1]} : vector<8x384xf32> to vector<8x128xf32>
    %20 = vector.extract_strided_slice %16 {offsets = [0, 0], sizes = [8, 128], strides = [1, 1]} : vector<8x384xf32> to vector<8x128xf32>
    %21 = arith.addf %19, %20 : vector<8x128xf32>
    %22 = arith.negf %21 : vector<8x128xf32>
    %23 = math.exp %22 : vector<8x128xf32>
    %cst_18 = arith.constant 1.000000e+00 : f32
    %24 = vector.broadcast %cst_18 : f32 to vector<8x128xf32>
    %25 = arith.addf %24, %23 : vector<8x128xf32>
    %26 = arith.divf %24, %25 : vector<8x128xf32>
    %27 = vector.extract_strided_slice %18 {offsets = [0, 128], sizes = [8, 128], strides = [1, 1]} : vector<8x384xf32> to vector<8x128xf32>
    %28 = vector.extract_strided_slice %16 {offsets = [0, 128], sizes = [8, 128], strides = [1, 1]} : vector<8x384xf32> to vector<8x128xf32>
    %29 = arith.addf %27, %28 : vector<8x128xf32>
    %30 = arith.negf %29 : vector<8x128xf32>
    %31 = math.exp %30 : vector<8x128xf32>
    %cst_19 = arith.constant 1.000000e+00 : f32
    %32 = vector.broadcast %cst_19 : f32 to vector<8x128xf32>
    %33 = arith.addf %32, %31 : vector<8x128xf32>
    %34 = arith.divf %32, %33 : vector<8x128xf32>
    %35 = vector.extract_strided_slice %18 {offsets = [0, 256], sizes = [8, 128], strides = [1, 1]} : vector<8x384xf32> to vector<8x128xf32>
    %36 = vector.extract_strided_slice %16 {offsets = [0, 256], sizes = [8, 128], strides = [1, 1]} : vector<8x384xf32> to vector<8x128xf32>
    %37 = vector.broadcast %1 : vector<1x128xf32> to vector<8x128xf32>
    %38 = arith.addf %36, %37 : vector<8x128xf32>
    %39 = arith.mulf %26, %38 : vector<8x128xf32>
    %40 = arith.addf %35, %39 : vector<8x128xf32>
    %41 = math.tanh %40 : vector<8x128xf32>
    %cst_20 = arith.constant 1.000000e+00 : f32
    %42 = vector.broadcast %cst_20 : f32 to vector<8x128xf32>
    %43 = arith.subf %42, %34 : vector<8x128xf32>
    %44 = arith.mulf %43, %41 : vector<8x128xf32>
    %45 = arith.mulf %34, %14 : vector<8x128xf32>
    %46 = arith.addf %44, %45 : vector<8x128xf32>
    %47 = vector.broadcast %2 : vector<1x128xf32> to vector<8x128xf32>
    %48 = arith.mulf %46, %47 : vector<8x128xf32>
    %cst_21 = arith.constant dense<0.000000e+00> : vector<8xf32>
    %49 = vector.multi_reduction <add>, %48, %cst_21 [1] : vector<8x128xf32> to vector<8xf32>
    %50 = vector.shape_cast %49 : vector<8xf32> to vector<8x1xf32>
    %c0_i32 = arith.constant 0 : i32
    %51 = vector.broadcast %c0_i32 : i32 to vector<1x8xi32>
    %52 = arith.cmpi eq, %13, %51 : vector<1x8xi32>
    %cst_22 = arith.constant 0.000000e+00 : f32
    %53 = vector.shape_cast %52 : vector<1x8xi1> to vector<1x8xi1>
    %54 = vector.broadcast %53 : vector<1x8xi1> to vector<8x8xi1>
    %55 = vector.shape_cast %50 : vector<8x1xf32> to vector<8x1xf32>
    %56 = vector.broadcast %55 : vector<8x1xf32> to vector<8x8xf32>
    %57 = vector.broadcast %cst_22 : f32 to vector<8x8xf32>
    %58 = arith.select %54, %56, %57 : vector<8x8xi1>, vector<8x8xf32>
    %59 = arith.addf %15, %58 : vector<8x8xf32>
    %cst_23 = arith.constant dense<0.000000e+00> : vector<8x384xf32>
    %60 = tpu.matmul %46, %0, %cst_23 {dimension_numbers = #tpu.dot_dimension_numbers<[1], [0], [0], [1], [0, 0, 1, 1], [], []>} : vector<8x128xf32>, vector<128x384xf32>, vector<8x384xf32> -> vector<8x384xf32>
    %61 = vector.extract_strided_slice %12 {offsets = [1, 0, 0], sizes = [1, 8, 384], strides = [1, 1, 1]} : vector<8x8x384xf32> to vector<1x8x384xf32>
    %62 = vector.shape_cast %61 : vector<1x8x384xf32> to vector<8x384xf32>
    %63 = vector.extract_strided_slice %62 {offsets = [0, 0], sizes = [8, 128], strides = [1, 1]} : vector<8x384xf32> to vector<8x128xf32>
    %64 = vector.extract_strided_slice %60 {offsets = [0, 0], sizes = [8, 128], strides = [1, 1]} : vector<8x384xf32> to vector<8x128xf32>
    %65 = arith.addf %63, %64 : vector<8x128xf32>
    %66 = arith.negf %65 : vector<8x128xf32>
    %67 = math.exp %66 : vector<8x128xf32>
    %cst_24 = arith.constant 1.000000e+00 : f32
    %68 = vector.broadcast %cst_24 : f32 to vector<8x128xf32>
    %69 = arith.addf %68, %67 : vector<8x128xf32>
    %70 = arith.divf %68, %69 : vector<8x128xf32>
    %71 = vector.extract_strided_slice %62 {offsets = [0, 128], sizes = [8, 128], strides = [1, 1]} : vector<8x384xf32> to vector<8x128xf32>
    %72 = vector.extract_strided_slice %60 {offsets = [0, 128], sizes = [8, 128], strides = [1, 1]} : vector<8x384xf32> to vector<8x128xf32>
    %73 = arith.addf %71, %72 : vector<8x128xf32>
    %74 = arith.negf %73 : vector<8x128xf32>
    %75 = math.exp %74 : vector<8x128xf32>
    %cst_25 = arith.constant 1.000000e+00 : f32
    %76 = vector.broadcast %cst_25 : f32 to vector<8x128xf32>
    %77 = arith.addf %76, %75 : vector<8x128xf32>
    %78 = arith.divf %76, %77 : vector<8x128xf32>
    %79 = vector.extract_strided_slice %62 {offsets = [0, 256], sizes = [8, 128], strides = [1, 1]} : vector<8x384xf32> to vector<8x128xf32>
    %80 = vector.extract_strided_slice %60 {offsets = [0, 256], sizes = [8, 128], strides = [1, 1]} : vector<8x384xf32> to vector<8x128xf32>
    %81 = vector.broadcast %1 : vector<1x128xf32> to vector<8x128xf32>
    %82 = arith.addf %80, %81 : vector<8x128xf32>
    %83 = arith.mulf %70, %82 : vector<8x128xf32>
    %84 = arith.addf %79, %83 : vector<8x128xf32>
    %85 = math.tanh %84 : vector<8x128xf32>
    %cst_26 = arith.constant 1.000000e+00 : f32
    %86 = vector.broadcast %cst_26 : f32 to vector<8x128xf32>
    %87 = arith.subf %86, %78 : vector<8x128xf32>
    %88 = arith.mulf %87, %85 : vector<8x128xf32>
    %89 = arith.mulf %78, %46 : vector<8x128xf32>
    %90 = arith.addf %88, %89 : vector<8x128xf32>
    %91 = vector.broadcast %2 : vector<1x128xf32> to vector<8x128xf32>
    %92 = arith.mulf %90, %91 : vector<8x128xf32>
    %cst_27 = arith.constant dense<0.000000e+00> : vector<8xf32>
    %93 = vector.multi_reduction <add>, %92, %cst_27 [1] : vector<8x128xf32> to vector<8xf32>
    %94 = vector.shape_cast %93 : vector<8xf32> to vector<8x1xf32>
    %c1_i32 = arith.constant 1 : i32
    %95 = vector.broadcast %c1_i32 : i32 to vector<1x8xi32>
    %96 = arith.cmpi eq, %13, %95 : vector<1x8xi32>
    %cst_28 = arith.constant 0.000000e+00 : f32
    %97 = vector.shape_cast %96 : vector<1x8xi1> to vector<1x8xi1>
    %98 = vector.broadcast %97 : vector<1x8xi1> to vector<8x8xi1>
    %99 = vector.shape_cast %94 : vector<8x1xf32> to vector<8x1xf32>
    %100 = vector.broadcast %99 : vector<8x1xf32> to vector<8x8xf32>
    %101 = vector.broadcast %cst_28 : f32 to vector<8x8xf32>
    %102 = arith.select %98, %100, %101 : vector<8x8xi1>, vector<8x8xf32>
    %103 = arith.addf %59, %102 : vector<8x8xf32>
    %cst_29 = arith.constant dense<0.000000e+00> : vector<8x384xf32>
    %104 = tpu.matmul %90, %0, %cst_29 {dimension_numbers = #tpu.dot_dimension_numbers<[1], [0], [0], [1], [0, 0, 1, 1], [], []>} : vector<8x128xf32>, vector<128x384xf32>, vector<8x384xf32> -> vector<8x384xf32>
    %105 = vector.extract_strided_slice %12 {offsets = [2, 0, 0], sizes = [1, 8, 384], strides = [1, 1, 1]} : vector<8x8x384xf32> to vector<1x8x384xf32>
    %106 = vector.shape_cast %105 : vector<1x8x384xf32> to vector<8x384xf32>
    %107 = vector.extract_strided_slice %106 {offsets = [0, 0], sizes = [8, 128], strides = [1, 1]} : vector<8x384xf32> to vector<8x128xf32>
    %108 = vector.extract_strided_slice %104 {offsets = [0, 0], sizes = [8, 128], strides = [1, 1]} : vector<8x384xf32> to vector<8x128xf32>
    %109 = arith.addf %107, %108 : vector<8x128xf32>
    %110 = arith.negf %109 : vector<8x128xf32>
    %111 = math.exp %110 : vector<8x128xf32>
    %cst_30 = arith.constant 1.000000e+00 : f32
    %112 = vector.broadcast %cst_30 : f32 to vector<8x128xf32>
    %113 = arith.addf %112, %111 : vector<8x128xf32>
    %114 = arith.divf %112, %113 : vector<8x128xf32>
    %115 = vector.extract_strided_slice %106 {offsets = [0, 128], sizes = [8, 128], strides = [1, 1]} : vector<8x384xf32> to vector<8x128xf32>
    %116 = vector.extract_strided_slice %104 {offsets = [0, 128], sizes = [8, 128], strides = [1, 1]} : vector<8x384xf32> to vector<8x128xf32>
    %117 = arith.addf %115, %116 : vector<8x128xf32>
    %118 = arith.negf %117 : vector<8x128xf32>
    %119 = math.exp %118 : vector<8x128xf32>
    %cst_31 = arith.constant 1.000000e+00 : f32
    %120 = vector.broadcast %cst_31 : f32 to vector<8x128xf32>
    %121 = arith.addf %120, %119 : vector<8x128xf32>
    %122 = arith.divf %120, %121 : vector<8x128xf32>
    %123 = vector.extract_strided_slice %106 {offsets = [0, 256], sizes = [8, 128], strides = [1, 1]} : vector<8x384xf32> to vector<8x128xf32>
    %124 = vector.extract_strided_slice %104 {offsets = [0, 256], sizes = [8, 128], strides = [1, 1]} : vector<8x384xf32> to vector<8x128xf32>
    %125 = vector.broadcast %1 : vector<1x128xf32> to vector<8x128xf32>
    %126 = arith.addf %124, %125 : vector<8x128xf32>
    %127 = arith.mulf %114, %126 : vector<8x128xf32>
    %128 = arith.addf %123, %127 : vector<8x128xf32>
    %129 = math.tanh %128 : vector<8x128xf32>
    %cst_32 = arith.constant 1.000000e+00 : f32
    %130 = vector.broadcast %cst_32 : f32 to vector<8x128xf32>
    %131 = arith.subf %130, %122 : vector<8x128xf32>
    %132 = arith.mulf %131, %129 : vector<8x128xf32>
    %133 = arith.mulf %122, %90 : vector<8x128xf32>
    %134 = arith.addf %132, %133 : vector<8x128xf32>
    %135 = vector.broadcast %2 : vector<1x128xf32> to vector<8x128xf32>
    %136 = arith.mulf %134, %135 : vector<8x128xf32>
    %cst_33 = arith.constant dense<0.000000e+00> : vector<8xf32>
    %137 = vector.multi_reduction <add>, %136, %cst_33 [1] : vector<8x128xf32> to vector<8xf32>
    %138 = vector.shape_cast %137 : vector<8xf32> to vector<8x1xf32>
    %c2_i32 = arith.constant 2 : i32
    %139 = vector.broadcast %c2_i32 : i32 to vector<1x8xi32>
    %140 = arith.cmpi eq, %13, %139 : vector<1x8xi32>
    %cst_34 = arith.constant 0.000000e+00 : f32
    %141 = vector.shape_cast %140 : vector<1x8xi1> to vector<1x8xi1>
    %142 = vector.broadcast %141 : vector<1x8xi1> to vector<8x8xi1>
    %143 = vector.shape_cast %138 : vector<8x1xf32> to vector<8x1xf32>
    %144 = vector.broadcast %143 : vector<8x1xf32> to vector<8x8xf32>
    %145 = vector.broadcast %cst_34 : f32 to vector<8x8xf32>
    %146 = arith.select %142, %144, %145 : vector<8x8xi1>, vector<8x8xf32>
    %147 = arith.addf %103, %146 : vector<8x8xf32>
    %cst_35 = arith.constant dense<0.000000e+00> : vector<8x384xf32>
    %148 = tpu.matmul %134, %0, %cst_35 {dimension_numbers = #tpu.dot_dimension_numbers<[1], [0], [0], [1], [0, 0, 1, 1], [], []>} : vector<8x128xf32>, vector<128x384xf32>, vector<8x384xf32> -> vector<8x384xf32>
    %149 = vector.extract_strided_slice %12 {offsets = [3, 0, 0], sizes = [1, 8, 384], strides = [1, 1, 1]} : vector<8x8x384xf32> to vector<1x8x384xf32>
    %150 = vector.shape_cast %149 : vector<1x8x384xf32> to vector<8x384xf32>
    %151 = vector.extract_strided_slice %150 {offsets = [0, 0], sizes = [8, 128], strides = [1, 1]} : vector<8x384xf32> to vector<8x128xf32>
    %152 = vector.extract_strided_slice %148 {offsets = [0, 0], sizes = [8, 128], strides = [1, 1]} : vector<8x384xf32> to vector<8x128xf32>
    %153 = arith.addf %151, %152 : vector<8x128xf32>
    %154 = arith.negf %153 : vector<8x128xf32>
    %155 = math.exp %154 : vector<8x128xf32>
    %cst_36 = arith.constant 1.000000e+00 : f32
    %156 = vector.broadcast %cst_36 : f32 to vector<8x128xf32>
    %157 = arith.addf %156, %155 : vector<8x128xf32>
    %158 = arith.divf %156, %157 : vector<8x128xf32>
    %159 = vector.extract_strided_slice %150 {offsets = [0, 128], sizes = [8, 128], strides = [1, 1]} : vector<8x384xf32> to vector<8x128xf32>
    %160 = vector.extract_strided_slice %148 {offsets = [0, 128], sizes = [8, 128], strides = [1, 1]} : vector<8x384xf32> to vector<8x128xf32>
    %161 = arith.addf %159, %160 : vector<8x128xf32>
    %162 = arith.negf %161 : vector<8x128xf32>
    %163 = math.exp %162 : vector<8x128xf32>
    %cst_37 = arith.constant 1.000000e+00 : f32
    %164 = vector.broadcast %cst_37 : f32 to vector<8x128xf32>
    %165 = arith.addf %164, %163 : vector<8x128xf32>
    %166 = arith.divf %164, %165 : vector<8x128xf32>
    %167 = vector.extract_strided_slice %150 {offsets = [0, 256], sizes = [8, 128], strides = [1, 1]} : vector<8x384xf32> to vector<8x128xf32>
    %168 = vector.extract_strided_slice %148 {offsets = [0, 256], sizes = [8, 128], strides = [1, 1]} : vector<8x384xf32> to vector<8x128xf32>
    %169 = vector.broadcast %1 : vector<1x128xf32> to vector<8x128xf32>
    %170 = arith.addf %168, %169 : vector<8x128xf32>
    %171 = arith.mulf %158, %170 : vector<8x128xf32>
    %172 = arith.addf %167, %171 : vector<8x128xf32>
    %173 = math.tanh %172 : vector<8x128xf32>
    %cst_38 = arith.constant 1.000000e+00 : f32
    %174 = vector.broadcast %cst_38 : f32 to vector<8x128xf32>
    %175 = arith.subf %174, %166 : vector<8x128xf32>
    %176 = arith.mulf %175, %173 : vector<8x128xf32>
    %177 = arith.mulf %166, %134 : vector<8x128xf32>
    %178 = arith.addf %176, %177 : vector<8x128xf32>
    %179 = vector.broadcast %2 : vector<1x128xf32> to vector<8x128xf32>
    %180 = arith.mulf %178, %179 : vector<8x128xf32>
    %cst_39 = arith.constant dense<0.000000e+00> : vector<8xf32>
    %181 = vector.multi_reduction <add>, %180, %cst_39 [1] : vector<8x128xf32> to vector<8xf32>
    %182 = vector.shape_cast %181 : vector<8xf32> to vector<8x1xf32>
    %c3_i32 = arith.constant 3 : i32
    %183 = vector.broadcast %c3_i32 : i32 to vector<1x8xi32>
    %184 = arith.cmpi eq, %13, %183 : vector<1x8xi32>
    %cst_40 = arith.constant 0.000000e+00 : f32
    %185 = vector.shape_cast %184 : vector<1x8xi1> to vector<1x8xi1>
    %186 = vector.broadcast %185 : vector<1x8xi1> to vector<8x8xi1>
    %187 = vector.shape_cast %182 : vector<8x1xf32> to vector<8x1xf32>
    %188 = vector.broadcast %187 : vector<8x1xf32> to vector<8x8xf32>
    %189 = vector.broadcast %cst_40 : f32 to vector<8x8xf32>
    %190 = arith.select %186, %188, %189 : vector<8x8xi1>, vector<8x8xf32>
    %191 = arith.addf %147, %190 : vector<8x8xf32>
    %cst_41 = arith.constant dense<0.000000e+00> : vector<8x384xf32>
    %192 = tpu.matmul %178, %0, %cst_41 {dimension_numbers = #tpu.dot_dimension_numbers<[1], [0], [0], [1], [0, 0, 1, 1], [], []>} : vector<8x128xf32>, vector<128x384xf32>, vector<8x384xf32> -> vector<8x384xf32>
    %193 = vector.extract_strided_slice %12 {offsets = [4, 0, 0], sizes = [1, 8, 384], strides = [1, 1, 1]} : vector<8x8x384xf32> to vector<1x8x384xf32>
    %194 = vector.shape_cast %193 : vector<1x8x384xf32> to vector<8x384xf32>
    %195 = vector.extract_strided_slice %194 {offsets = [0, 0], sizes = [8, 128], strides = [1, 1]} : vector<8x384xf32> to vector<8x128xf32>
    %196 = vector.extract_strided_slice %192 {offsets = [0, 0], sizes = [8, 128], strides = [1, 1]} : vector<8x384xf32> to vector<8x128xf32>
    %197 = arith.addf %195, %196 : vector<8x128xf32>
    %198 = arith.negf %197 : vector<8x128xf32>
    %199 = math.exp %198 : vector<8x128xf32>
    %cst_42 = arith.constant 1.000000e+00 : f32
    %200 = vector.broadcast %cst_42 : f32 to vector<8x128xf32>
    %201 = arith.addf %200, %199 : vector<8x128xf32>
    %202 = arith.divf %200, %201 : vector<8x128xf32>
    %203 = vector.extract_strided_slice %194 {offsets = [0, 128], sizes = [8, 128], strides = [1, 1]} : vector<8x384xf32> to vector<8x128xf32>
    %204 = vector.extract_strided_slice %192 {offsets = [0, 128], sizes = [8, 128], strides = [1, 1]} : vector<8x384xf32> to vector<8x128xf32>
    %205 = arith.addf %203, %204 : vector<8x128xf32>
    %206 = arith.negf %205 : vector<8x128xf32>
    %207 = math.exp %206 : vector<8x128xf32>
    %cst_43 = arith.constant 1.000000e+00 : f32
    %208 = vector.broadcast %cst_43 : f32 to vector<8x128xf32>
    %209 = arith.addf %208, %207 : vector<8x128xf32>
    %210 = arith.divf %208, %209 : vector<8x128xf32>
    %211 = vector.extract_strided_slice %194 {offsets = [0, 256], sizes = [8, 128], strides = [1, 1]} : vector<8x384xf32> to vector<8x128xf32>
    %212 = vector.extract_strided_slice %192 {offsets = [0, 256], sizes = [8, 128], strides = [1, 1]} : vector<8x384xf32> to vector<8x128xf32>
    %213 = vector.broadcast %1 : vector<1x128xf32> to vector<8x128xf32>
    %214 = arith.addf %212, %213 : vector<8x128xf32>
    %215 = arith.mulf %202, %214 : vector<8x128xf32>
    %216 = arith.addf %211, %215 : vector<8x128xf32>
    %217 = math.tanh %216 : vector<8x128xf32>
    %cst_44 = arith.constant 1.000000e+00 : f32
    %218 = vector.broadcast %cst_44 : f32 to vector<8x128xf32>
    %219 = arith.subf %218, %210 : vector<8x128xf32>
    %220 = arith.mulf %219, %217 : vector<8x128xf32>
    %221 = arith.mulf %210, %178 : vector<8x128xf32>
    %222 = arith.addf %220, %221 : vector<8x128xf32>
    %223 = vector.broadcast %2 : vector<1x128xf32> to vector<8x128xf32>
    %224 = arith.mulf %222, %223 : vector<8x128xf32>
    %cst_45 = arith.constant dense<0.000000e+00> : vector<8xf32>
    %225 = vector.multi_reduction <add>, %224, %cst_45 [1] : vector<8x128xf32> to vector<8xf32>
    %226 = vector.shape_cast %225 : vector<8xf32> to vector<8x1xf32>
    %c4_i32 = arith.constant 4 : i32
    %227 = vector.broadcast %c4_i32 : i32 to vector<1x8xi32>
    %228 = arith.cmpi eq, %13, %227 : vector<1x8xi32>
    %cst_46 = arith.constant 0.000000e+00 : f32
    %229 = vector.shape_cast %228 : vector<1x8xi1> to vector<1x8xi1>
    %230 = vector.broadcast %229 : vector<1x8xi1> to vector<8x8xi1>
    %231 = vector.shape_cast %226 : vector<8x1xf32> to vector<8x1xf32>
    %232 = vector.broadcast %231 : vector<8x1xf32> to vector<8x8xf32>
    %233 = vector.broadcast %cst_46 : f32 to vector<8x8xf32>
    %234 = arith.select %230, %232, %233 : vector<8x8xi1>, vector<8x8xf32>
    %235 = arith.addf %191, %234 : vector<8x8xf32>
    %cst_47 = arith.constant dense<0.000000e+00> : vector<8x384xf32>
    %236 = tpu.matmul %222, %0, %cst_47 {dimension_numbers = #tpu.dot_dimension_numbers<[1], [0], [0], [1], [0, 0, 1, 1], [], []>} : vector<8x128xf32>, vector<128x384xf32>, vector<8x384xf32> -> vector<8x384xf32>
    %237 = vector.extract_strided_slice %12 {offsets = [5, 0, 0], sizes = [1, 8, 384], strides = [1, 1, 1]} : vector<8x8x384xf32> to vector<1x8x384xf32>
    %238 = vector.shape_cast %237 : vector<1x8x384xf32> to vector<8x384xf32>
    %239 = vector.extract_strided_slice %238 {offsets = [0, 0], sizes = [8, 128], strides = [1, 1]} : vector<8x384xf32> to vector<8x128xf32>
    %240 = vector.extract_strided_slice %236 {offsets = [0, 0], sizes = [8, 128], strides = [1, 1]} : vector<8x384xf32> to vector<8x128xf32>
    %241 = arith.addf %239, %240 : vector<8x128xf32>
    %242 = arith.negf %241 : vector<8x128xf32>
    %243 = math.exp %242 : vector<8x128xf32>
    %cst_48 = arith.constant 1.000000e+00 : f32
    %244 = vector.broadcast %cst_48 : f32 to vector<8x128xf32>
    %245 = arith.addf %244, %243 : vector<8x128xf32>
    %246 = arith.divf %244, %245 : vector<8x128xf32>
    %247 = vector.extract_strided_slice %238 {offsets = [0, 128], sizes = [8, 128], strides = [1, 1]} : vector<8x384xf32> to vector<8x128xf32>
    %248 = vector.extract_strided_slice %236 {offsets = [0, 128], sizes = [8, 128], strides = [1, 1]} : vector<8x384xf32> to vector<8x128xf32>
    %249 = arith.addf %247, %248 : vector<8x128xf32>
    %250 = arith.negf %249 : vector<8x128xf32>
    %251 = math.exp %250 : vector<8x128xf32>
    %cst_49 = arith.constant 1.000000e+00 : f32
    %252 = vector.broadcast %cst_49 : f32 to vector<8x128xf32>
    %253 = arith.addf %252, %251 : vector<8x128xf32>
    %254 = arith.divf %252, %253 : vector<8x128xf32>
    %255 = vector.extract_strided_slice %238 {offsets = [0, 256], sizes = [8, 128], strides = [1, 1]} : vector<8x384xf32> to vector<8x128xf32>
    %256 = vector.extract_strided_slice %236 {offsets = [0, 256], sizes = [8, 128], strides = [1, 1]} : vector<8x384xf32> to vector<8x128xf32>
    %257 = vector.broadcast %1 : vector<1x128xf32> to vector<8x128xf32>
    %258 = arith.addf %256, %257 : vector<8x128xf32>
    %259 = arith.mulf %246, %258 : vector<8x128xf32>
    %260 = arith.addf %255, %259 : vector<8x128xf32>
    %261 = math.tanh %260 : vector<8x128xf32>
    %cst_50 = arith.constant 1.000000e+00 : f32
    %262 = vector.broadcast %cst_50 : f32 to vector<8x128xf32>
    %263 = arith.subf %262, %254 : vector<8x128xf32>
    %264 = arith.mulf %263, %261 : vector<8x128xf32>
    %265 = arith.mulf %254, %222 : vector<8x128xf32>
    %266 = arith.addf %264, %265 : vector<8x128xf32>
    %267 = vector.broadcast %2 : vector<1x128xf32> to vector<8x128xf32>
    %268 = arith.mulf %266, %267 : vector<8x128xf32>
    %cst_51 = arith.constant dense<0.000000e+00> : vector<8xf32>
    %269 = vector.multi_reduction <add>, %268, %cst_51 [1] : vector<8x128xf32> to vector<8xf32>
    %270 = vector.shape_cast %269 : vector<8xf32> to vector<8x1xf32>
    %c5_i32 = arith.constant 5 : i32
    %271 = vector.broadcast %c5_i32 : i32 to vector<1x8xi32>
    %272 = arith.cmpi eq, %13, %271 : vector<1x8xi32>
    %cst_52 = arith.constant 0.000000e+00 : f32
    %273 = vector.shape_cast %272 : vector<1x8xi1> to vector<1x8xi1>
    %274 = vector.broadcast %273 : vector<1x8xi1> to vector<8x8xi1>
    %275 = vector.shape_cast %270 : vector<8x1xf32> to vector<8x1xf32>
    %276 = vector.broadcast %275 : vector<8x1xf32> to vector<8x8xf32>
    %277 = vector.broadcast %cst_52 : f32 to vector<8x8xf32>
    %278 = arith.select %274, %276, %277 : vector<8x8xi1>, vector<8x8xf32>
    %279 = arith.addf %235, %278 : vector<8x8xf32>
    %cst_53 = arith.constant dense<0.000000e+00> : vector<8x384xf32>
    %280 = tpu.matmul %266, %0, %cst_53 {dimension_numbers = #tpu.dot_dimension_numbers<[1], [0], [0], [1], [0, 0, 1, 1], [], []>} : vector<8x128xf32>, vector<128x384xf32>, vector<8x384xf32> -> vector<8x384xf32>
    %281 = vector.extract_strided_slice %12 {offsets = [6, 0, 0], sizes = [1, 8, 384], strides = [1, 1, 1]} : vector<8x8x384xf32> to vector<1x8x384xf32>
    %282 = vector.shape_cast %281 : vector<1x8x384xf32> to vector<8x384xf32>
    %283 = vector.extract_strided_slice %282 {offsets = [0, 0], sizes = [8, 128], strides = [1, 1]} : vector<8x384xf32> to vector<8x128xf32>
    %284 = vector.extract_strided_slice %280 {offsets = [0, 0], sizes = [8, 128], strides = [1, 1]} : vector<8x384xf32> to vector<8x128xf32>
    %285 = arith.addf %283, %284 : vector<8x128xf32>
    %286 = arith.negf %285 : vector<8x128xf32>
    %287 = math.exp %286 : vector<8x128xf32>
    %cst_54 = arith.constant 1.000000e+00 : f32
    %288 = vector.broadcast %cst_54 : f32 to vector<8x128xf32>
    %289 = arith.addf %288, %287 : vector<8x128xf32>
    %290 = arith.divf %288, %289 : vector<8x128xf32>
    %291 = vector.extract_strided_slice %282 {offsets = [0, 128], sizes = [8, 128], strides = [1, 1]} : vector<8x384xf32> to vector<8x128xf32>
    %292 = vector.extract_strided_slice %280 {offsets = [0, 128], sizes = [8, 128], strides = [1, 1]} : vector<8x384xf32> to vector<8x128xf32>
    %293 = arith.addf %291, %292 : vector<8x128xf32>
    %294 = arith.negf %293 : vector<8x128xf32>
    %295 = math.exp %294 : vector<8x128xf32>
    %cst_55 = arith.constant 1.000000e+00 : f32
    %296 = vector.broadcast %cst_55 : f32 to vector<8x128xf32>
    %297 = arith.addf %296, %295 : vector<8x128xf32>
    %298 = arith.divf %296, %297 : vector<8x128xf32>
    %299 = vector.extract_strided_slice %282 {offsets = [0, 256], sizes = [8, 128], strides = [1, 1]} : vector<8x384xf32> to vector<8x128xf32>
    %300 = vector.extract_strided_slice %280 {offsets = [0, 256], sizes = [8, 128], strides = [1, 1]} : vector<8x384xf32> to vector<8x128xf32>
    %301 = vector.broadcast %1 : vector<1x128xf32> to vector<8x128xf32>
    %302 = arith.addf %300, %301 : vector<8x128xf32>
    %303 = arith.mulf %290, %302 : vector<8x128xf32>
    %304 = arith.addf %299, %303 : vector<8x128xf32>
    %305 = math.tanh %304 : vector<8x128xf32>
    %cst_56 = arith.constant 1.000000e+00 : f32
    %306 = vector.broadcast %cst_56 : f32 to vector<8x128xf32>
    %307 = arith.subf %306, %298 : vector<8x128xf32>
    %308 = arith.mulf %307, %305 : vector<8x128xf32>
    %309 = arith.mulf %298, %266 : vector<8x128xf32>
    %310 = arith.addf %308, %309 : vector<8x128xf32>
    %311 = vector.broadcast %2 : vector<1x128xf32> to vector<8x128xf32>
    %312 = arith.mulf %310, %311 : vector<8x128xf32>
    %cst_57 = arith.constant dense<0.000000e+00> : vector<8xf32>
    %313 = vector.multi_reduction <add>, %312, %cst_57 [1] : vector<8x128xf32> to vector<8xf32>
    %314 = vector.shape_cast %313 : vector<8xf32> to vector<8x1xf32>
    %c6_i32 = arith.constant 6 : i32
    %315 = vector.broadcast %c6_i32 : i32 to vector<1x8xi32>
    %316 = arith.cmpi eq, %13, %315 : vector<1x8xi32>
    %cst_58 = arith.constant 0.000000e+00 : f32
    %317 = vector.shape_cast %316 : vector<1x8xi1> to vector<1x8xi1>
    %318 = vector.broadcast %317 : vector<1x8xi1> to vector<8x8xi1>
    %319 = vector.shape_cast %314 : vector<8x1xf32> to vector<8x1xf32>
    %320 = vector.broadcast %319 : vector<8x1xf32> to vector<8x8xf32>
    %321 = vector.broadcast %cst_58 : f32 to vector<8x8xf32>
    %322 = arith.select %318, %320, %321 : vector<8x8xi1>, vector<8x8xf32>
    %323 = arith.addf %279, %322 : vector<8x8xf32>
    %cst_59 = arith.constant dense<0.000000e+00> : vector<8x384xf32>
    %324 = tpu.matmul %310, %0, %cst_59 {dimension_numbers = #tpu.dot_dimension_numbers<[1], [0], [0], [1], [0, 0, 1, 1], [], []>} : vector<8x128xf32>, vector<128x384xf32>, vector<8x384xf32> -> vector<8x384xf32>
    %325 = vector.extract_strided_slice %12 {offsets = [7, 0, 0], sizes = [1, 8, 384], strides = [1, 1, 1]} : vector<8x8x384xf32> to vector<1x8x384xf32>
    %326 = vector.shape_cast %325 : vector<1x8x384xf32> to vector<8x384xf32>
    %327 = vector.extract_strided_slice %326 {offsets = [0, 0], sizes = [8, 128], strides = [1, 1]} : vector<8x384xf32> to vector<8x128xf32>
    %328 = vector.extract_strided_slice %324 {offsets = [0, 0], sizes = [8, 128], strides = [1, 1]} : vector<8x384xf32> to vector<8x128xf32>
    %329 = arith.addf %327, %328 : vector<8x128xf32>
    %330 = arith.negf %329 : vector<8x128xf32>
    %331 = math.exp %330 : vector<8x128xf32>
    %cst_60 = arith.constant 1.000000e+00 : f32
    %332 = vector.broadcast %cst_60 : f32 to vector<8x128xf32>
    %333 = arith.addf %332, %331 : vector<8x128xf32>
    %334 = arith.divf %332, %333 : vector<8x128xf32>
    %335 = vector.extract_strided_slice %326 {offsets = [0, 128], sizes = [8, 128], strides = [1, 1]} : vector<8x384xf32> to vector<8x128xf32>
    %336 = vector.extract_strided_slice %324 {offsets = [0, 128], sizes = [8, 128], strides = [1, 1]} : vector<8x384xf32> to vector<8x128xf32>
    %337 = arith.addf %335, %336 : vector<8x128xf32>
    %338 = arith.negf %337 : vector<8x128xf32>
    %339 = math.exp %338 : vector<8x128xf32>
    %cst_61 = arith.constant 1.000000e+00 : f32
    %340 = vector.broadcast %cst_61 : f32 to vector<8x128xf32>
    %341 = arith.addf %340, %339 : vector<8x128xf32>
    %342 = arith.divf %340, %341 : vector<8x128xf32>
    %343 = vector.extract_strided_slice %326 {offsets = [0, 256], sizes = [8, 128], strides = [1, 1]} : vector<8x384xf32> to vector<8x128xf32>
    %344 = vector.extract_strided_slice %324 {offsets = [0, 256], sizes = [8, 128], strides = [1, 1]} : vector<8x384xf32> to vector<8x128xf32>
    %345 = vector.broadcast %1 : vector<1x128xf32> to vector<8x128xf32>
    %346 = arith.addf %344, %345 : vector<8x128xf32>
    %347 = arith.mulf %334, %346 : vector<8x128xf32>
    %348 = arith.addf %343, %347 : vector<8x128xf32>
    %349 = math.tanh %348 : vector<8x128xf32>
    %cst_62 = arith.constant 1.000000e+00 : f32
    %350 = vector.broadcast %cst_62 : f32 to vector<8x128xf32>
    %351 = arith.subf %350, %342 : vector<8x128xf32>
    %352 = arith.mulf %351, %349 : vector<8x128xf32>
    %353 = arith.mulf %342, %310 : vector<8x128xf32>
    %354 = arith.addf %352, %353 : vector<8x128xf32>
    %355 = vector.broadcast %2 : vector<1x128xf32> to vector<8x128xf32>
    %356 = arith.mulf %354, %355 : vector<8x128xf32>
    %cst_63 = arith.constant dense<0.000000e+00> : vector<8xf32>
    %357 = vector.multi_reduction <add>, %356, %cst_63 [1] : vector<8x128xf32> to vector<8xf32>
    %358 = vector.shape_cast %357 : vector<8xf32> to vector<8x1xf32>
    %c7_i32 = arith.constant 7 : i32
    %359 = vector.broadcast %c7_i32 : i32 to vector<1x8xi32>
    %360 = arith.cmpi eq, %13, %359 : vector<1x8xi32>
    %cst_64 = arith.constant 0.000000e+00 : f32
    %361 = vector.shape_cast %360 : vector<1x8xi1> to vector<1x8xi1>
    %362 = vector.broadcast %361 : vector<1x8xi1> to vector<8x8xi1>
    %363 = vector.shape_cast %358 : vector<8x1xf32> to vector<8x1xf32>
    %364 = vector.broadcast %363 : vector<8x1xf32> to vector<8x8xf32>
    %365 = vector.broadcast %cst_64 : f32 to vector<8x8xf32>
    %366 = arith.select %362, %364, %365 : vector<8x8xi1>, vector<8x8xf32>
    %367 = arith.addf %323, %366 : vector<8x8xf32>
    %368 = vector.broadcast %4 : f32 to vector<8x8xf32>
    %369 = arith.addf %367, %368 : vector<8x8xf32>
    %c0_65 = arith.constant 0 : index
    %c0_66 = arith.constant 0 : index
    %370 = vector.load %arg9[%c0_65, %c0_66] : memref<8x8xf32, #tpu.memory_space<vmem>>, vector<8x8xf32>
    tpu.vector_store %arg9[%c0_65, %c0_66], %369 {strides = array<i32>} : memref<8x8xf32, #tpu.memory_space<vmem>>, vector<8x8xf32>,
    return
  }
  func.func @transform_0(%arg0: i32) -> (i32, i32, i32) {
    %c0_i32 = arith.constant 0 : i32
    %c0_i32_0 = arith.constant 0 : i32
    %c0_i32_1 = arith.constant 0 : i32
    return %c0_i32, %arg0, %c0_i32_0 : i32, i32, i32
  }
  func.func @transform_1(%arg0: i32) -> (i32, i32) {
    %c0_i32 = arith.constant 0 : i32
    %c0_i32_0 = arith.constant 0 : i32
    return %arg0, %c0_i32 : i32, i32
  }
  func.func @transform_2(%arg0: i32) -> (i32, i32) {
    %c0_i32 = arith.constant 0 : i32
    %c0_i32_0 = arith.constant 0 : i32
    %c0_i32_1 = arith.constant 0 : i32
    return %c0_i32, %c0_i32_0 : i32, i32
  }
  func.func @transform_3(%arg0: i32) -> (i32, i32) {
    %c0_i32 = arith.constant 0 : i32
    %c0_i32_0 = arith.constant 0 : i32
    %c0_i32_1 = arith.constant 0 : i32
    return %c0_i32, %c0_i32_0 : i32, i32
  }
  func.func @transform_4(%arg0: i32) -> (i32, i32) {
    %c0_i32 = arith.constant 0 : i32
    %c0_i32_0 = arith.constant 0 : i32
    %c0_i32_1 = arith.constant 0 : i32
    return %c0_i32, %c0_i32_0 : i32, i32
  }
  func.func @transform_5(%arg0: i32) -> (i32, i32) {
    %c0_i32 = arith.constant 0 : i32
    %c0_i32_0 = arith.constant 0 : i32
    %c0_i32_1 = arith.constant 0 : i32
    return %c0_i32, %c0_i32_0 : i32, i32
  }
  func.func @transform_6(%arg0: i32) -> (i32, i32) {
    %c0_i32 = arith.constant 0 : i32
    %c0_i32_0 = arith.constant 0 : i32
    %c0_i32_1 = arith.constant 0 : i32
    return %c0_i32, %c0_i32_0 : i32, i32
  }
  func.func @transform_7(%arg0: i32) -> (i32, i32) {
    %c0_i32 = arith.constant 0 : i32
    %c0_i32_0 = arith.constant 0 : i32
    %c0_i32_1 = arith.constant 0 : i32
    return %c0_i32, %c0_i32_0 : i32, i32
  }
  func.func @transform_8(%arg0: i32) -> (i32, i32) {
    %c0_i32 = arith.constant 0 : i32
    %c0_i32_0 = arith.constant 0 : i32
    return %arg0, %c0_i32 : i32, i32
  }
}

module attributes {stable_mosaic.version = 11 : i64} {
  func.func @_gru_kernel(%arg0: i32, %arg1: memref<8x8x32xf32, #tpu.memory_space<vmem>>, %arg2: memref<8x128xf32, #tpu.memory_space<vmem>>, %arg3: memref<32x384xf32, #tpu.memory_space<vmem>>, %arg4: memref<128x384xf32, #tpu.memory_space<vmem>>, %arg5: memref<1x384xf32, #tpu.memory_space<vmem>>, %arg6: memref<1x128xf32, #tpu.memory_space<vmem>>, %arg7: memref<1x128xf32, #tpu.memory_space<vmem>>, %arg8: memref<1x1xf32, #tpu.memory_space<vmem>>, %arg9: memref<8x8xf32, #tpu.memory_space<vmem>>) attributes {dimension_semantics = [#tpu.dimension_semantics<parallel>], iteration_bounds = array<i64: 1>, scalar_prefetch = 0 : i64, scratch_operands = 0 : i64, tpu.core_type = #tpu.core_type<tc>, window_params = [{transform_indices = @transform_0, window_bounds = array<i64: 8, 8, 32>}, {transform_indices = @transform_1, window_bounds = array<i64: 8, 128>}, {pipeline_mode = #tpu.pipeline_mode<synchronous>, transform_indices = @transform_2, window_bounds = array<i64: 32, 384>}, {pipeline_mode = #tpu.pipeline_mode<synchronous>, transform_indices = @transform_3, window_bounds = array<i64: 128, 384>}, {pipeline_mode = #tpu.pipeline_mode<synchronous>, transform_indices = @transform_4, window_bounds = array<i64: 1, 384>}, {pipeline_mode = #tpu.pipeline_mode<synchronous>, transform_indices = @transform_5, window_bounds = array<i64: 1, 128>}, {pipeline_mode = #tpu.pipeline_mode<synchronous>, transform_indices = @transform_6, window_bounds = array<i64: 1, 128>}, {pipeline_mode = #tpu.pipeline_mode<synchronous>, transform_indices = @transform_7, window_bounds = array<i64: 1, 1>}, {transform_indices = @transform_8, window_bounds = array<i64: 8, 8>}]} {
    %c0 = arith.constant 0 : index
    %c0_0 = arith.constant 0 : index
    %0 = vector.load %arg4[%c0, %c0_0] : memref<128x384xf32, #tpu.memory_space<vmem>>, vector<128x384xf32>
    %c0_1 = arith.constant 0 : index
    %c0_2 = arith.constant 0 : index
    %1 = vector.load %arg6[%c0_1, %c0_2] : memref<1x128xf32, #tpu.memory_space<vmem>>, vector<1x128xf32>
    %c0_3 = arith.constant 0 : index
    %c0_4 = arith.constant 0 : index
    %2 = vector.load %arg7[%c0_3, %c0_4] : memref<1x128xf32, #tpu.memory_space<vmem>>, vector<1x128xf32>
    %c0_5 = arith.constant 0 : index
    %c0_6 = arith.constant 0 : index
    %3 = vector.load %arg8[%c0_5, %c0_6] : memref<1x1xf32, #tpu.memory_space<vmem>>, vector<1x1xf32>
    %4 = vector.extract %3[0, 0] : f32 from vector<1x1xf32>
    %c0_7 = arith.constant 0 : index
    %c0_8 = arith.constant 0 : index
    %c0_9 = arith.constant 0 : index
    %5 = vector.load %arg1[%c0_7, %c0_8, %c0_9] : memref<8x8x32xf32, #tpu.memory_space<vmem>>, vector<8x8x32xf32>
    %6 = vector.shape_cast %5 : vector<8x8x32xf32> to vector<64x32xf32>
    %c0_10 = arith.constant 0 : index
    %c0_11 = arith.constant 0 : index
    %7 = vector.load %arg3[%c0_10, %c0_11] : memref<32x384xf32, #tpu.memory_space<vmem>>, vector<32x384xf32>
    %cst = arith.constant dense<0.000000e+00> : vector<64x384xf32>
    %8 = tpu.matmul %6, %7, %cst {dimension_numbers = #tpu.dot_dimension_numbers<[1], [0], [0], [1], [0, 0, 1, 1], [], []>} : vector<64x32xf32>, vector<32x384xf32>, vector<64x384xf32> -> vector<64x384xf32>
    %c0_12 = arith.constant 0 : index
    %c0_13 = arith.constant 0 : index
    %9 = vector.load %arg5[%c0_12, %c0_13] : memref<1x384xf32, #tpu.memory_space<vmem>>, vector<1x384xf32>
    %10 = vector.broadcast %9 : vector<1x384xf32> to vector<64x384xf32>
    %11 = arith.addf %8, %10 : vector<64x384xf32>
    %12 = vector.shape_cast %11 : vector<64x384xf32> to vector<8x8x384xf32>
    %13 = tpu.iota {dimensions = array<i32: 1>} : vector<1x8xi32>
    %c0_14 = arith.constant 0 : index
    %c0_15 = arith.constant 0 : index
    %14 = vector.load %arg2[%c0_14, %c0_15] : memref<8x128xf32, #tpu.memory_space<vmem>>, vector<8x128xf32>
    %cst_16 = arith.constant 0.000000e+00 : f32
    %15 = vector.broadcast %cst_16 : f32 to vector<8x8xf32>
    %cst_17 = arith.constant dense<0.000000e+00> : vector<8x384xf32>
    %16 = tpu.matmul %14, %0, %cst_17 {dimension_numbers = #tpu.dot_dimension_numbers<[1], [0], [0], [1], [0, 0, 1, 1], [], []>} : vector<8x128xf32>, vector<128x384xf32>, vector<8x384xf32> -> vector<8x384xf32>
    %17 = vector.extract_strided_slice %12 {offsets = [0, 0, 0], sizes = [1, 8, 384], strides = [1, 1, 1]} : vector<8x8x384xf32> to vector<1x8x384xf32>
    %18 = vector.shape_cast %17 : vector<1x8x384xf32> to vector<8x384xf32>
    %19 = vector.extract_strided_slice %18 {offsets = [0, 0], sizes = [8, 128], strides = [1, 1]} : vector<8x384xf32> to vector<8x128xf32>
    %20 = vector.extract_strided_slice %16 {offsets = [0, 0], sizes = [8, 128], strides = [1, 1]} : vector<8x384xf32> to vector<8x128xf32>
    %21 = arith.addf %19, %20 : vector<8x128xf32>
    %22 = arith.negf %21 : vector<8x128xf32>
    %23 = math.exp %22 : vector<8x128xf32>
    %cst_18 = arith.constant 1.000000e+00 : f32
    %24 = vector.broadcast %cst_18 : f32 to vector<8x128xf32>
    %25 = arith.addf %24, %23 : vector<8x128xf32>
    %26 = arith.divf %24, %25 : vector<8x128xf32>
    %27 = vector.extract_strided_slice %18 {offsets = [0, 128], sizes = [8, 128], strides = [1, 1]} : vector<8x384xf32> to vector<8x128xf32>
    %28 = vector.extract_strided_slice %16 {offsets = [0, 128], sizes = [8, 128], strides = [1, 1]} : vector<8x384xf32> to vector<8x128xf32>
    %29 = arith.addf %27, %28 : vector<8x128xf32>
    %30 = arith.negf %29 : vector<8x128xf32>
    %31 = math.exp %30 : vector<8x128xf32>
    %cst_19 = arith.constant 1.000000e+00 : f32
    %32 = vector.broadcast %cst_19 : f32 to vector<8x128xf32>
    %33 = arith.addf %32, %31 : vector<8x128xf32>
    %34 = arith.divf %32, %33 : vector<8x128xf32>
    %35 = vector.extract_strided_slice %18 {offsets = [0, 256], sizes = [8, 128], strides = [1, 1]} : vector<8x384xf32> to vector<8x128xf32>
    %36 = vector.extract_strided_slice %16 {offsets = [0, 256], sizes = [8, 128], strides = [1, 1]} : vector<8x384xf32> to vector<8x128xf32>
    %37 = vector.broadcast %1 : vector<1x128xf32> to vector<8x128xf32>
    %38 = arith.addf %36, %37 : vector<8x128xf32>
    %39 = arith.mulf %26, %38 : vector<8x128xf32>
    %40 = arith.addf %35, %39 : vector<8x128xf32>
    %41 = math.tanh %40 : vector<8x128xf32>
    %cst_20 = arith.constant 1.000000e+00 : f32
    %42 = vector.broadcast %cst_20 : f32 to vector<8x128xf32>
    %43 = arith.subf %42, %34 : vector<8x128xf32>
    %44 = arith.mulf %43, %41 : vector<8x128xf32>
    %45 = arith.mulf %34, %14 : vector<8x128xf32>
    %46 = arith.addf %44, %45 : vector<8x128xf32>
    %47 = vector.broadcast %2 : vector<1x128xf32> to vector<8x128xf32>
    %48 = arith.mulf %46, %47 : vector<8x128xf32>
    %cst_21 = arith.constant dense<0.000000e+00> : vector<8xf32>
    %49 = vector.multi_reduction <add>, %48, %cst_21 [1] : vector<8x128xf32> to vector<8xf32>
    %50 = vector.shape_cast %49 : vector<8xf32> to vector<8x1xf32>
    %c0_i32 = arith.constant 0 : i32
    %51 = vector.broadcast %c0_i32 : i32 to vector<1x8xi32>
    %52 = arith.cmpi eq, %13, %51 : vector<1x8xi32>
    %cst_22 = arith.constant 0.000000e+00 : f32
    %53 = vector.shape_cast %52 : vector<1x8xi1> to vector<1x8xi1>
    %54 = vector.broadcast %53 : vector<1x8xi1> to vector<8x8xi1>
    %55 = vector.shape_cast %50 : vector<8x1xf32> to vector<8x1xf32>
    %56 = vector.broadcast %55 : vector<8x1xf32> to vector<8x8xf32>
    %57 = vector.broadcast %cst_22 : f32 to vector<8x8xf32>
    %58 = arith.select %54, %56, %57 : vector<8x8xi1>, vector<8x8xf32>
    %59 = arith.addf %15, %58 : vector<8x8xf32>
    %cst_23 = arith.constant dense<0.000000e+00> : vector<8x384xf32>
    %60 = tpu.matmul %46, %0, %cst_23 {dimension_numbers = #tpu.dot_dimension_numbers<[1], [0], [0], [1], [0, 0, 1, 1], [], []>} : vector<8x128xf32>, vector<128x384xf32>, vector<8x384xf32> -> vector<8x384xf32>
    %61 = vector.extract_strided_slice %12 {offsets = [1, 0, 0], sizes = [1, 8, 384], strides = [1, 1, 1]} : vector<8x8x384xf32> to vector<1x8x384xf32>
    %62 = vector.shape_cast %61 : vector<1x8x384xf32> to vector<8x384xf32>
    %63 = vector.extract_strided_slice %62 {offsets = [0, 0], sizes = [8, 128], strides = [1, 1]} : vector<8x384xf32> to vector<8x128xf32>
    %64 = vector.extract_strided_slice %60 {offsets = [0, 0], sizes = [8, 128], strides = [1, 1]} : vector<8x384xf32> to vector<8x128xf32>
    %65 = arith.addf %63, %64 : vector<8x128xf32>
    %66 = arith.negf %65 : vector<8x128xf32>
    %67 = math.exp %66 : vector<8x128xf32>
    %cst_24 = arith.constant 1.000000e+00 : f32
    %68 = vector.broadcast %cst_24 : f32 to vector<8x128xf32>
    %69 = arith.addf %68, %67 : vector<8x128xf32>
    %70 = arith.divf %68, %69 : vector<8x128xf32>
    %71 = vector.extract_strided_slice %62 {offsets = [0, 128], sizes = [8, 128], strides = [1, 1]} : vector<8x384xf32> to vector<8x128xf32>
    %72 = vector.extract_strided_slice %60 {offsets = [0, 128], sizes = [8, 128], strides = [1, 1]} : vector<8x384xf32> to vector<8x128xf32>
    %73 = arith.addf %71, %72 : vector<8x128xf32>
    %74 = arith.negf %73 : vector<8x128xf32>
    %75 = math.exp %74 : vector<8x128xf32>
    %cst_25 = arith.constant 1.000000e+00 : f32
    %76 = vector.broadcast %cst_25 : f32 to vector<8x128xf32>
    %77 = arith.addf %76, %75 : vector<8x128xf32>
    %78 = arith.divf %76, %77 : vector<8x128xf32>
    %79 = vector.extract_strided_slice %62 {offsets = [0, 256], sizes = [8, 128], strides = [1, 1]} : vector<8x384xf32> to vector<8x128xf32>
    %80 = vector.extract_strided_slice %60 {offsets = [0, 256], sizes = [8, 128], strides = [1, 1]} : vector<8x384xf32> to vector<8x128xf32>
    %81 = vector.broadcast %1 : vector<1x128xf32> to vector<8x128xf32>
    %82 = arith.addf %80, %81 : vector<8x128xf32>
    %83 = arith.mulf %70, %82 : vector<8x128xf32>
    %84 = arith.addf %79, %83 : vector<8x128xf32>
    %85 = math.tanh %84 : vector<8x128xf32>
    %cst_26 = arith.constant 1.000000e+00 : f32
    %86 = vector.broadcast %cst_26 : f32 to vector<8x128xf32>
    %87 = arith.subf %86, %78 : vector<8x128xf32>
    %88 = arith.mulf %87, %85 : vector<8x128xf32>
    %89 = arith.mulf %78, %46 : vector<8x128xf32>
    %90 = arith.addf %88, %89 : vector<8x128xf32>
    %91 = vector.broadcast %2 : vector<1x128xf32> to vector<8x128xf32>
    %92 = arith.mulf %90, %91 : vector<8x128xf32>
    %cst_27 = arith.constant dense<0.000000e+00> : vector<8xf32>
    %93 = vector.multi_reduction <add>, %92, %cst_27 [1] : vector<8x128xf32> to vector<8xf32>
    %94 = vector.shape_cast %93 : vector<8xf32> to vector<8x1xf32>
    %c1_i32 = arith.constant 1 : i32
    %95 = vector.broadcast %c1_i32 : i32 to vector<1x8xi32>
    %96 = arith.cmpi eq, %13, %95 : vector<1x8xi32>
    %cst_28 = arith.constant 0.000000e+00 : f32
    %97 = vector.shape_cast %96 : vector<1x8xi1> to vector<1x8xi1>
    %98 = vector.broadcast %97 : vector<1x8xi1> to vector<8x8xi1>
    %99 = vector.shape_cast %94 : vector<8x1xf32> to vector<8x1xf32>
    %100 = vector.broadcast %99 : vector<8x1xf32> to vector<8x8xf32>
    %101 = vector.broadcast %cst_28 : f32 to vector<8x8xf32>
    %102 = arith.select %98, %100, %101 : vector<8x8xi1>, vector<8x8xf32>
    %103 = arith.addf %59, %102 : vector<8x8xf32>
    %cst_29 = arith.constant dense<0.000000e+00> : vector<8x384xf32>
    %104 = tpu.matmul %90, %0, %cst_29 {dimension_numbers = #tpu.dot_dimension_numbers<[1], [0], [0], [1], [0, 0, 1, 1], [], []>} : vector<8x128xf32>, vector<128x384xf32>, vector<8x384xf32> -> vector<8x384xf32>
    %105 = vector.extract_strided_slice %12 {offsets = [2, 0, 0], sizes = [1, 8, 384], strides = [1, 1, 1]} : vector<8x8x384xf32> to vector<1x8x384xf32>
    %106 = vector.shape_cast %105 : vector<1x8x384xf32> to vector<8x384xf32>
    %107 = vector.extract_strided_slice %106 {offsets = [0, 0], sizes = [8, 128], strides = [1, 1]} : vector<8x384xf32> to vector<8x128xf32>
    %108 = vector.extract_strided_slice %104 {offsets = [0, 0], sizes = [8, 128], strides = [1, 1]} : vector<8x384xf32> to vector<8x128xf32>
    %109 = arith.addf %107, %108 : vector<8x128xf32>
    %110 = arith.negf %109 : vector<8x128xf32>
    %111 = math.exp %110 : vector<8x128xf32>
    %cst_30 = arith.constant 1.000000e+00 : f32
    %112 = vector.broadcast %cst_30 : f32 to vector<8x128xf32>
    %113 = arith.addf %112, %111 : vector<8x128xf32>
    %114 = arith.divf %112, %113 : vector<8x128xf32>
    %115 = vector.extract_strided_slice %106 {offsets = [0, 128], sizes = [8, 128], strides = [1, 1]} : vector<8x384xf32> to vector<8x128xf32>
    %116 = vector.extract_strided_slice %104 {offsets = [0, 128], sizes = [8, 128], strides = [1, 1]} : vector<8x384xf32> to vector<8x128xf32>
    %117 = arith.addf %115, %116 : vector<8x128xf32>
    %118 = arith.negf %117 : vector<8x128xf32>
    %119 = math.exp %118 : vector<8x128xf32>
    %cst_31 = arith.constant 1.000000e+00 : f32
    %120 = vector.broadcast %cst_31 : f32 to vector<8x128xf32>
    %121 = arith.addf %120, %119 : vector<8x128xf32>
    %122 = arith.divf %120, %121 : vector<8x128xf32>
    %123 = vector.extract_strided_slice %106 {offsets = [0, 256], sizes = [8, 128], strides = [1, 1]} : vector<8x384xf32> to vector<8x128xf32>
    %124 = vector.extract_strided_slice %104 {offsets = [0, 256], sizes = [8, 128], strides = [1, 1]} : vector<8x384xf32> to vector<8x128xf32>
    %125 = vector.broadcast %1 : vector<1x128xf32> to vector<8x128xf32>
    %126 = arith.addf %124, %125 : vector<8x128xf32>
    %127 = arith.mulf %114, %126 : vector<8x128xf32>
    %128 = arith.addf %123, %127 : vector<8x128xf32>
    %129 = math.tanh %128 : vector<8x128xf32>
    %cst_32 = arith.constant 1.000000e+00 : f32
    %130 = vector.broadcast %cst_32 : f32 to vector<8x128xf32>
    %131 = arith.subf %130, %122 : vector<8x128xf32>
    %132 = arith.mulf %131, %129 : vector<8x128xf32>
    %133 = arith.mulf %122, %90 : vector<8x128xf32>
    %134 = arith.addf %132, %133 : vector<8x128xf32>
    %135 = vector.broadcast %2 : vector<1x128xf32> to vector<8x128xf32>
    %136 = arith.mulf %134, %135 : vector<8x128xf32>
    %cst_33 = arith.constant dense<0.000000e+00> : vector<8xf32>
    %137 = vector.multi_reduction <add>, %136, %cst_33 [1] : vector<8x128xf32> to vector<8xf32>
    %138 = vector.shape_cast %137 : vector<8xf32> to vector<8x1xf32>
    %c2_i32 = arith.constant 2 : i32
    %139 = vector.broadcast %c2_i32 : i32 to vector<1x8xi32>
    %140 = arith.cmpi eq, %13, %139 : vector<1x8xi32>
    %cst_34 = arith.constant 0.000000e+00 : f32
    %141 = vector.shape_cast %140 : vector<1x8xi1> to vector<1x8xi1>
    %142 = vector.broadcast %141 : vector<1x8xi1> to vector<8x8xi1>
    %143 = vector.shape_cast %138 : vector<8x1xf32> to vector<8x1xf32>
    %144 = vector.broadcast %143 : vector<8x1xf32> to vector<8x8xf32>
    %145 = vector.broadcast %cst_34 : f32 to vector<8x8xf32>
    %146 = arith.select %142, %144, %145 : vector<8x8xi1>, vector<8x8xf32>
    %147 = arith.addf %103, %146 : vector<8x8xf32>
    %cst_35 = arith.constant dense<0.000000e+00> : vector<8x384xf32>
    %148 = tpu.matmul %134, %0, %cst_35 {dimension_numbers = #tpu.dot_dimension_numbers<[1], [0], [0], [1], [0, 0, 1, 1], [], []>} : vector<8x128xf32>, vector<128x384xf32>, vector<8x384xf32> -> vector<8x384xf32>
    %149 = vector.extract_strided_slice %12 {offsets = [3, 0, 0], sizes = [1, 8, 384], strides = [1, 1, 1]} : vector<8x8x384xf32> to vector<1x8x384xf32>
    %150 = vector.shape_cast %149 : vector<1x8x384xf32> to vector<8x384xf32>
    %151 = vector.extract_strided_slice %150 {offsets = [0, 0], sizes = [8, 128], strides = [1, 1]} : vector<8x384xf32> to vector<8x128xf32>
    %152 = vector.extract_strided_slice %148 {offsets = [0, 0], sizes = [8, 128], strides = [1, 1]} : vector<8x384xf32> to vector<8x128xf32>
    %153 = arith.addf %151, %152 : vector<8x128xf32>
    %154 = arith.negf %153 : vector<8x128xf32>
    %155 = math.exp %154 : vector<8x128xf32>
    %cst_36 = arith.constant 1.000000e+00 : f32
    %156 = vector.broadcast %cst_36 : f32 to vector<8x128xf32>
    %157 = arith.addf %156, %155 : vector<8x128xf32>
    %158 = arith.divf %156, %157 : vector<8x128xf32>
    %159 = vector.extract_strided_slice %150 {offsets = [0, 128], sizes = [8, 128], strides = [1, 1]} : vector<8x384xf32> to vector<8x128xf32>
    %160 = vector.extract_strided_slice %148 {offsets = [0, 128], sizes = [8, 128], strides = [1, 1]} : vector<8x384xf32> to vector<8x128xf32>
    %161 = arith.addf %159, %160 : vector<8x128xf32>
    %162 = arith.negf %161 : vector<8x128xf32>
    %163 = math.exp %162 : vector<8x128xf32>
    %cst_37 = arith.constant 1.000000e+00 : f32
    %164 = vector.broadcast %cst_37 : f32 to vector<8x128xf32>
    %165 = arith.addf %164, %163 : vector<8x128xf32>
    %166 = arith.divf %164, %165 : vector<8x128xf32>
    %167 = vector.extract_strided_slice %150 {offsets = [0, 256], sizes = [8, 128], strides = [1, 1]} : vector<8x384xf32> to vector<8x128xf32>
    %168 = vector.extract_strided_slice %148 {offsets = [0, 256], sizes = [8, 128], strides = [1, 1]} : vector<8x384xf32> to vector<8x128xf32>
    %169 = vector.broadcast %1 : vector<1x128xf32> to vector<8x128xf32>
    %170 = arith.addf %168, %169 : vector<8x128xf32>
    %171 = arith.mulf %158, %170 : vector<8x128xf32>
    %172 = arith.addf %167, %171 : vector<8x128xf32>
    %173 = math.tanh %172 : vector<8x128xf32>
    %cst_38 = arith.constant 1.000000e+00 : f32
    %174 = vector.broadcast %cst_38 : f32 to vector<8x128xf32>
    %175 = arith.subf %174, %166 : vector<8x128xf32>
    %176 = arith.mulf %175, %173 : vector<8x128xf32>
    %177 = arith.mulf %166, %134 : vector<8x128xf32>
    %178 = arith.addf %176, %177 : vector<8x128xf32>
    %179 = vector.broadcast %2 : vector<1x128xf32> to vector<8x128xf32>
    %180 = arith.mulf %178, %179 : vector<8x128xf32>
    %cst_39 = arith.constant dense<0.000000e+00> : vector<8xf32>
    %181 = vector.multi_reduction <add>, %180, %cst_39 [1] : vector<8x128xf32> to vector<8xf32>
    %182 = vector.shape_cast %181 : vector<8xf32> to vector<8x1xf32>
    %c3_i32 = arith.constant 3 : i32
    %183 = vector.broadcast %c3_i32 : i32 to vector<1x8xi32>
    %184 = arith.cmpi eq, %13, %183 : vector<1x8xi32>
    %cst_40 = arith.constant 0.000000e+00 : f32
    %185 = vector.shape_cast %184 : vector<1x8xi1> to vector<1x8xi1>
    %186 = vector.broadcast %185 : vector<1x8xi1> to vector<8x8xi1>
    %187 = vector.shape_cast %182 : vector<8x1xf32> to vector<8x1xf32>
    %188 = vector.broadcast %187 : vector<8x1xf32> to vector<8x8xf32>
    %189 = vector.broadcast %cst_40 : f32 to vector<8x8xf32>
    %190 = arith.select %186, %188, %189 : vector<8x8xi1>, vector<8x8xf32>
    %191 = arith.addf %147, %190 : vector<8x8xf32>
    %cst_41 = arith.constant dense<0.000000e+00> : vector<8x384xf32>
    %192 = tpu.matmul %178, %0, %cst_41 {dimension_numbers = #tpu.dot_dimension_numbers<[1], [0], [0], [1], [0, 0, 1, 1], [], []>} : vector<8x128xf32>, vector<128x384xf32>, vector<8x384xf32> -> vector<8x384xf32>
    %193 = vector.extract_strided_slice %12 {offsets = [4, 0, 0], sizes = [1, 8, 384], strides = [1, 1, 1]} : vector<8x8x384xf32> to vector<1x8x384xf32>
    %194 = vector.shape_cast %193 : vector<1x8x384xf32> to vector<8x384xf32>
    %195 = vector.extract_strided_slice %194 {offsets = [0, 0], sizes = [8, 128], strides = [1, 1]} : vector<8x384xf32> to vector<8x128xf32>
    %196 = vector.extract_strided_slice %192 {offsets = [0, 0], sizes = [8, 128], strides = [1, 1]} : vector<8x384xf32> to vector<8x128xf32>
    %197 = arith.addf %195, %196 : vector<8x128xf32>
    %198 = arith.negf %197 : vector<8x128xf32>
    %199 = math.exp %198 : vector<8x128xf32>
    %cst_42 = arith.constant 1.000000e+00 : f32
    %200 = vector.broadcast %cst_42 : f32 to vector<8x128xf32>
    %201 = arith.addf %200, %199 : vector<8x128xf32>
    %202 = arith.divf %200, %201 : vector<8x128xf32>
    %203 = vector.extract_strided_slice %194 {offsets = [0, 128], sizes = [8, 128], strides = [1, 1]} : vector<8x384xf32> to vector<8x128xf32>
    %204 = vector.extract_strided_slice %192 {offsets = [0, 128], sizes = [8, 128], strides = [1, 1]} : vector<8x384xf32> to vector<8x128xf32>
    %205 = arith.addf %203, %204 : vector<8x128xf32>
    %206 = arith.negf %205 : vector<8x128xf32>
    %207 = math.exp %206 : vector<8x128xf32>
    %cst_43 = arith.constant 1.000000e+00 : f32
    %208 = vector.broadcast %cst_43 : f32 to vector<8x128xf32>
    %209 = arith.addf %208, %207 : vector<8x128xf32>
    %210 = arith.divf %208, %209 : vector<8x128xf32>
    %211 = vector.extract_strided_slice %194 {offsets = [0, 256], sizes = [8, 128], strides = [1, 1]} : vector<8x384xf32> to vector<8x128xf32>
    %212 = vector.extract_strided_slice %192 {offsets = [0, 256], sizes = [8, 128], strides = [1, 1]} : vector<8x384xf32> to vector<8x128xf32>
    %213 = vector.broadcast %1 : vector<1x128xf32> to vector<8x128xf32>
    %214 = arith.addf %212, %213 : vector<8x128xf32>
    %215 = arith.mulf %202, %214 : vector<8x128xf32>
    %216 = arith.addf %211, %215 : vector<8x128xf32>
    %217 = math.tanh %216 : vector<8x128xf32>
    %cst_44 = arith.constant 1.000000e+00 : f32
    %218 = vector.broadcast %cst_44 : f32 to vector<8x128xf32>
    %219 = arith.subf %218, %210 : vector<8x128xf32>
    %220 = arith.mulf %219, %217 : vector<8x128xf32>
    %221 = arith.mulf %210, %178 : vector<8x128xf32>
    %222 = arith.addf %220, %221 : vector<8x128xf32>
    %223 = vector.broadcast %2 : vector<1x128xf32> to vector<8x128xf32>
    %224 = arith.mulf %222, %223 : vector<8x128xf32>
    %cst_45 = arith.constant dense<0.000000e+00> : vector<8xf32>
    %225 = vector.multi_reduction <add>, %224, %cst_45 [1] : vector<8x128xf32> to vector<8xf32>
    %226 = vector.shape_cast %225 : vector<8xf32> to vector<8x1xf32>
    %c4_i32 = arith.constant 4 : i32
    %227 = vector.broadcast %c4_i32 : i32 to vector<1x8xi32>
    %228 = arith.cmpi eq, %13, %227 : vector<1x8xi32>
    %cst_46 = arith.constant 0.000000e+00 : f32
    %229 = vector.shape_cast %228 : vector<1x8xi1> to vector<1x8xi1>
    %230 = vector.broadcast %229 : vector<1x8xi1> to vector<8x8xi1>
    %231 = vector.shape_cast %226 : vector<8x1xf32> to vector<8x1xf32>
    %232 = vector.broadcast %231 : vector<8x1xf32> to vector<8x8xf32>
    %233 = vector.broadcast %cst_46 : f32 to vector<8x8xf32>
    %234 = arith.select %230, %232, %233 : vector<8x8xi1>, vector<8x8xf32>
    %235 = arith.addf %191, %234 : vector<8x8xf32>
    %cst_47 = arith.constant dense<0.000000e+00> : vector<8x384xf32>
    %236 = tpu.matmul %222, %0, %cst_47 {dimension_numbers = #tpu.dot_dimension_numbers<[1], [0], [0], [1], [0, 0, 1, 1], [], []>} : vector<8x128xf32>, vector<128x384xf32>, vector<8x384xf32> -> vector<8x384xf32>
    %237 = vector.extract_strided_slice %12 {offsets = [5, 0, 0], sizes = [1, 8, 384], strides = [1, 1, 1]} : vector<8x8x384xf32> to vector<1x8x384xf32>
    %238 = vector.shape_cast %237 : vector<1x8x384xf32> to vector<8x384xf32>
    %239 = vector.extract_strided_slice %238 {offsets = [0, 0], sizes = [8, 128], strides = [1, 1]} : vector<8x384xf32> to vector<8x128xf32>
    %240 = vector.extract_strided_slice %236 {offsets = [0, 0], sizes = [8, 128], strides = [1, 1]} : vector<8x384xf32> to vector<8x128xf32>
    %241 = arith.addf %239, %240 : vector<8x128xf32>
    %242 = arith.negf %241 : vector<8x128xf32>
    %243 = math.exp %242 : vector<8x128xf32>
    %cst_48 = arith.constant 1.000000e+00 : f32
    %244 = vector.broadcast %cst_48 : f32 to vector<8x128xf32>
    %245 = arith.addf %244, %243 : vector<8x128xf32>
    %246 = arith.divf %244, %245 : vector<8x128xf32>
    %247 = vector.extract_strided_slice %238 {offsets = [0, 128], sizes = [8, 128], strides = [1, 1]} : vector<8x384xf32> to vector<8x128xf32>
    %248 = vector.extract_strided_slice %236 {offsets = [0, 128], sizes = [8, 128], strides = [1, 1]} : vector<8x384xf32> to vector<8x128xf32>
    %249 = arith.addf %247, %248 : vector<8x128xf32>
    %250 = arith.negf %249 : vector<8x128xf32>
    %251 = math.exp %250 : vector<8x128xf32>
    %cst_49 = arith.constant 1.000000e+00 : f32
    %252 = vector.broadcast %cst_49 : f32 to vector<8x128xf32>
    %253 = arith.addf %252, %251 : vector<8x128xf32>
    %254 = arith.divf %252, %253 : vector<8x128xf32>
    %255 = vector.extract_strided_slice %238 {offsets = [0, 256], sizes = [8, 128], strides = [1, 1]} : vector<8x384xf32> to vector<8x128xf32>
    %256 = vector.extract_strided_slice %236 {offsets = [0, 256], sizes = [8, 128], strides = [1, 1]} : vector<8x384xf32> to vector<8x128xf32>
    %257 = vector.broadcast %1 : vector<1x128xf32> to vector<8x128xf32>
    %258 = arith.addf %256, %257 : vector<8x128xf32>
    %259 = arith.mulf %246, %258 : vector<8x128xf32>
    %260 = arith.addf %255, %259 : vector<8x128xf32>
    %261 = math.tanh %260 : vector<8x128xf32>
    %cst_50 = arith.constant 1.000000e+00 : f32
    %262 = vector.broadcast %cst_50 : f32 to vector<8x128xf32>
    %263 = arith.subf %262, %254 : vector<8x128xf32>
    %264 = arith.mulf %263, %261 : vector<8x128xf32>
    %265 = arith.mulf %254, %222 : vector<8x128xf32>
    %266 = arith.addf %264, %265 : vector<8x128xf32>
    %267 = vector.broadcast %2 : vector<1x128xf32> to vector<8x128xf32>
    %268 = arith.mulf %266, %267 : vector<8x128xf32>
    %cst_51 = arith.constant dense<0.000000e+00> : vector<8xf32>
    %269 = vector.multi_reduction <add>, %268, %cst_51 [1] : vector<8x128xf32> to vector<8xf32>
    %270 = vector.shape_cast %269 : vector<8xf32> to vector<8x1xf32>
    %c5_i32 = arith.constant 5 : i32
    %271 = vector.broadcast %c5_i32 : i32 to vector<1x8xi32>
    %272 = arith.cmpi eq, %13, %271 : vector<1x8xi32>
    %cst_52 = arith.constant 0.000000e+00 : f32
    %273 = vector.shape_cast %272 : vector<1x8xi1> to vector<1x8xi1>
    %274 = vector.broadcast %273 : vector<1x8xi1> to vector<8x8xi1>
    %275 = vector.shape_cast %270 : vector<8x1xf32> to vector<8x1xf32>
    %276 = vector.broadcast %275 : vector<8x1xf32> to vector<8x8xf32>
    %277 = vector.broadcast %cst_52 : f32 to vector<8x8xf32>
    %278 = arith.select %274, %276, %277 : vector<8x8xi1>, vector<8x8xf32>
    %279 = arith.addf %235, %278 : vector<8x8xf32>
    %cst_53 = arith.constant dense<0.000000e+00> : vector<8x384xf32>
    %280 = tpu.matmul %266, %0, %cst_53 {dimension_numbers = #tpu.dot_dimension_numbers<[1], [0], [0], [1], [0, 0, 1, 1], [], []>} : vector<8x128xf32>, vector<128x384xf32>, vector<8x384xf32> -> vector<8x384xf32>
    %281 = vector.extract_strided_slice %12 {offsets = [6, 0, 0], sizes = [1, 8, 384], strides = [1, 1, 1]} : vector<8x8x384xf32> to vector<1x8x384xf32>
    %282 = vector.shape_cast %281 : vector<1x8x384xf32> to vector<8x384xf32>
    %283 = vector.extract_strided_slice %282 {offsets = [0, 0], sizes = [8, 128], strides = [1, 1]} : vector<8x384xf32> to vector<8x128xf32>
    %284 = vector.extract_strided_slice %280 {offsets = [0, 0], sizes = [8, 128], strides = [1, 1]} : vector<8x384xf32> to vector<8x128xf32>
    %285 = arith.addf %283, %284 : vector<8x128xf32>
    %286 = arith.negf %285 : vector<8x128xf32>
    %287 = math.exp %286 : vector<8x128xf32>
    %cst_54 = arith.constant 1.000000e+00 : f32
    %288 = vector.broadcast %cst_54 : f32 to vector<8x128xf32>
    %289 = arith.addf %288, %287 : vector<8x128xf32>
    %290 = arith.divf %288, %289 : vector<8x128xf32>
    %291 = vector.extract_strided_slice %282 {offsets = [0, 128], sizes = [8, 128], strides = [1, 1]} : vector<8x384xf32> to vector<8x128xf32>
    %292 = vector.extract_strided_slice %280 {offsets = [0, 128], sizes = [8, 128], strides = [1, 1]} : vector<8x384xf32> to vector<8x128xf32>
    %293 = arith.addf %291, %292 : vector<8x128xf32>
    %294 = arith.negf %293 : vector<8x128xf32>
    %295 = math.exp %294 : vector<8x128xf32>
    %cst_55 = arith.constant 1.000000e+00 : f32
    %296 = vector.broadcast %cst_55 : f32 to vector<8x128xf32>
    %297 = arith.addf %296, %295 : vector<8x128xf32>
    %298 = arith.divf %296, %297 : vector<8x128xf32>
    %299 = vector.extract_strided_slice %282 {offsets = [0, 256], sizes = [8, 128], strides = [1, 1]} : vector<8x384xf32> to vector<8x128xf32>
    %300 = vector.extract_strided_slice %280 {offsets = [0, 256], sizes = [8, 128], strides = [1, 1]} : vector<8x384xf32> to vector<8x128xf32>
    %301 = vector.broadcast %1 : vector<1x128xf32> to vector<8x128xf32>
    %302 = arith.addf %300, %301 : vector<8x128xf32>
    %303 = arith.mulf %290, %302 : vector<8x128xf32>
    %304 = arith.addf %299, %303 : vector<8x128xf32>
    %305 = math.tanh %304 : vector<8x128xf32>
    %cst_56 = arith.constant 1.000000e+00 : f32
    %306 = vector.broadcast %cst_56 : f32 to vector<8x128xf32>
    %307 = arith.subf %306, %298 : vector<8x128xf32>
    %308 = arith.mulf %307, %305 : vector<8x128xf32>
    %309 = arith.mulf %298, %266 : vector<8x128xf32>
    %310 = arith.addf %308, %309 : vector<8x128xf32>
    %311 = vector.broadcast %2 : vector<1x128xf32> to vector<8x128xf32>
    %312 = arith.mulf %310, %311 : vector<8x128xf32>
    %cst_57 = arith.constant dense<0.000000e+00> : vector<8xf32>
    %313 = vector.multi_reduction <add>, %312, %cst_57 [1] : vector<8x128xf32> to vector<8xf32>
    %314 = vector.shape_cast %313 : vector<8xf32> to vector<8x1xf32>
    %c6_i32 = arith.constant 6 : i32
    %315 = vector.broadcast %c6_i32 : i32 to vector<1x8xi32>
    %316 = arith.cmpi eq, %13, %315 : vector<1x8xi32>
    %cst_58 = arith.constant 0.000000e+00 : f32
    %317 = vector.shape_cast %316 : vector<1x8xi1> to vector<1x8xi1>
    %318 = vector.broadcast %317 : vector<1x8xi1> to vector<8x8xi1>
    %319 = vector.shape_cast %314 : vector<8x1xf32> to vector<8x1xf32>
    %320 = vector.broadcast %319 : vector<8x1xf32> to vector<8x8xf32>
    %321 = vector.broadcast %cst_58 : f32 to vector<8x8xf32>
    %322 = arith.select %318, %320, %321 : vector<8x8xi1>, vector<8x8xf32>
    %323 = arith.addf %279, %322 : vector<8x8xf32>
    %cst_59 = arith.constant dense<0.000000e+00> : vector<8x384xf32>
    %324 = tpu.matmul %310, %0, %cst_59 {dimension_numbers = #tpu.dot_dimension_numbers<[1], [0], [0], [1], [0, 0, 1, 1], [], []>} : vector<8x128xf32>, vector<128x384xf32>, vector<8x384xf32> -> vector<8x384xf32>
    %325 = vector.extract_strided_slice %12 {offsets = [7, 0, 0], sizes = [1, 8, 384], strides = [1, 1, 1]} : vector<8x8x384xf32> to vector<1x8x384xf32>
    %326 = vector.shape_cast %325 : vector<1x8x384xf32> to vector<8x384xf32>
    %327 = vector.extract_strided_slice %326 {offsets = [0, 0], sizes = [8, 128], strides = [1, 1]} : vector<8x384xf32> to vector<8x128xf32>
    %328 = vector.extract_strided_slice %324 {offsets = [0, 0], sizes = [8, 128], strides = [1, 1]} : vector<8x384xf32> to vector<8x128xf32>
    %329 = arith.addf %327, %328 : vector<8x128xf32>
    %330 = arith.negf %329 : vector<8x128xf32>
    %331 = math.exp %330 : vector<8x128xf32>
    %cst_60 = arith.constant 1.000000e+00 : f32
    %332 = vector.broadcast %cst_60 : f32 to vector<8x128xf32>
    %333 = arith.addf %332, %331 : vector<8x128xf32>
    %334 = arith.divf %332, %333 : vector<8x128xf32>
    %335 = vector.extract_strided_slice %326 {offsets = [0, 128], sizes = [8, 128], strides = [1, 1]} : vector<8x384xf32> to vector<8x128xf32>
    %336 = vector.extract_strided_slice %324 {offsets = [0, 128], sizes = [8, 128], strides = [1, 1]} : vector<8x384xf32> to vector<8x128xf32>
    %337 = arith.addf %335, %336 : vector<8x128xf32>
    %338 = arith.negf %337 : vector<8x128xf32>
    %339 = math.exp %338 : vector<8x128xf32>
    %cst_61 = arith.constant 1.000000e+00 : f32
    %340 = vector.broadcast %cst_61 : f32 to vector<8x128xf32>
    %341 = arith.addf %340, %339 : vector<8x128xf32>
    %342 = arith.divf %340, %341 : vector<8x128xf32>
    %343 = vector.extract_strided_slice %326 {offsets = [0, 256], sizes = [8, 128], strides = [1, 1]} : vector<8x384xf32> to vector<8x128xf32>
    %344 = vector.extract_strided_slice %324 {offsets = [0, 256], sizes = [8, 128], strides = [1, 1]} : vector<8x384xf32> to vector<8x128xf32>
    %345 = vector.broadcast %1 : vector<1x128xf32> to vector<8x128xf32>
    %346 = arith.addf %344, %345 : vector<8x128xf32>
    %347 = arith.mulf %334, %346 : vector<8x128xf32>
    %348 = arith.addf %343, %347 : vector<8x128xf32>
    %349 = math.tanh %348 : vector<8x128xf32>
    %cst_62 = arith.constant 1.000000e+00 : f32
    %350 = vector.broadcast %cst_62 : f32 to vector<8x128xf32>
    %351 = arith.subf %350, %342 : vector<8x128xf32>
    %352 = arith.mulf %351, %349 : vector<8x128xf32>
    %353 = arith.mulf %342, %310 : vector<8x128xf32>
    %354 = arith.addf %352, %353 : vector<8x128xf32>
    %355 = vector.broadcast %2 : vector<1x128xf32> to vector<8x128xf32>
    %356 = arith.mulf %354, %355 : vector<8x128xf32>
    %cst_63 = arith.constant dense<0.000000e+00> : vector<8xf32>
    %357 = vector.multi_reduction <add>, %356, %cst_63 [1] : vector<8x128xf32> to vector<8xf32>
    %358 = vector.shape_cast %357 : vector<8xf32> to vector<8x1xf32>
    %c7_i32 = arith.constant 7 : i32
    %359 = vector.broadcast %c7_i32 : i32 to vector<1x8xi32>
    %360 = arith.cmpi eq, %13, %359 : vector<1x8xi32>
    %cst_64 = arith.constant 0.000000e+00 : f32
    %361 = vector.shape_cast %360 : vector<1x8xi1> to vector<1x8xi1>
    %362 = vector.broadcast %361 : vector<1x8xi1> to vector<8x8xi1>
    %363 = vector.shape_cast %358 : vector<8x1xf32> to vector<8x1xf32>
    %364 = vector.broadcast %363 : vector<8x1xf32> to vector<8x8xf32>
    %365 = vector.broadcast %cst_64 : f32 to vector<8x8xf32>
    %366 = arith.select %362, %364, %365 : vector<8x8xi1>, vector<8x8xf32>
    %367 = arith.addf %323, %366 : vector<8x8xf32>
    %368 = vector.broadcast %4 : f32 to vector<8x8xf32>
    %369 = arith.addf %367, %368 : vector<8x8xf32>
    %c0_65 = arith.constant 0 : index
    %c0_66 = arith.constant 0 : index
    %370 = vector.load %arg9[%c0_65, %c0_66] : memref<8x8xf32, #tpu.memory_space<vmem>>, vector<8x8xf32>
    tpu.vector_store %arg9[%c0_65, %c0_66], %369 {strides = array<i32>} : memref<8x8xf32, #tpu.memory_space<vmem>>, vector<8x8xf32>,
    return
  }
  func.func @transform_0(%arg0: i32) -> (i32, i32, i32) {
    %c0_i32 = arith.constant 0 : i32
    %c0_i32_0 = arith.constant 0 : i32
    %c0_i32_1 = arith.constant 0 : i32
    return %c0_i32, %arg0, %c0_i32_0 : i32, i32, i32
  }
  func.func @transform_1(%arg0: i32) -> (i32, i32) {
    %c0_i32 = arith.constant 0 : i32
    %c0_i32_0 = arith.constant 0 : i32
    return %arg0, %c0_i32 : i32, i32
  }
  func.func @transform_2(%arg0: i32) -> (i32, i32) {
    %c0_i32 = arith.constant 0 : i32
    %c0_i32_0 = arith.constant 0 : i32
    %c0_i32_1 = arith.constant 0 : i32
    return %c0_i32, %c0_i32_0 : i32, i32
  }
  func.func @transform_3(%arg0: i32) -> (i32, i32) {
    %c0_i32 = arith.constant 0 : i32
    %c0_i32_0 = arith.constant 0 : i32
    %c0_i32_1 = arith.constant 0 : i32
    return %c0_i32, %c0_i32_0 : i32, i32
  }
  func.func @transform_4(%arg0: i32) -> (i32, i32) {
    %c0_i32 = arith.constant 0 : i32
    %c0_i32_0 = arith.constant 0 : i32
    %c0_i32_1 = arith.constant 0 : i32
    return %c0_i32, %c0_i32_0 : i32, i32
  }
  func.func @transform_5(%arg0: i32) -> (i32, i32) {
    %c0_i32 = arith.constant 0 : i32
    %c0_i32_0 = arith.constant 0 : i32
    %c0_i32_1 = arith.constant 0 : i32
    return %c0_i32, %c0_i32_0 : i32, i32
  }
  func.func @transform_6(%arg0: i32) -> (i32, i32) {
    %c0_i32 = arith.constant 0 : i32
    %c0_i32_0 = arith.constant 0 : i32
    %c0_i32_1 = arith.constant 0 : i32
    return %c0_i32, %c0_i32_0 : i32, i32
  }
  func.func @transform_7(%arg0: i32) -> (i32, i32) {
    %c0_i32 = arith.constant 0 : i32
    %c0_i32_0 = arith.constant 0 : i32
    %c0_i32_1 = arith.constant 0 : i32
    return %c0_i32, %c0_i32_0 : i32, i32
  }
  func.func @transform_8(%arg0: i32) -> (i32, i32) {
    %c0_i32 = arith.constant 0 : i32
    %c0_i32_0 = arith.constant 0 : i32
    return %arg0, %c0_i32 : i32, i32
  }
}

</mosaic_0001>

<llo_original>
// kernel: tpu_custom_call.1
$region0: #{tpu_custom_call.1}
  #allocation0 [shape = 'u32[]', space=smem, size = 0x4, offset = 0x4, fixed_abs, tag = 'smem constant byte address 0x4 - core index']
  #allocation1 [shape = 'u32[72,128]{1,0:T(1,128)}', space=vmem, size = 0x9000, scoped, tag = 'internal scratch']
  #allocation2 [shape = 'f32[1,1]{1,0:T(1,128)S(1)}', space=vmem, size = 0x200, scoped, tag = 'scoped memory for tpu_custom_call.1']
  %s0 = inlined_call_operand.hbm [shape: f32[8,8,32], index: 0, kind: input, shape index: {}]
  %s1 = inlined_call_operand.hbm [shape: f32[8,128], index: 1, kind: input, shape index: {}]
  %s2 = inlined_call_operand.hbm [shape: f32[32,384], index: 2, kind: input, shape index: {}]
  %s3 = inlined_call_operand.hbm [shape: f32[128,384], index: 3, kind: input, shape index: {}]
  %s4 = inlined_call_operand.vmem [shape: f32[1,384], index: 4, kind: input, shape index: {}]
  %s5 = inlined_call_operand.vmem [shape: f32[1,128], index: 5, kind: input, shape index: {}]
  %s6 = inlined_call_operand.vmem [shape: f32[1,128], index: 6, kind: input, shape index: {}]
  %s7 = inlined_call_operand.<no memory space> [shape: f32[1,1], index: 7, kind: input, shape index: {}]
  %s8 = inlined_call_operand.hbm [shape: f32[8,8], index: 8, kind: output, shape index: {}]
  %s9 = sld [smem:[#allocation0]]
  $region58: #{tpu_custom_call.1} parent=0
    _
  %s11 = ssub.s32 1, %s9
  %s12 = scalar_select 0, %s11, %s9
  %v13 = vstv %s7
  %14 = vst [vmem:[#allocation2] sm:$0x1] %v13
  $region1: #{tpu_custom_call.1} parent=0
    #allocation3 [shape = 'u8[32768]{0}', space=vmem, size = 0x8000, scoped, tag = 'input window, operand 0, single buffered']
    #allocation4 [shape = 's32[1]{0}', space=sflag, size = 0x4, scoped, tag = 'scoped memory for tpu_custom_call.1']
    #allocation5 [shape = 's32[1]{0}', space=sflag, size = 0x4, scoped, tag = 'scoped memory for tpu_custom_call.1']
    #allocation6 [shape = 'u8[4096]{0}', space=vmem, size = 0x1000, scoped, tag = 'input window, operand 1, single buffered']
    #allocation7 [shape = 's32[1]{0}', space=sflag, size = 0x4, scoped, tag = 'scoped memory for tpu_custom_call.1']
    #allocation8 [shape = 'u8[49152]{0}', space=vmem, size = 0xc000, scoped, tag = 'input window, operand 2, single buffered']
    #allocation9 [shape = 'u8[196608]{0}', space=vmem, size = 0x30000, scoped, tag = 'input window, operand 3, single buffered']
    #allocation10 [shape = 's32[1]{0}', space=sflag, size = 0x4, scoped, tag = 'scoped memory for tpu_custom_call.1']
    #allocation11 [shape = 'u8[4096]{0}', space=vmem, size = 0x1000, scoped, tag = 'output window, operand 0, single buffered']
    %15 = vsyncpa [#allocation4], 0
    %16 = vsyncpa [#allocation7], 0
    %17 = vsyncpa [#allocation10], 0
    %18 = vsyncpa [#allocation5], 0
    // Predicated region
    $region2: #{tpu_custom_call.1} parent=1 // pred_check
      _
    $region3: #{tpu_custom_call.1} parent=1 // pred_check_branch
      %20 = sbr.rel (0) target = $region5
    $region4: #{tpu_custom_call.1} parent=1 // pred_region
      %22 = vsyncadd [#allocation4], 0
      %s23 = sshll.u32 %s0, 4
      %s24 = int_to_ptr.hbm [resolvable:$true] %s23
      %s25 = sshll.u32 [#allocation3], 4
      %s26 = int_to_ptr.vmem [resolvable:$true] %s25
      %31 = dma.hbm_to_vmem [thread:$0]  %s24, 1024, %s26, [#allocation4], 128, 128, 8
    $region5: #{tpu_custom_call.1} parent=1 // pred_fallthru
      _
    // Predicated region
    $region6: #{tpu_custom_call.1} parent=1 // pred_check
      _
    $region7: #{tpu_custom_call.1} parent=1 // pred_check_branch
      %33 = sbr.rel (0) target = $region9
    $region8: #{tpu_custom_call.1} parent=1 // pred_region
      %35 = vsyncadd [#allocation7], 0
      %s37 = sshll.u32 %s1, 4
      %s38 = int_to_ptr.hbm [resolvable:$true] %s37
      %s39 = sshll.u32 [#allocation6], 4
      %s40 = int_to_ptr.vmem [resolvable:$true] %s39
      %42 = dma.hbm_to_vmem [thread:$0]  %s38, 128, %s40, [#allocation7]
    $region9: #{tpu_custom_call.1} parent=1 // pred_fallthru
      _
    // Predicated region
    $region10: #{tpu_custom_call.1} parent=1 // pred_check
      _
    $region11: #{tpu_custom_call.1} parent=1 // pred_check_branch
      %44 = sbr.rel (0) target = $region13
    $region12: #{tpu_custom_call.1} parent=1 // pred_region
      %46 = vsyncadd [#allocation7], 0
      %s47 = sshll.u32 %s2, 4
      %s48 = int_to_ptr.hbm [resolvable:$true] %s47
      %s49 = sshll.u32 [#allocation8], 4
      %s50 = int_to_ptr.vmem [resolvable:$true] %s49
      %55 = dma.hbm_to_vmem [thread:$0]  %s48, 1536, %s50, [#allocation7], 384, 384, 24
    $region13: #{tpu_custom_call.1} parent=1 // pred_fallthru
      _
    // Predicated region
    $region14: #{tpu_custom_call.1} parent=1 // pred_check
      _
    $region15: #{tpu_custom_call.1} parent=1 // pred_check_branch
      %57 = sbr.rel (0) target = $region17
    $region16: #{tpu_custom_call.1} parent=1 // pred_region
      %59 = vsyncadd [#allocation10], 0
      %s60 = sshll.u32 %s3, 4
      %s61 = int_to_ptr.hbm [resolvable:$true] %s60
      %s62 = sshll.u32 [#allocation9], 4
      %s63 = int_to_ptr.vmem [resolvable:$true] %s62
      %68 = dma.hbm_to_vmem [thread:$0]  %s61, 6144, %s63, [#allocation10], 384, 384, 24
    $region17: #{tpu_custom_call.1} parent=1 // pred_fallthru
      _
    // Predicated region
    $region18: #{tpu_custom_call.1} parent=1 // pred_check
      _
    $region19: #{tpu_custom_call.1} parent=1 // pred_check_branch
      %70 = sbr.rel (0) target = $region21
    $region20: #{tpu_custom_call.1} parent=1 // pred_region
      _
    $region21: #{tpu_custom_call.1} parent=1 // pred_fallthru
      _
    // Predicated region
    $region22: #{tpu_custom_call.1} parent=1 // pred_check
      _
    $region23: #{tpu_custom_call.1} parent=1 // pred_check_branch
      %72 = sbr.rel (0) target = $region25
    $region24: #{tpu_custom_call.1} parent=1 // pred_region
      _
    $region25: #{tpu_custom_call.1} parent=1 // pred_fallthru
      _
    // Predicated region
    $region26: #{tpu_custom_call.1} parent=1 // pred_check
      _
    $region27: #{tpu_custom_call.1} parent=1 // pred_check_branch
      %74 = sbr.rel (0) target = $region29
    $region28: #{tpu_custom_call.1} parent=1 // pred_region
      _
    $region29: #{tpu_custom_call.1} parent=1 // pred_fallthru
      _
    // Predicated region
    $region30: #{tpu_custom_call.1} parent=1 // pred_check
      _
    $region31: #{tpu_custom_call.1} parent=1 // pred_check_branch
      %76 = sbr.rel (0) target = $region33
    $region32: #{tpu_custom_call.1} parent=1 // pred_region
      _
    $region33: #{tpu_custom_call.1} parent=1 // pred_fallthru
      _
    // Predicated region
    $region34: #{tpu_custom_call.1} parent=1 // pred_check
      _
    $region35: #{tpu_custom_call.1} parent=1 // pred_check_branch
      %78 = sbr.rel (0) target = $region37
    $region36: #{tpu_custom_call.1} parent=1 // pred_region
      %80 = dma.done [#allocation4], 1024
    $region37: #{tpu_custom_call.1} parent=1 // pred_fallthru
      _
    // Predicated region
    $region38: #{tpu_custom_call.1} parent=1 // pred_check
      _
    $region39: #{tpu_custom_call.1} parent=1 // pred_check_branch
      %82 = sbr.rel (0) target = $region41
    $region40: #{tpu_custom_call.1} parent=1 // pred_region
      %84 = dma.done [#allocation7], 128
    $region41: #{tpu_custom_call.1} parent=1 // pred_fallthru
      _
    // Predicated region
    $region42: #{tpu_custom_call.1} parent=1 // pred_check
      _
    $region43: #{tpu_custom_call.1} parent=1 // pred_check_branch
      %86 = sbr.rel (0) target = $region45
    $region44: #{tpu_custom_call.1} parent=1 // pred_region
      %88 = dma.done [#allocation7], 1536
    $region45: #{tpu_custom_call.1} parent=1 // pred_fallthru
      _
    // Predicated region
    $region46: #{tpu_custom_call.1} parent=1 // pred_check
      _
    $region47: #{tpu_custom_call.1} parent=1 // pred_check_branch
      %90 = sbr.rel (0) target = $region49
    $region48: #{tpu_custom_call.1} parent=1 // pred_region
      %92 = dma.done [#allocation10], 6144
    $region49: #{tpu_custom_call.1} parent=1 // pred_fallthru
      _
    %v93 = vld [vmem:[#allocation9] sm:$0xff]
    %v94 = vld [vmem:[#allocation9 + $0x8] sm:$0xff]
    %v95 = vld [vmem:[#allocation9 + $0x10] sm:$0xff]
    %v96 = vld [vmem:[#allocation9 + $0x18] sm:$0xff]
    %v97 = vld [vmem:[#allocation9 + $0x20] sm:$0xff]
    %v98 = vld [vmem:[#allocation9 + $0x28] sm:$0xff]
    %v99 = vld [vmem:[#allocation9 + $0x30] sm:$0xff]
    %v100 = vld [vmem:[#allocation9 + $0x38] sm:$0xff]
    %v101 = vld [vmem:[#allocation9 + $0x40] sm:$0xff]
    %v102 = vld [vmem:[#allocation9 + $0x48] sm:$0xff]
    %v103 = vld [vmem:[#allocation9 + $0x50] sm:$0xff]
    %v104 = vld [vmem:[#allocation9 + $0x58] sm:$0xff]
    %v105 = vld [vmem:[#allocation9 + $0x60] sm:$0xff]
    %v106 = vld [vmem:[#allocation9 + $0x68] sm:$0xff]
    %v107 = vld [vmem:[#allocation9 + $0x70] sm:$0xff]
    %v108 = vld [vmem:[#allocation9 + $0x78] sm:$0xff]
    %v109 = vld [vmem:[#allocation9 + $0x80] sm:$0xff]
    %v110 = vld [vmem:[#allocation9 + $0x88] sm:$0xff]
    %v111 = vld [vmem:[#allocation9 + $0x90] sm:$0xff]
    %v112 = vld [vmem:[#allocation9 + $0x98] sm:$0xff]
    %v113 = vld [vmem:[#allocation9 + $0xa0] sm:$0xff]
    %v114 = vld [vmem:[#allocation9 + $0xa8] sm:$0xff]
    %v115 = vld [vmem:[#allocation9 + $0xb0] sm:$0xff]
    %v116 = vld [vmem:[#allocation9 + $0xb8] sm:$0xff]
    %v117 = vld [vmem:[#allocation9 + $0xc0] sm:$0xff]
    %v118 = vld [vmem:[#allocation9 + $0xc8] sm:$0xff]
    %v119 = vld [vmem:[#allocation9 + $0xd0] sm:$0xff]
    %v120 = vld [vmem:[#allocation9 + $0xd8] sm:$0xff]
    %v121 = vld [vmem:[#allocation9 + $0xe0] sm:$0xff]
    %v122 = vld [vmem:[#allocation9 + $0xe8] sm:$0xff]
    %v123 = vld [vmem:[#allocation9 + $0xf0] sm:$0xff]
    %v124 = vld [vmem:[#allocation9 + $0xf8] sm:$0xff]
    %v125 = vld [vmem:[#allocation9 + $0x100] sm:$0xff]
    %v126 = vld [vmem:[#allocation9 + $0x108] sm:$0xff]
    %v127 = vld [vmem:[#allocation9 + $0x110] sm:$0xff]
    %v128 = vld [vmem:[#allocation9 + $0x118] sm:$0xff]
    %v129 = vld [vmem:[#allocation9 + $0x120] sm:$0xff]
    %v130 = vld [vmem:[#allocation9 + $0x128] sm:$0xff]
    %v131 = vld [vmem:[#allocation9 + $0x130] sm:$0xff]
    %v132 = vld [vmem:[#allocation9 + $0x138] sm:$0xff]
    %v133 = vld [vmem:[#allocation9 + $0x140] sm:$0xff]
    %v134 = vld [vmem:[#allocation9 + $0x148] sm:$0xff]
    %v135 = vld [vmem:[#allocation9 + $0x150] sm:$0xff]
    %v136 = vld [vmem:[#allocation9 + $0x158] sm:$0xff]
    %v137 = vld [vmem:[#allocation9 + $0x160] sm:$0xff]
    %v138 = vld [vmem:[#allocation9 + $0x168] sm:$0xff]
    %v139 = vld [vmem:[#allocation9 + $0x170] sm:$0xff]
    %v140 = vld [vmem:[#allocation9 + $0x178] sm:$0xff]
    %v141 = vld [vmem:[%s5] sm:$0x1]
    %v142 = vld [vmem:[%s6] sm:$0x1]
    %v143 = vld [vmem:[#allocation2] sm:$0x1]
    %s144 = vtos %v143
    %v145 = vld [vmem:[#allocation3] sm:$0xff]
    %v146 = vld [vmem:[#allocation3 + $0x8] sm:$0xff]
    %v147 = vld [vmem:[#allocation3 + $0x10] sm:$0xff]
    %v148 = vld [vmem:[#allocation3 + $0x18] sm:$0xff]
    %v149 = vld [vmem:[#allocation3 + $0x20] sm:$0xff]
    %v150 = vld [vmem:[#allocation3 + $0x28] sm:$0xff]
    %v151 = vld [vmem:[#allocation3 + $0x30] sm:$0xff]
    %v152 = vld [vmem:[#allocation3 + $0x38] sm:$0xff]
    %v153 = vld [vmem:[#allocation8] sm:$0xff]
    %v154 = vld [vmem:[#allocation8 + $0x8] sm:$0xff]
    %v155 = vld [vmem:[#allocation8 + $0x10] sm:$0xff]
    %v156 = vld [vmem:[#allocation8 + $0x18] sm:$0xff]
    %v157 = vld [vmem:[#allocation8 + $0x20] sm:$0xff]
    %v158 = vld [vmem:[#allocation8 + $0x28] sm:$0xff]
    %v159 = vld [vmem:[#allocation8 + $0x30] sm:$0xff]
    %v160 = vld [vmem:[#allocation8 + $0x38] sm:$0xff]
    %v161 = vld [vmem:[#allocation8 + $0x40] sm:$0xff]
    %v162 = vld [vmem:[#allocation8 + $0x48] sm:$0xff]
    %v163 = vld [vmem:[#allocation8 + $0x50] sm:$0xff]
    %v164 = vld [vmem:[#allocation8 + $0x58] sm:$0xff]
    %v165 = vld [vmem:[%s4] sm:$0x7]
    %v167 = vperm.slane %v165, 0
    %v168 = vperm.slane %v165, 1
    %v169 = vperm.slane %v165, 2
    %vm173 = vcmask 261120
    %v175 = vsel %vm173, %v145, 0
    %v178 = vsel %vm173, %v146, 0
    %v181 = vsel %vm173, %v147, 0
    %v184 = vsel %vm173, %v148, 0
    %v187 = vsel %vm173, %v149, 0
    %v190 = vsel %vm173, %v150, 0
    %v193 = vsel %vm173, %v151, 0
    %v196 = vsel %vm173, %v152, 0
    %198 = vmatpush.msra.mxu0 0.0
    %199 = vmatpush.msra.mxu0 0.0
    %200 = vmatpush.msra.mxu0 0.0
    %201 = vmatpush.msra.mxu0 0.0
    %202 = vmatpush.msra.mxu0 0.0
    %203 = vmatpush.msra.mxu0 0.0
    %204 = vmatpush.msra.mxu0 0.0
    %205 = vmatpush.msra.mxu0 0.0
    %206 = vmatpush.msra.mxu0 0.0
    %207 = vmatpush.msra.mxu0 0.0
    %208 = vmatpush.msra.mxu0 0.0
    %209 = vmatpush.msra.mxu0 0.0
    %210 = vmatpush.msra.mxu0 %v162
    %211 = vmatpush.msra.mxu0 %v159
    %212 = vmatpush.msra.mxu0 %v156
    %213 = vmatpush.msra.mxu0 %v153
    %214 = vmatmul.f32.gmra.mxu0 %v175
    %v215 = vpop.f32.mrf.mxu0
    %v216 = vadd.f32 %v167, %v215
    %217 = vmatmul.f32.gmra.mxu0 %v178
    %v218 = vpop.f32.mrf.mxu0
    %v219 = vadd.f32 %v167, %v218
    %220 = vmatmul.f32.gmra.mxu0 %v181
    %v221 = vpop.f32.mrf.mxu0
    %v222 = vadd.f32 %v167, %v221
    %223 = vmatmul.f32.gmra.mxu0 %v184
    %v224 = vpop.f32.mrf.mxu0
    %v225 = vadd.f32 %v167, %v224
    %226 = vmatmul.f32.gmra.mxu0 %v187
    %v227 = vpop.f32.mrf.mxu0
    %v228 = vadd.f32 %v167, %v227
    %229 = vmatmul.f32.gmra.mxu0 %v190
    %v230 = vpop.f32.mrf.mxu0
    %v231 = vadd.f32 %v167, %v230
    %232 = vmatmul.f32.gmra.mxu0 %v193
    %v233 = vpop.f32.mrf.mxu0
    %v234 = vadd.f32 %v167, %v233
    %235 = vmatmul.f32.gmra.mxu0 %v196
    %v236 = vpop.f32.mrf.mxu0
    %v237 = vadd.f32 %v167, %v236
    %238 = vdwg.mxu0
    %239 = vmatpush.msra.mxu0 0.0
    %240 = vmatpush.msra.mxu0 0.0
    %241 = vmatpush.msra.mxu0 0.0
    %242 = vmatpush.msra.mxu0 0.0
    %243 = vmatpush.msra.mxu0 0.0
    %244 = vmatpush.msra.mxu0 0.0
    %245 = vmatpush.msra.mxu0 0.0
    %246 = vmatpush.msra.mxu0 0.0
    %247 = vmatpush.msra.mxu0 0.0
    %248 = vmatpush.msra.mxu0 0.0
    %249 = vmatpush.msra.mxu0 0.0
    %250 = vmatpush.msra.mxu0 0.0
    %251 = vmatpush.msra.mxu0 %v163
    %252 = vmatpush.msra.mxu0 %v160
    %253 = vmatpush.msra.mxu0 %v157
    %254 = vmatpush.msra.mxu0 %v154
    %255 = vmatmul.f32.gmra.mxu0 %v175
    %v256 = vpop.f32.mrf.mxu0
    %v257 = vadd.f32 %v168, %v256
    %258 = vmatmul.f32.gmra.mxu0 %v178
    %v259 = vpop.f32.mrf.mxu0
    %v260 = vadd.f32 %v168, %v259
    %261 = vmatmul.f32.gmra.mxu0 %v181
    %v262 = vpop.f32.mrf.mxu0
    %v263 = vadd.f32 %v168, %v262
    %264 = vmatmul.f32.gmra.mxu0 %v184
    %v265 = vpop.f32.mrf.mxu0
    %v266 = vadd.f32 %v168, %v265
    %267 = vmatmul.f32.gmra.mxu0 %v187
    %v268 = vpop.f32.mrf.mxu0
    %v269 = vadd.f32 %v168, %v268
    %270 = vmatmul.f32.gmra.mxu0 %v190
    %v271 = vpop.f32.mrf.mxu0
    %v272 = vadd.f32 %v168, %v271
    %273 = vmatmul.f32.gmra.mxu0 %v193
    %v274 = vpop.f32.mrf.mxu0
    %v275 = vadd.f32 %v168, %v274
    %276 = vmatmul.f32.gmra.mxu0 %v196
    %v277 = vpop.f32.mrf.mxu0
    %v278 = vadd.f32 %v168, %v277
    %279 = vdwg.mxu0
    %280 = vmatpush.msra.mxu0 0.0
    %281 = vmatpush.msra.mxu0 0.0
    %282 = vmatpush.msra.mxu0 0.0
    %283 = vmatpush.msra.mxu0 0.0
    %284 = vmatpush.msra.mxu0 0.0
    %285 = vmatpush.msra.mxu0 0.0
    %286 = vmatpush.msra.mxu0 0.0
    %287 = vmatpush.msra.mxu0 0.0
    %288 = vmatpush.msra.mxu0 0.0
    %289 = vmatpush.msra.mxu0 0.0
    %290 = vmatpush.msra.mxu0 0.0
    %291 = vmatpush.msra.mxu0 0.0
    %292 = vmatpush.msra.mxu0 %v164
    %293 = vmatpush.msra.mxu0 %v161
    %294 = vmatpush.msra.mxu0 %v158
    %295 = vmatpush.msra.mxu0 %v155
    %296 = vmatmul.f32.gmra.mxu0 %v175
    %v297 = vpop.f32.mrf.mxu0
    %v298 = vadd.f32 %v169, %v297
    %299 = vmatmul.f32.gmra.mxu0 %v178
    %v300 = vpop.f32.mrf.mxu0
    %v301 = vadd.f32 %v169, %v300
    %302 = vmatmul.f32.gmra.mxu0 %v181
    %v303 = vpop.f32.mrf.mxu0
    %v304 = vadd.f32 %v169, %v303
    %305 = vmatmul.f32.gmra.mxu0 %v184
    %v306 = vpop.f32.mrf.mxu0
    %v307 = vadd.f32 %v169, %v306
    %308 = vmatmul.f32.gmra.mxu0 %v187
    %v309 = vpop.f32.mrf.mxu0
    %v310 = vadd.f32 %v169, %v309
    %311 = vmatmul.f32.gmra.mxu0 %v190
    %v312 = vpop.f32.mrf.mxu0
    %v313 = vadd.f32 %v169, %v312
    %314 = vmatmul.f32.gmra.mxu0 %v193
    %v315 = vpop.f32.mrf.mxu0
    %v316 = vadd.f32 %v169, %v315
    %317 = vmatmul.f32.gmra.mxu0 %v196
    %v318 = vpop.f32.mrf.mxu0
    %v319 = vadd.f32 %v169, %v318
    %320 = vdwg.mxu0
    %v321 = vlaneseq
    %v322 = vand.u32 %v321, 127
    %v323 = vld [vmem:[#allocation6] sm:$0xff]
    %324 = vmatpush.msra.mxu0 %v138
    %325 = vmatpush.msra.mxu0 %v135
    %326 = vmatpush.msra.mxu0 %v132
    %327 = vmatpush.msra.mxu0 %v129
    %328 = vmatpush.msra.mxu0 %v126
    %329 = vmatpush.msra.mxu0 %v123
    %330 = vmatpush.msra.mxu0 %v120
    %331 = vmatpush.msra.mxu0 %v117
    %332 = vmatpush.msra.mxu0 %v114
    %333 = vmatpush.msra.mxu0 %v111
    %334 = vmatpush.msra.mxu0 %v108
    %335 = vmatpush.msra.mxu0 %v105
    %336 = vmatpush.msra.mxu0 %v102
    %337 = vmatpush.msra.mxu0 %v99
    %338 = vmatpush.msra.mxu0 %v96
    %339 = vmatpush.msra.mxu0 %v93
    %340 = vmatmul.f32.gmra.mxu0 %v323
    %v341 = vpop.f32.mrf.mxu0
    %v342 = vadd.f32 0.0, %v341
    %343 = vdwg.mxu0
    %344 = vmatpush.msra.mxu0 %v139
    %345 = vmatpush.msra.mxu0 %v136
    %346 = vmatpush.msra.mxu0 %v133
    %347 = vmatpush.msra.mxu0 %v130
    %348 = vmatpush.msra.mxu0 %v127
    %349 = vmatpush.msra.mxu0 %v124
    %350 = vmatpush.msra.mxu0 %v121
    %351 = vmatpush.msra.mxu0 %v118
    %352 = vmatpush.msra.mxu0 %v115
    %353 = vmatpush.msra.mxu0 %v112
    %354 = vmatpush.msra.mxu0 %v109
    %355 = vmatpush.msra.mxu0 %v106
    %356 = vmatpush.msra.mxu0 %v103
    %357 = vmatpush.msra.mxu0 %v100
    %358 = vmatpush.msra.mxu0 %v97
    %359 = vmatpush.msra.mxu0 %v94
    %360 = vmatmul.f32.gmra.mxu0 %v323
    %v361 = vpop.f32.mrf.mxu0
    %v362 = vadd.f32 0.0, %v361
    %363 = vdwg.mxu0
    %364 = vmatpush.msra.mxu0 %v140
    %365 = vmatpush.msra.mxu0 %v137
    %366 = vmatpush.msra.mxu0 %v134
    %367 = vmatpush.msra.mxu0 %v131
    %368 = vmatpush.msra.mxu0 %v128
    %369 = vmatpush.msra.mxu0 %v125
    %370 = vmatpush.msra.mxu0 %v122
    %371 = vmatpush.msra.mxu0 %v119
    %372 = vmatpush.msra.mxu0 %v116
    %373 = vmatpush.msra.mxu0 %v113
    %374 = vmatpush.msra.mxu0 %v110
    %375 = vmatpush.msra.mxu0 %v107
    %376 = vmatpush.msra.mxu0 %v104
    %377 = vmatpush.msra.mxu0 %v101
    %378 = vmatpush.msra.mxu0 %v98
    %379 = vmatpush.msra.mxu0 %v95
    %380 = vmatmul.f32.gmra.mxu0 %v323
    %v381 = vpop.f32.mrf.mxu0
    %v382 = vadd.f32 0.0, %v381
    %383 = vdwg.mxu0
    %v384 = vadd.f32 %v216, %v342
    %v385 = vxor.u32 %v384, 2147483648
    %v386 = vmul.f32 %v385, 1.442695
    %v387 = vpow.pop %v386
    %v388 = vadd.f32 %v387, 1.0
    %v389 = vrcp.pop %v388
    %v390 = vmul.f32 %v388, %v389
    %v391 = vsub.f32 1.0, %v390
    %v392 = vmul.f32 %v389, %v391
    %v393 = vadd.f32 %v389, %v392
    %vm394 = vweird.f32 %v388
    %vm395 = vweird.f32 %v389
    %vm396 = vmor %vm394, %vm395
    %v397 = vsel %vm396, %v389, %v393
    %v398 = vand.u32 2147483647, %v388
    %vm399 = vcmp.eq.f32.partialorder %v398, 8.507059e+37
    %v400 = vand.u32 %v388, 2147483648
    %v401 = vor.u32 1.1754944e-38, %v400
    %v402 = vsel %vm399, %v401, %v397
    %v403 = vmul.f32 1.0, %v402
    %v404 = vadd.f32 %v257, %v362
    %v405 = vxor.u32 %v404, 2147483648
    %v406 = vmul.f32 %v405, 1.442695
    %v407 = vpow.pop %v406
    %v408 = vadd.f32 %v407, 1.0
    %v409 = vrcp.pop %v408
    %v410 = vmul.f32 %v408, %v409
    %v411 = vsub.f32 1.0, %v410
    %v412 = vmul.f32 %v409, %v411
    %v413 = vadd.f32 %v409, %v412
    %vm414 = vweird.f32 %v408
    %vm415 = vweird.f32 %v409
    %vm416 = vmor %vm414, %vm415
    %v417 = vsel %vm416, %v409, %v413
    %v418 = vand.u32 2147483647, %v408
    %vm419 = vcmp.eq.f32.partialorder %v418, 8.507059e+37
    %v420 = vand.u32 %v408, 2147483648
    %v421 = vor.u32 1.1754944e-38, %v420
    %v422 = vsel %vm419, %v421, %v417
    %v423 = vmul.f32 1.0, %v422
    %v425 = vperm.slane %v141, 0
    %v427 = vadd.f32 %v382, %v425
    %v428 = vmul.f32 %v403, %v427
    %v429 = vadd.f32 %v298, %v428
    %v430 = vtanh.pop %v429
    %v431 = vsub.f32 1.0, %v423
    %v432 = vmul.f32 %v431, %v430
    %v433 = vmul.f32 %v423, %v323
    %v434 = vadd.f32 %v432, %v433
    %v436 = vperm.slane %v142, 0
    %v438 = vmul.f32 %v434, %v436
    %439 = vadd.xlane.f32.xlu0 %v438
    %v440 = vpop.xlane.xlu0 %439
    %vm441 = vcmp.eq.s32.totalorder %v322, 0
    %v442 = vsel %vm441, 1, 0
    %vm443 = vcmp.eq.s32.totalorder %v442, 1
    %v444 = vsel %vm443, %v440, 0.0
    %v445 = vadd.f32 %v444, 0.0
    %446 = vmatpush.msra.mxu0 %v138
    %447 = vmatpush.msra.mxu0 %v135
    %448 = vmatpush.msra.mxu0 %v132
    %449 = vmatpush.msra.mxu0 %v129
    %450 = vmatpush.msra.mxu0 %v126
    %451 = vmatpush.msra.mxu0 %v123
    %452 = vmatpush.msra.mxu0 %v120
    %453 = vmatpush.msra.mxu0 %v117
    %454 = vmatpush.msra.mxu0 %v114
    %455 = vmatpush.msra.mxu0 %v111
    %456 = vmatpush.msra.mxu0 %v108
    %457 = vmatpush.msra.mxu0 %v105
    %458 = vmatpush.msra.mxu0 %v102
    %459 = vmatpush.msra.mxu0 %v99
    %460 = vmatpush.msra.mxu0 %v96
    %461 = vmatpush.msra.mxu0 %v93
    %462 = vmatmul.f32.gmra.mxu0 %v434
    %v463 = vpop.f32.mrf.mxu0
    %v464 = vadd.f32 0.0, %v463
    %465 = vdwg.mxu0
    %466 = vmatpush.msra.mxu0 %v139
    %467 = vmatpush.msra.mxu0 %v136
    %468 = vmatpush.msra.mxu0 %v133
    %469 = vmatpush.msra.mxu0 %v130
    %470 = vmatpush.msra.mxu0 %v127
    %471 = vmatpush.msra.mxu0 %v124
    %472 = vmatpush.msra.mxu0 %v121
    %473 = vmatpush.msra.mxu0 %v118
    %474 = vmatpush.msra.mxu0 %v115
    %475 = vmatpush.msra.mxu0 %v112
    %476 = vmatpush.msra.mxu0 %v109
    %477 = vmatpush.msra.mxu0 %v106
    %478 = vmatpush.msra.mxu0 %v103
    %479 = vmatpush.msra.mxu0 %v100
    %480 = vmatpush.msra.mxu0 %v97
    %481 = vmatpush.msra.mxu0 %v94
    %482 = vmatmul.f32.gmra.mxu0 %v434
    %v483 = vpop.f32.mrf.mxu0
    %v484 = vadd.f32 0.0, %v483
    %485 = vdwg.mxu0
    %486 = vmatpush.msra.mxu0 %v140
    %487 = vmatpush.msra.mxu0 %v137
    %488 = vmatpush.msra.mxu0 %v134
    %489 = vmatpush.msra.mxu0 %v131
    %490 = vmatpush.msra.mxu0 %v128
    %491 = vmatpush.msra.mxu0 %v125
    %492 = vmatpush.msra.mxu0 %v122
    %493 = vmatpush.msra.mxu0 %v119
    %494 = vmatpush.msra.mxu0 %v116
    %495 = vmatpush.msra.mxu0 %v113
    %496 = vmatpush.msra.mxu0 %v110
    %497 = vmatpush.msra.mxu0 %v107
    %498 = vmatpush.msra.mxu0 %v104
    %499 = vmatpush.msra.mxu0 %v101
    %500 = vmatpush.msra.mxu0 %v98
    %501 = vmatpush.msra.mxu0 %v95
    %502 = vmatmul.f32.gmra.mxu0 %v434
    %v503 = vpop.f32.mrf.mxu0
    %v504 = vadd.f32 0.0, %v503
    %505 = vdwg.mxu0
    %v506 = vadd.f32 %v219, %v464
    %v507 = vxor.u32 %v506, 2147483648
    %v508 = vmul.f32 %v507, 1.442695
    %v509 = vpow.pop %v508
    %v510 = vadd.f32 %v509, 1.0
    %v511 = vrcp.pop %v510
    %v512 = vmul.f32 %v510, %v511
    %v513 = vsub.f32 1.0, %v512
    %v514 = vmul.f32 %v511, %v513
    %v515 = vadd.f32 %v511, %v514
    %vm516 = vweird.f32 %v510
    %vm517 = vweird.f32 %v511
    %vm518 = vmor %vm516, %vm517
    %v519 = vsel %vm518, %v511, %v515
    %v520 = vand.u32 2147483647, %v510
    %vm521 = vcmp.eq.f32.partialorder %v520, 8.507059e+37
    %v522 = vand.u32 %v510, 2147483648
    %v523 = vor.u32 1.1754944e-38, %v522
    %v524 = vsel %vm521, %v523, %v519
    %v525 = vmul.f32 1.0, %v524
    %v526 = vadd.f32 %v260, %v484
    %v527 = vxor.u32 %v526, 2147483648
    %v528 = vmul.f32 %v527, 1.442695
    %v529 = vpow.pop %v528
    %v530 = vadd.f32 %v529, 1.0
    %v531 = vrcp.pop %v530
    %v532 = vmul.f32 %v530, %v531
    %v533 = vsub.f32 1.0, %v532
    %v534 = vmul.f32 %v531, %v533
    %v535 = vadd.f32 %v531, %v534
    %vm536 = vweird.f32 %v530
    %vm537 = vweird.f32 %v531
    %vm538 = vmor %vm536, %vm537
    %v539 = vsel %vm538, %v531, %v535
    %v540 = vand.u32 2147483647, %v530
    %vm541 = vcmp.eq.f32.partialorder %v540, 8.507059e+37
    %v542 = vand.u32 %v530, 2147483648
    %v543 = vor.u32 1.1754944e-38, %v542
    %v544 = vsel %vm541, %v543, %v539
    %v545 = vmul.f32 1.0, %v544
    %v546 = vadd.f32 %v504, %v425
    %v547 = vmul.f32 %v525, %v546
    %v548 = vadd.f32 %v301, %v547
    %v549 = vtanh.pop %v548
    %v550 = vsub.f32 1.0, %v545
    %v551 = vmul.f32 %v550, %v549
    %v552 = vmul.f32 %v545, %v434
    %v553 = vadd.f32 %v551, %v552
    %v554 = vmul.f32 %v553, %v436
    %555 = vadd.xlane.f32.xlu0 %v554
    %v556 = vpop.xlane.xlu0 %555
    %vm557 = vcmp.eq.s32.totalorder %v322, 1
    %v558 = vsel %vm557, 1, 0
    %vm559 = vcmp.eq.s32.totalorder %v558, 1
    %v560 = vsel %vm559, %v556, 0.0
    %v561 = vadd.f32 %v445, %v560
    %562 = vmatpush.msra.mxu0 %v138
    %563 = vmatpush.msra.mxu0 %v135
    %564 = vmatpush.msra.mxu0 %v132
    %565 = vmatpush.msra.mxu0 %v129
    %566 = vmatpush.msra.mxu0 %v126
    %567 = vmatpush.msra.mxu0 %v123
    %568 = vmatpush.msra.mxu0 %v120
    %569 = vmatpush.msra.mxu0 %v117
    %570 = vmatpush.msra.mxu0 %v114
    %571 = vmatpush.msra.mxu0 %v111
    %572 = vmatpush.msra.mxu0 %v108
    %573 = vmatpush.msra.mxu0 %v105
    %574 = vmatpush.msra.mxu0 %v102
    %575 = vmatpush.msra.mxu0 %v99
    %576 = vmatpush.msra.mxu0 %v96
    %577 = vmatpush.msra.mxu0 %v93
    %578 = vmatmul.f32.gmra.mxu0 %v553
    %v579 = vpop.f32.mrf.mxu0
    %v580 = vadd.f32 0.0, %v579
    %581 = vdwg.mxu0
    %582 = vmatpush.msra.mxu0 %v139
    %583 = vmatpush.msra.mxu0 %v136
    %584 = vmatpush.msra.mxu0 %v133
    %585 = vmatpush.msra.mxu0 %v130
    %586 = vmatpush.msra.mxu0 %v127
    %587 = vmatpush.msra.mxu0 %v124
    %588 = vmatpush.msra.mxu0 %v121
    %589 = vmatpush.msra.mxu0 %v118
    %590 = vmatpush.msra.mxu0 %v115
    %591 = vmatpush.msra.mxu0 %v112
    %592 = vmatpush.msra.mxu0 %v109
    %593 = vmatpush.msra.mxu0 %v106
    %594 = vmatpush.msra.mxu0 %v103
    %595 = vmatpush.msra.mxu0 %v100
    %596 = vmatpush.msra.mxu0 %v97
    %597 = vmatpush.msra.mxu0 %v94
    %598 = vmatmul.f32.gmra.mxu0 %v553
    %v599 = vpop.f32.mrf.mxu0
    %v600 = vadd.f32 0.0, %v599
    %601 = vdwg.mxu0
    %602 = vmatpush.msra.mxu0 %v140
    %603 = vmatpush.msra.mxu0 %v137
    %604 = vmatpush.msra.mxu0 %v134
    %605 = vmatpush.msra.mxu0 %v131
    %606 = vmatpush.msra.mxu0 %v128
    %607 = vmatpush.msra.mxu0 %v125
    %608 = vmatpush.msra.mxu0 %v122
    %609 = vmatpush.msra.mxu0 %v119
    %610 = vmatpush.msra.mxu0 %v116
    %611 = vmatpush.msra.mxu0 %v113
    %612 = vmatpush.msra.mxu0 %v110
    %613 = vmatpush.msra.mxu0 %v107
    %614 = vmatpush.msra.mxu0 %v104
    %615 = vmatpush.msra.mxu0 %v101
    %616 = vmatpush.msra.mxu0 %v98
    %617 = vmatpush.msra.mxu0 %v95
    %618 = vmatmul.f32.gmra.mxu0 %v553
    %v619 = vpop.f32.mrf.mxu0
    %v620 = vadd.f32 0.0, %v619
    %621 = vdwg.mxu0
    %v622 = vadd.f32 %v222, %v580
    %v623 = vxor.u32 %v622, 2147483648
    %v624 = vmul.f32 %v623, 1.442695
    %v625 = vpow.pop %v624
    %v626 = vadd.f32 %v625, 1.0
    %v627 = vrcp.pop %v626
    %v628 = vmul.f32 %v626, %v627
    %v629 = vsub.f32 1.0, %v628
    %v630 = vmul.f32 %v627, %v629
    %v631 = vadd.f32 %v627, %v630
    %vm632 = vweird.f32 %v626
    %vm633 = vweird.f32 %v627
    %vm634 = vmor %vm632, %vm633
    %v635 = vsel %vm634, %v627, %v631
    %v636 = vand.u32 2147483647, %v626
    %vm637 = vcmp.eq.f32.partialorder %v636, 8.507059e+37
    %v638 = vand.u32 %v626, 2147483648
    %v639 = vor.u32 1.1754944e-38, %v638
    %v640 = vsel %vm637, %v639, %v635
    %v641 = vmul.f32 1.0, %v640
    %v642 = vadd.f32 %v263, %v600
    %v643 = vxor.u32 %v642, 2147483648
    %v644 = vmul.f32 %v643, 1.442695
    %v645 = vpow.pop %v644
    %v646 = vadd.f32 %v645, 1.0
    %v647 = vrcp.pop %v646
    %v648 = vmul.f32 %v646, %v647
    %v649 = vsub.f32 1.0, %v648
    %v650 = vmul.f32 %v647, %v649
    %v651 = vadd.f32 %v647, %v650
    %vm652 = vweird.f32 %v646
    %vm653 = vweird.f32 %v647
    %vm654 = vmor %vm652, %vm653
    %v655 = vsel %vm654, %v647, %v651
    %v656 = vand.u32 2147483647, %v646
    %vm657 = vcmp.eq.f32.partialorder %v656, 8.507059e+37
    %v658 = vand.u32 %v646, 2147483648
    %v659 = vor.u32 1.1754944e-38, %v658
    %v660 = vsel %vm657, %v659, %v655
    %v661 = vmul.f32 1.0, %v660
    %v662 = vadd.f32 %v620, %v425
    %v663 = vmul.f32 %v641, %v662
    %v664 = vadd.f32 %v304, %v663
    %v665 = vtanh.pop %v664
    %v666 = vsub.f32 1.0, %v661
    %v667 = vmul.f32 %v666, %v665
    %v668 = vmul.f32 %v661, %v553
    %v669 = vadd.f32 %v667, %v668
    %v670 = vmul.f32 %v669, %v436
    %671 = vadd.xlane.f32.xlu0 %v670
    %v672 = vpop.xlane.xlu0 %671
    %vm673 = vcmp.eq.s32.totalorder %v322, 2
    %v674 = vsel %vm673, 1, 0
    %vm675 = vcmp.eq.s32.totalorder %v674, 1
    %v676 = vsel %vm675, %v672, 0.0
    %v677 = vadd.f32 %v561, %v676
    %678 = vmatpush.msra.mxu0 %v138
    %679 = vmatpush.msra.mxu0 %v135
    %680 = vmatpush.msra.mxu0 %v132
    %681 = vmatpush.msra.mxu0 %v129
    %682 = vmatpush.msra.mxu0 %v126
    %683 = vmatpush.msra.mxu0 %v123
    %684 = vmatpush.msra.mxu0 %v120
    %685 = vmatpush.msra.mxu0 %v117
    %686 = vmatpush.msra.mxu0 %v114
    %687 = vmatpush.msra.mxu0 %v111
    %688 = vmatpush.msra.mxu0 %v108
    %689 = vmatpush.msra.mxu0 %v105
    %690 = vmatpush.msra.mxu0 %v102
    %691 = vmatpush.msra.mxu0 %v99
    %692 = vmatpush.msra.mxu0 %v96
    %693 = vmatpush.msra.mxu0 %v93
    %694 = vmatmul.f32.gmra.mxu0 %v669
    %v695 = vpop.f32.mrf.mxu0
    %v696 = vadd.f32 0.0, %v695
    %697 = vdwg.mxu0
    %698 = vmatpush.msra.mxu0 %v139
    %699 = vmatpush.msra.mxu0 %v136
    %700 = vmatpush.msra.mxu0 %v133
    %701 = vmatpush.msra.mxu0 %v130
    %702 = vmatpush.msra.mxu0 %v127
    %703 = vmatpush.msra.mxu0 %v124
    %704 = vmatpush.msra.mxu0 %v121
    %705 = vmatpush.msra.mxu0 %v118
    %706 = vmatpush.msra.mxu0 %v115
    %707 = vmatpush.msra.mxu0 %v112
    %708 = vmatpush.msra.mxu0 %v109
    %709 = vmatpush.msra.mxu0 %v106
    %710 = vmatpush.msra.mxu0 %v103
    %711 = vmatpush.msra.mxu0 %v100
    %712 = vmatpush.msra.mxu0 %v97
    %713 = vmatpush.msra.mxu0 %v94
    %714 = vmatmul.f32.gmra.mxu0 %v669
    %v715 = vpop.f32.mrf.mxu0
    %v716 = vadd.f32 0.0, %v715
    %717 = vdwg.mxu0
    %718 = vmatpush.msra.mxu0 %v140
    %719 = vmatpush.msra.mxu0 %v137
    %720 = vmatpush.msra.mxu0 %v134
    %721 = vmatpush.msra.mxu0 %v131
    %722 = vmatpush.msra.mxu0 %v128
    %723 = vmatpush.msra.mxu0 %v125
    %724 = vmatpush.msra.mxu0 %v122
    %725 = vmatpush.msra.mxu0 %v119
    %726 = vmatpush.msra.mxu0 %v116
    %727 = vmatpush.msra.mxu0 %v113
    %728 = vmatpush.msra.mxu0 %v110
    %729 = vmatpush.msra.mxu0 %v107
    %730 = vmatpush.msra.mxu0 %v104
    %731 = vmatpush.msra.mxu0 %v101
    %732 = vmatpush.msra.mxu0 %v98
    %733 = vmatpush.msra.mxu0 %v95
    %734 = vmatmul.f32.gmra.mxu0 %v669
    %v735 = vpop.f32.mrf.mxu0
    %v736 = vadd.f32 0.0, %v735
    %737 = vdwg.mxu0
    %v738 = vadd.f32 %v225, %v696
    %v739 = vxor.u32 %v738, 2147483648
    %v740 = vmul.f32 %v739, 1.442695
    %v741 = vpow.pop %v740
    %v742 = vadd.f32 %v741, 1.0
    %v743 = vrcp.pop %v742
    %v744 = vmul.f32 %v742, %v743
    %v745 = vsub.f32 1.0, %v744
    %v746 = vmul.f32 %v743, %v745
    %v747 = vadd.f32 %v743, %v746
    %vm748 = vweird.f32 %v742
    %vm749 = vweird.f32 %v743
    %vm750 = vmor %vm748, %vm749
    %v751 = vsel %vm750, %v743, %v747
    %v752 = vand.u32 2147483647, %v742
    %vm753 = vcmp.eq.f32.partialorder %v752, 8.507059e+37
    %v754 = vand.u32 %v742, 2147483648
    %v755 = vor.u32 1.1754944e-38, %v754
    %v756 = vsel %vm753, %v755, %v751
    %v757 = vmul.f32 1.0, %v756
    %v758 = vadd.f32 %v266, %v716
    %v759 = vxor.u32 %v758, 2147483648
    %v760 = vmul.f32 %v759, 1.442695
    %v761 = vpow.pop %v760
    %v762 = vadd.f32 %v761, 1.0
    %v763 = vrcp.pop %v762
    %v764 = vmul.f32 %v762, %v763
    %v765 = vsub.f32 1.0, %v764
    %v766 = vmul.f32 %v763, %v765
    %v767 = vadd.f32 %v763, %v766
    %vm768 = vweird.f32 %v762
    %vm769 = vweird.f32 %v763
    %vm770 = vmor %vm768, %vm769
    %v771 = vsel %vm770, %v763, %v767
    %v772 = vand.u32 2147483647, %v762
    %vm773 = vcmp.eq.f32.partialorder %v772, 8.507059e+37
    %v774 = vand.u32 %v762, 2147483648
    %v775 = vor.u32 1.1754944e-38, %v774
    %v776 = vsel %vm773, %v775, %v771
    %v777 = vmul.f32 1.0, %v776
    %v778 = vadd.f32 %v736, %v425
    %v779 = vmul.f32 %v757, %v778
    %v780 = vadd.f32 %v307, %v779
    %v781 = vtanh.pop %v780
    %v782 = vsub.f32 1.0, %v777
    %v783 = vmul.f32 %v782, %v781
    %v784 = vmul.f32 %v777, %v669
    %v785 = vadd.f32 %v783, %v784
    %v786 = vmul.f32 %v785, %v436
    %787 = vadd.xlane.f32.xlu0 %v786
    %v788 = vpop.xlane.xlu0 %787
    %vm789 = vcmp.eq.s32.totalorder %v322, 3
    %v790 = vsel %vm789, 1, 0
    %vm791 = vcmp.eq.s32.totalorder %v790, 1
    %v792 = vsel %vm791, %v788, 0.0
    %v793 = vadd.f32 %v677, %v792
    %794 = vmatpush.msra.mxu0 %v138
    %795 = vmatpush.msra.mxu0 %v135
    %796 = vmatpush.msra.mxu0 %v132
    %797 = vmatpush.msra.mxu0 %v129
    %798 = vmatpush.msra.mxu0 %v126
    %799 = vmatpush.msra.mxu0 %v123
    %800 = vmatpush.msra.mxu0 %v120
    %801 = vmatpush.msra.mxu0 %v117
    %802 = vmatpush.msra.mxu0 %v114
    %803 = vmatpush.msra.mxu0 %v111
    %804 = vmatpush.msra.mxu0 %v108
    %805 = vmatpush.msra.mxu0 %v105
    %806 = vmatpush.msra.mxu0 %v102
    %807 = vmatpush.msra.mxu0 %v99
    %808 = vmatpush.msra.mxu0 %v96
    %809 = vmatpush.msra.mxu0 %v93
    %810 = vmatmul.f32.gmra.mxu0 %v785
    %v811 = vpop.f32.mrf.mxu0
    %v812 = vadd.f32 0.0, %v811
    %813 = vdwg.mxu0
    %814 = vmatpush.msra.mxu0 %v139
    %815 = vmatpush.msra.mxu0 %v136
    %816 = vmatpush.msra.mxu0 %v133
    %817 = vmatpush.msra.mxu0 %v130
    %818 = vmatpush.msra.mxu0 %v127
    %819 = vmatpush.msra.mxu0 %v124
    %820 = vmatpush.msra.mxu0 %v121
    %821 = vmatpush.msra.mxu0 %v118
    %822 = vmatpush.msra.mxu0 %v115
    %823 = vmatpush.msra.mxu0 %v112
    %824 = vmatpush.msra.mxu0 %v109
    %825 = vmatpush.msra.mxu0 %v106
    %826 = vmatpush.msra.mxu0 %v103
    %827 = vmatpush.msra.mxu0 %v100
    %828 = vmatpush.msra.mxu0 %v97
    %829 = vmatpush.msra.mxu0 %v94
    %830 = vmatmul.f32.gmra.mxu0 %v785
    %v831 = vpop.f32.mrf.mxu0
    %v832 = vadd.f32 0.0, %v831
    %833 = vdwg.mxu0
    %834 = vmatpush.msra.mxu0 %v140
    %835 = vmatpush.msra.mxu0 %v137
    %836 = vmatpush.msra.mxu0 %v134
    %837 = vmatpush.msra.mxu0 %v131
    %838 = vmatpush.msra.mxu0 %v128
    %839 = vmatpush.msra.mxu0 %v125
    %840 = vmatpush.msra.mxu0 %v122
    %841 = vmatpush.msra.mxu0 %v119
    %842 = vmatpush.msra.mxu0 %v116
    %843 = vmatpush.msra.mxu0 %v113
    %844 = vmatpush.msra.mxu0 %v110
    %845 = vmatpush.msra.mxu0 %v107
    %846 = vmatpush.msra.mxu0 %v104
    %847 = vmatpush.msra.mxu0 %v101
    %848 = vmatpush.msra.mxu0 %v98
    %849 = vmatpush.msra.mxu0 %v95
    %850 = vmatmul.f32.gmra.mxu0 %v785
    %v851 = vpop.f32.mrf.mxu0
    %v852 = vadd.f32 0.0, %v851
    %853 = vdwg.mxu0
    %v854 = vadd.f32 %v228, %v812
    %v855 = vxor.u32 %v854, 2147483648
    %v856 = vmul.f32 %v855, 1.442695
    %v857 = vpow.pop %v856
    %v858 = vadd.f32 %v857, 1.0
    %v859 = vrcp.pop %v858
    %v860 = vmul.f32 %v858, %v859
    %v861 = vsub.f32 1.0, %v860
    %v862 = vmul.f32 %v859, %v861
    %v863 = vadd.f32 %v859, %v862
    %vm864 = vweird.f32 %v858
    %vm865 = vweird.f32 %v859
    %vm866 = vmor %vm864, %vm865
    %v867 = vsel %vm866, %v859, %v863
    %v868 = vand.u32 2147483647, %v858
    %vm869 = vcmp.eq.f32.partialorder %v868, 8.507059e+37
    %v870 = vand.u32 %v858, 2147483648
    %v871 = vor.u32 1.1754944e-38, %v870
    %v872 = vsel %vm869, %v871, %v867
    %v873 = vmul.f32 1.0, %v872
    %v874 = vadd.f32 %v269, %v832
    %v875 = vxor.u32 %v874, 2147483648
    %v876 = vmul.f32 %v875, 1.442695
    %v877 = vpow.pop %v876
    %v878 = vadd.f32 %v877, 1.0
    %v879 = vrcp.pop %v878
    %v880 = vmul.f32 %v878, %v879
    %v881 = vsub.f32 1.0, %v880
    %v882 = vmul.f32 %v879, %v881
    %v883 = vadd.f32 %v879, %v882
    %vm884 = vweird.f32 %v878
    %vm885 = vweird.f32 %v879
    %vm886 = vmor %vm884, %vm885
    %v887 = vsel %vm886, %v879, %v883
    %v888 = vand.u32 2147483647, %v878
    %vm889 = vcmp.eq.f32.partialorder %v888, 8.507059e+37
    %v890 = vand.u32 %v878, 2147483648
    %v891 = vor.u32 1.1754944e-38, %v890
    %v892 = vsel %vm889, %v891, %v887
    %v893 = vmul.f32 1.0, %v892
    %v894 = vadd.f32 %v852, %v425
    %v895 = vmul.f32 %v873, %v894
    %v896 = vadd.f32 %v310, %v895
    %v897 = vtanh.pop %v896
    %v898 = vsub.f32 1.0, %v893
    %v899 = vmul.f32 %v898, %v897
    %v900 = vmul.f32 %v893, %v785
    %v901 = vadd.f32 %v899, %v900
    %v902 = vmul.f32 %v901, %v436
    %903 = vadd.xlane.f32.xlu0 %v902
    %v904 = vpop.xlane.xlu0 %903
    %vm905 = vcmp.eq.s32.totalorder %v322, 4
    %v906 = vsel %vm905, 1, 0
    %vm907 = vcmp.eq.s32.totalorder %v906, 1
    %v908 = vsel %vm907, %v904, 0.0
    %v909 = vadd.f32 %v793, %v908
    %910 = vmatpush.msra.mxu0 %v138
    %911 = vmatpush.msra.mxu0 %v135
    %912 = vmatpush.msra.mxu0 %v132
    %913 = vmatpush.msra.mxu0 %v129
    %914 = vmatpush.msra.mxu0 %v126
    %915 = vmatpush.msra.mxu0 %v123
    %916 = vmatpush.msra.mxu0 %v120
    %917 = vmatpush.msra.mxu0 %v117
    %918 = vmatpush.msra.mxu0 %v114
    %919 = vmatpush.msra.mxu0 %v111
    %920 = vmatpush.msra.mxu0 %v108
    %921 = vmatpush.msra.mxu0 %v105
    %922 = vmatpush.msra.mxu0 %v102
    %923 = vmatpush.msra.mxu0 %v99
    %924 = vmatpush.msra.mxu0 %v96
    %925 = vmatpush.msra.mxu0 %v93
    %926 = vmatmul.f32.gmra.mxu0 %v901
    %v927 = vpop.f32.mrf.mxu0
    %v928 = vadd.f32 0.0, %v927
    %929 = vdwg.mxu0
    %930 = vmatpush.msra.mxu0 %v139
    %931 = vmatpush.msra.mxu0 %v136
    %932 = vmatpush.msra.mxu0 %v133
    %933 = vmatpush.msra.mxu0 %v130
    %934 = vmatpush.msra.mxu0 %v127
    %935 = vmatpush.msra.mxu0 %v124
    %936 = vmatpush.msra.mxu0 %v121
    %937 = vmatpush.msra.mxu0 %v118
    %938 = vmatpush.msra.mxu0 %v115
    %939 = vmatpush.msra.mxu0 %v112
    %940 = vmatpush.msra.mxu0 %v109
    %941 = vmatpush.msra.mxu0 %v106
    %942 = vmatpush.msra.mxu0 %v103
    %943 = vmatpush.msra.mxu0 %v100
    %944 = vmatpush.msra.mxu0 %v97
    %945 = vmatpush.msra.mxu0 %v94
    %946 = vmatmul.f32.gmra.mxu0 %v901
    %v947 = vpop.f32.mrf.mxu0
    %v948 = vadd.f32 0.0, %v947
    %949 = vdwg.mxu0
    %950 = vmatpush.msra.mxu0 %v140
    %951 = vmatpush.msra.mxu0 %v137
    %952 = vmatpush.msra.mxu0 %v134
    %953 = vmatpush.msra.mxu0 %v131
    %954 = vmatpush.msra.mxu0 %v128
    %955 = vmatpush.msra.mxu0 %v125
    %956 = vmatpush.msra.mxu0 %v122
    %957 = vmatpush.msra.mxu0 %v119
    %958 = vmatpush.msra.mxu0 %v116
    %959 = vmatpush.msra.mxu0 %v113
    %960 = vmatpush.msra.mxu0 %v110
    %961 = vmatpush.msra.mxu0 %v107
    %962 = vmatpush.msra.mxu0 %v104
    %963 = vmatpush.msra.mxu0 %v101
    %964 = vmatpush.msra.mxu0 %v98
    %965 = vmatpush.msra.mxu0 %v95
    %966 = vmatmul.f32.gmra.mxu0 %v901
    %v967 = vpop.f32.mrf.mxu0
    %v968 = vadd.f32 0.0, %v967
    %969 = vdwg.mxu0
    %v970 = vadd.f32 %v231, %v928
    %v971 = vxor.u32 %v970, 2147483648
    %v972 = vmul.f32 %v971, 1.442695
    %v973 = vpow.pop %v972
    %v974 = vadd.f32 %v973, 1.0
    %v975 = vrcp.pop %v974
    %v976 = vmul.f32 %v974, %v975
    %v977 = vsub.f32 1.0, %v976
    %v978 = vmul.f32 %v975, %v977
    %v979 = vadd.f32 %v975, %v978
    %vm980 = vweird.f32 %v974
    %vm981 = vweird.f32 %v975
    %vm982 = vmor %vm980, %vm981
    %v983 = vsel %vm982, %v975, %v979
    %v984 = vand.u32 2147483647, %v974
    %vm985 = vcmp.eq.f32.partialorder %v984, 8.507059e+37
    %v986 = vand.u32 %v974, 2147483648
    %v987 = vor.u32 1.1754944e-38, %v986
    %v988 = vsel %vm985, %v987, %v983
    %v989 = vmul.f32 1.0, %v988
    %v990 = vadd.f32 %v272, %v948
    %v991 = vxor.u32 %v990, 2147483648
    %v992 = vmul.f32 %v991, 1.442695
    %v993 = vpow.pop %v992
    %v994 = vadd.f32 %v993, 1.0
    %v995 = vrcp.pop %v994
    %v996 = vmul.f32 %v994, %v995
    %v997 = vsub.f32 1.0, %v996
    %v998 = vmul.f32 %v995, %v997
    %v999 = vadd.f32 %v995, %v998
    %vm1000 = vweird.f32 %v994
    %vm1001 = vweird.f32 %v995
    %vm1002 = vmor %vm1000, %vm1001
    %v1003 = vsel %vm1002, %v995, %v999
    %v1004 = vand.u32 2147483647, %v994
    %vm1005 = vcmp.eq.f32.partialorder %v1004, 8.507059e+37
    %v1006 = vand.u32 %v994, 2147483648
    %v1007 = vor.u32 1.1754944e-38, %v1006
    %v1008 = vsel %vm1005, %v1007, %v1003
    %v1009 = vmul.f32 1.0, %v1008
    %v1010 = vadd.f32 %v968, %v425
    %v1011 = vmul.f32 %v989, %v1010
    %v1012 = vadd.f32 %v313, %v1011
    %v1013 = vtanh.pop %v1012
    %v1014 = vsub.f32 1.0, %v1009
    %v1015 = vmul.f32 %v1014, %v1013
    %v1016 = vmul.f32 %v1009, %v901
    %v1017 = vadd.f32 %v1015, %v1016
    %v1018 = vmul.f32 %v1017, %v436
    %1019 = vadd.xlane.f32.xlu0 %v1018
    %v1020 = vpop.xlane.xlu0 %1019
    %vm1021 = vcmp.eq.s32.totalorder %v322, 5
    %v1022 = vsel %vm1021, 1, 0
    %vm1023 = vcmp.eq.s32.totalorder %v1022, 1
    %v1024 = vsel %vm1023, %v1020, 0.0
    %v1025 = vadd.f32 %v909, %v1024
    %1026 = vmatpush.msra.mxu0 %v138
    %1027 = vmatpush.msra.mxu0 %v135
    %1028 = vmatpush.msra.mxu0 %v132
    %1029 = vmatpush.msra.mxu0 %v129
    %1030 = vmatpush.msra.mxu0 %v126
    %1031 = vmatpush.msra.mxu0 %v123
    %1032 = vmatpush.msra.mxu0 %v120
    %1033 = vmatpush.msra.mxu0 %v117
    %1034 = vmatpush.msra.mxu0 %v114
    %1035 = vmatpush.msra.mxu0 %v111
    %1036 = vmatpush.msra.mxu0 %v108
    %1037 = vmatpush.msra.mxu0 %v105
    %1038 = vmatpush.msra.mxu0 %v102
    %1039 = vmatpush.msra.mxu0 %v99
    %1040 = vmatpush.msra.mxu0 %v96
    %1041 = vmatpush.msra.mxu0 %v93
    %1042 = vmatmul.f32.gmra.mxu0 %v1017
    %v1043 = vpop.f32.mrf.mxu0
    %v1044 = vadd.f32 0.0, %v1043
    %1045 = vdwg.mxu0
    %1046 = vmatpush.msra.mxu0 %v139
    %1047 = vmatpush.msra.mxu0 %v136
    %1048 = vmatpush.msra.mxu0 %v133
    %1049 = vmatpush.msra.mxu0 %v130
    %1050 = vmatpush.msra.mxu0 %v127
    %1051 = vmatpush.msra.mxu0 %v124
    %1052 = vmatpush.msra.mxu0 %v121
    %1053 = vmatpush.msra.mxu0 %v118
    %1054 = vmatpush.msra.mxu0 %v115
    %1055 = vmatpush.msra.mxu0 %v112
    %1056 = vmatpush.msra.mxu0 %v109
    %1057 = vmatpush.msra.mxu0 %v106
    %1058 = vmatpush.msra.mxu0 %v103
    %1059 = vmatpush.msra.mxu0 %v100
    %1060 = vmatpush.msra.mxu0 %v97
    %1061 = vmatpush.msra.mxu0 %v94
    %1062 = vmatmul.f32.gmra.mxu0 %v1017
    %v1063 = vpop.f32.mrf.mxu0
    %v1064 = vadd.f32 0.0, %v1063
    %1065 = vdwg.mxu0
    %1066 = vmatpush.msra.mxu0 %v140
    %1067 = vmatpush.msra.mxu0 %v137
    %1068 = vmatpush.msra.mxu0 %v134
    %1069 = vmatpush.msra.mxu0 %v131
    %1070 = vmatpush.msra.mxu0 %v128
    %1071 = vmatpush.msra.mxu0 %v125
    %1072 = vmatpush.msra.mxu0 %v122
    %1073 = vmatpush.msra.mxu0 %v119
    %1074 = vmatpush.msra.mxu0 %v116
    %1075 = vmatpush.msra.mxu0 %v113
    %1076 = vmatpush.msra.mxu0 %v110
    %1077 = vmatpush.msra.mxu0 %v107
    %1078 = vmatpush.msra.mxu0 %v104
    %1079 = vmatpush.msra.mxu0 %v101
    %1080 = vmatpush.msra.mxu0 %v98
    %1081 = vmatpush.msra.mxu0 %v95
    %1082 = vmatmul.f32.gmra.mxu0 %v1017
    %v1083 = vpop.f32.mrf.mxu0
    %v1084 = vadd.f32 0.0, %v1083
    %1085 = vdwg.mxu0
    %v1086 = vadd.f32 %v234, %v1044
    %v1087 = vxor.u32 %v1086, 2147483648
    %v1088 = vmul.f32 %v1087, 1.442695
    %v1089 = vpow.pop %v1088
    %v1090 = vadd.f32 %v1089, 1.0
    %v1091 = vrcp.pop %v1090
    %v1092 = vmul.f32 %v1090, %v1091
    %v1093 = vsub.f32 1.0, %v1092
    %v1094 = vmul.f32 %v1091, %v1093
    %v1095 = vadd.f32 %v1091, %v1094
    %vm1096 = vweird.f32 %v1090
    %vm1097 = vweird.f32 %v1091
    %vm1098 = vmor %vm1096, %vm1097
    %v1099 = vsel %vm1098, %v1091, %v1095
    %v1100 = vand.u32 2147483647, %v1090
    %vm1101 = vcmp.eq.f32.partialorder %v1100, 8.507059e+37
    %v1102 = vand.u32 %v1090, 2147483648
    %v1103 = vor.u32 1.1754944e-38, %v1102
    %v1104 = vsel %vm1101, %v1103, %v1099
    %v1105 = vmul.f32 1.0, %v1104
    %v1106 = vadd.f32 %v275, %v1064
    %v1107 = vxor.u32 %v1106, 2147483648
    %v1108 = vmul.f32 %v1107, 1.442695
    %v1109 = vpow.pop %v1108
    %v1110 = vadd.f32 %v1109, 1.0
    %v1111 = vrcp.pop %v1110
    %v1112 = vmul.f32 %v1110, %v1111
    %v1113 = vsub.f32 1.0, %v1112
    %v1114 = vmul.f32 %v1111, %v1113
    %v1115 = vadd.f32 %v1111, %v1114
    %vm1116 = vweird.f32 %v1110
    %vm1117 = vweird.f32 %v1111
    %vm1118 = vmor %vm1116, %vm1117
    %v1119 = vsel %vm1118, %v1111, %v1115
    %v1120 = vand.u32 2147483647, %v1110
    %vm1121 = vcmp.eq.f32.partialorder %v1120, 8.507059e+37
    %v1122 = vand.u32 %v1110, 2147483648
    %v1123 = vor.u32 1.1754944e-38, %v1122
    %v1124 = vsel %vm1121, %v1123, %v1119
    %v1125 = vmul.f32 1.0, %v1124
    %v1126 = vadd.f32 %v1084, %v425
    %v1127 = vmul.f32 %v1105, %v1126
    %v1128 = vadd.f32 %v316, %v1127
    %v1129 = vtanh.pop %v1128
    %v1130 = vsub.f32 1.0, %v1125
    %v1131 = vmul.f32 %v1130, %v1129
    %v1132 = vmul.f32 %v1125, %v1017
    %v1133 = vadd.f32 %v1131, %v1132
    %v1134 = vmul.f32 %v1133, %v436
    %1135 = vadd.xlane.f32.xlu0 %v1134
    %v1136 = vpop.xlane.xlu0 %1135
    %vm1137 = vcmp.eq.s32.totalorder %v322, 6
    %v1138 = vsel %vm1137, 1, 0
    %vm1139 = vcmp.eq.s32.totalorder %v1138, 1
    %v1140 = vsel %vm1139, %v1136, 0.0
    %v1141 = vadd.f32 %v1025, %v1140
    %1142 = vmatpush.msra.mxu0 %v138
    %1143 = vmatpush.msra.mxu0 %v135
    %1144 = vmatpush.msra.mxu0 %v132
    %1145 = vmatpush.msra.mxu0 %v129
    %1146 = vmatpush.msra.mxu0 %v126
    %1147 = vmatpush.msra.mxu0 %v123
    %1148 = vmatpush.msra.mxu0 %v120
    %1149 = vmatpush.msra.mxu0 %v117
    %1150 = vmatpush.msra.mxu0 %v114
    %1151 = vmatpush.msra.mxu0 %v111
    %1152 = vmatpush.msra.mxu0 %v108
    %1153 = vmatpush.msra.mxu0 %v105
    %1154 = vmatpush.msra.mxu0 %v102
    %1155 = vmatpush.msra.mxu0 %v99
    %1156 = vmatpush.msra.mxu0 %v96
    %1157 = vmatpush.msra.mxu0 %v93
    %1158 = vmatmul.f32.gmra.mxu0 %v1133
    %v1159 = vpop.f32.mrf.mxu0
    %v1160 = vadd.f32 0.0, %v1159
    %1161 = vdwg.mxu0
    %1162 = vmatpush.msra.mxu0 %v139
    %1163 = vmatpush.msra.mxu0 %v136
    %1164 = vmatpush.msra.mxu0 %v133
    %1165 = vmatpush.msra.mxu0 %v130
    %1166 = vmatpush.msra.mxu0 %v127
    %1167 = vmatpush.msra.mxu0 %v124
    %1168 = vmatpush.msra.mxu0 %v121
    %1169 = vmatpush.msra.mxu0 %v118
    %1170 = vmatpush.msra.mxu0 %v115
    %1171 = vmatpush.msra.mxu0 %v112
    %1172 = vmatpush.msra.mxu0 %v109
    %1173 = vmatpush.msra.mxu0 %v106
    %1174 = vmatpush.msra.mxu0 %v103
    %1175 = vmatpush.msra.mxu0 %v100
    %1176 = vmatpush.msra.mxu0 %v97
    %1177 = vmatpush.msra.mxu0 %v94
    %1178 = vmatmul.f32.gmra.mxu0 %v1133
    %v1179 = vpop.f32.mrf.mxu0
    %v1180 = vadd.f32 0.0, %v1179
    %1181 = vdwg.mxu0
    %1182 = vmatpush.msra.mxu0 %v140
    %1183 = vmatpush.msra.mxu0 %v137
    %1184 = vmatpush.msra.mxu0 %v134
    %1185 = vmatpush.msra.mxu0 %v131
    %1186 = vmatpush.msra.mxu0 %v128
    %1187 = vmatpush.msra.mxu0 %v125
    %1188 = vmatpush.msra.mxu0 %v122
    %1189 = vmatpush.msra.mxu0 %v119
    %1190 = vmatpush.msra.mxu0 %v116
    %1191 = vmatpush.msra.mxu0 %v113
    %1192 = vmatpush.msra.mxu0 %v110
    %1193 = vmatpush.msra.mxu0 %v107
    %1194 = vmatpush.msra.mxu0 %v104
    %1195 = vmatpush.msra.mxu0 %v101
    %1196 = vmatpush.msra.mxu0 %v98
    %1197 = vmatpush.msra.mxu0 %v95
    %1198 = vmatmul.f32.gmra.mxu0 %v1133
    %v1199 = vpop.f32.mrf.mxu0
    %v1200 = vadd.f32 0.0, %v1199
    %1201 = vdwg.mxu0
    %v1202 = vadd.f32 %v237, %v1160
    %v1203 = vxor.u32 %v1202, 2147483648
    %v1204 = vmul.f32 %v1203, 1.442695
    %v1205 = vpow.pop %v1204
    %v1206 = vadd.f32 %v1205, 1.0
    %v1207 = vrcp.pop %v1206
    %v1208 = vmul.f32 %v1206, %v1207
    %v1209 = vsub.f32 1.0, %v1208
    %v1210 = vmul.f32 %v1207, %v1209
    %v1211 = vadd.f32 %v1207, %v1210
    %vm1212 = vweird.f32 %v1206
    %vm1213 = vweird.f32 %v1207
    %vm1214 = vmor %vm1212, %vm1213
    %v1215 = vsel %vm1214, %v1207, %v1211
    %v1216 = vand.u32 2147483647, %v1206
    %vm1217 = vcmp.eq.f32.partialorder %v1216, 8.507059e+37
    %v1218 = vand.u32 %v1206, 2147483648
    %v1219 = vor.u32 1.1754944e-38, %v1218
    %v1220 = vsel %vm1217, %v1219, %v1215
    %v1221 = vmul.f32 1.0, %v1220
    %v1222 = vadd.f32 %v278, %v1180
    %v1223 = vxor.u32 %v1222, 2147483648
    %v1224 = vmul.f32 %v1223, 1.442695
    %v1225 = vpow.pop %v1224
    %v1226 = vadd.f32 %v1225, 1.0
    %v1227 = vrcp.pop %v1226
    %v1228 = vmul.f32 %v1226, %v1227
    %v1229 = vsub.f32 1.0, %v1228
    %v1230 = vmul.f32 %v1227, %v1229
    %v1231 = vadd.f32 %v1227, %v1230
    %vm1232 = vweird.f32 %v1226
    %vm1233 = vweird.f32 %v1227
    %vm1234 = vmor %vm1232, %vm1233
    %v1235 = vsel %vm1234, %v1227, %v1231
    %v1236 = vand.u32 2147483647, %v1226
    %vm1237 = vcmp.eq.f32.partialorder %v1236, 8.507059e+37
    %v1238 = vand.u32 %v1226, 2147483648
    %v1239 = vor.u32 1.1754944e-38, %v1238
    %v1240 = vsel %vm1237, %v1239, %v1235
    %v1241 = vmul.f32 1.0, %v1240
    %v1242 = vadd.f32 %v1200, %v425
    %v1243 = vmul.f32 %v1221, %v1242
    %v1244 = vadd.f32 %v319, %v1243
    %v1245 = vtanh.pop %v1244
    %v1246 = vsub.f32 1.0, %v1241
    %v1247 = vmul.f32 %v1246, %v1245
    %v1248 = vmul.f32 %v1241, %v1133
    %v1249 = vadd.f32 %v1247, %v1248
    %v1250 = vmul.f32 %v1249, %v436
    %1251 = vadd.xlane.f32.xlu0 %v1250
    %v1252 = vpop.xlane.xlu0 %1251
    %vm1253 = vcmp.eq.s32.totalorder %v322, 7
    %v1254 = vsel %vm1253, 1, 0
    %vm1255 = vcmp.eq.s32.totalorder %v1254, 1
    %v1256 = vsel %vm1255, %v1252, 0.0
    %v1257 = vadd.f32 %v1141, %v1256
    %v1258 = vstv %s144
    %v1259 = vadd.f32 %v1257, %v1258
    %vm1260 = vcmask 64512
    %1261 = vst.msk [vmem:[#allocation11] sm:$0xff] %vm1260, %v1259
    // Predicated region
    $region50: #{tpu_custom_call.1} parent=1 // pred_check
      _
    $region51: #{tpu_custom_call.1} parent=1 // pred_check_branch
      %1263 = sbr.rel (0) target = $region53
    $region52: #{tpu_custom_call.1} parent=1 // pred_region
      %1265 = vsyncadd [#allocation5], 0
      %s1267 = sshll.u32 [#allocation11], 4
      %s1268 = int_to_ptr.vmem [resolvable:$true] %s1267
      %s1269 = sshll.u32 %s8, 4
      %s1270 = int_to_ptr.hbm [resolvable:$true] %s1269
      %1272 = dma.vmem_to_hbm [thread:$0]  %s1268, 128, %s1270, [#allocation5]
    $region53: #{tpu_custom_call.1} parent=1 // pred_fallthru
      _
    // Predicated region
    $region54: #{tpu_custom_call.1} parent=1 // pred_check
      _
    $region55: #{tpu_custom_call.1} parent=1 // pred_check_branch
      %1274 = sbr.rel (0) target = $region57
    $region56: #{tpu_custom_call.1} parent=1 // pred_region
      %1276 = dma.done [#allocation5], 128
    $region57: #{tpu_custom_call.1} parent=1 // pred_fallthru
      _
    %1277 = vsyncpa [#allocation4], 1
    %1278 = vsyncpa [#allocation7], 1
    %1279 = vsyncpa [#allocation10], 1
    %1280 = vsyncpa [#allocation5], 1

// kernel: tpu_custom_call.1
$region0: #{tpu_custom_call.1}
  #allocation0 [shape = 'u32[]', space=smem, size = 0x4, offset = 0x4, fixed_abs, tag = 'smem constant byte address 0x4 - core index']
  #allocation1 [shape = 'u32[72,128]{1,0:T(1,128)}', space=vmem, size = 0x9000, scoped, tag = 'internal scratch']
  #allocation2 [shape = 'f32[1,1]{1,0:T(1,128)S(1)}', space=vmem, size = 0x200, scoped, tag = 'scoped memory for tpu_custom_call.1']
  %s0 = inlined_call_operand.hbm [shape: f32[8,8,32], index: 0, kind: input, shape index: {}]
  %s1 = inlined_call_operand.hbm [shape: f32[8,128], index: 1, kind: input, shape index: {}]
  %s2 = inlined_call_operand.hbm [shape: f32[32,384], index: 2, kind: input, shape index: {}]
  %s3 = inlined_call_operand.hbm [shape: f32[128,384], index: 3, kind: input, shape index: {}]
  %s4 = inlined_call_operand.vmem [shape: f32[1,384], index: 4, kind: input, shape index: {}]
  %s5 = inlined_call_operand.vmem [shape: f32[1,128], index: 5, kind: input, shape index: {}]
  %s6 = inlined_call_operand.vmem [shape: f32[1,128], index: 6, kind: input, shape index: {}]
  %s7 = inlined_call_operand.<no memory space> [shape: f32[1,1], index: 7, kind: input, shape index: {}]
  %s8 = inlined_call_operand.hbm [shape: f32[8,8], index: 8, kind: output, shape index: {}]
  %s9 = sld [smem:[#allocation0]]
  $region58: #{tpu_custom_call.1} parent=0
    _
  %s11 = ssub.s32 1, %s9
  %s12 = scalar_select 0, %s11, %s9
  %v13 = vstv %s7
  %14 = vst [vmem:[#allocation2] sm:$0x1] %v13
  $region1: #{tpu_custom_call.1} parent=0
    #allocation3 [shape = 'u8[32768]{0}', space=vmem, size = 0x8000, scoped, tag = 'input window, operand 0, single buffered']
    #allocation4 [shape = 's32[1]{0}', space=sflag, size = 0x4, scoped, tag = 'scoped memory for tpu_custom_call.1']
    #allocation5 [shape = 's32[1]{0}', space=sflag, size = 0x4, scoped, tag = 'scoped memory for tpu_custom_call.1']
    #allocation6 [shape = 'u8[4096]{0}', space=vmem, size = 0x1000, scoped, tag = 'input window, operand 1, single buffered']
    #allocation7 [shape = 's32[1]{0}', space=sflag, size = 0x4, scoped, tag = 'scoped memory for tpu_custom_call.1']
    #allocation8 [shape = 'u8[49152]{0}', space=vmem, size = 0xc000, scoped, tag = 'input window, operand 2, single buffered']
    #allocation9 [shape = 'u8[196608]{0}', space=vmem, size = 0x30000, scoped, tag = 'input window, operand 3, single buffered']
    #allocation10 [shape = 's32[1]{0}', space=sflag, size = 0x4, scoped, tag = 'scoped memory for tpu_custom_call.1']
    #allocation11 [shape = 'u8[4096]{0}', space=vmem, size = 0x1000, scoped, tag = 'output window, operand 0, single buffered']
    %15 = vsyncpa [#allocation4], 0
    %16 = vsyncpa [#allocation7], 0
    %17 = vsyncpa [#allocation10], 0
    %18 = vsyncpa [#allocation5], 0
    // Predicated region
    $region2: #{tpu_custom_call.1} parent=1 // pred_check
      _
    $region3: #{tpu_custom_call.1} parent=1 // pred_check_branch
      %20 = sbr.rel (0) target = $region5
    $region4: #{tpu_custom_call.1} parent=1 // pred_region
      %22 = vsyncadd [#allocation4], 0
      %s23 = sshll.u32 %s0, 4
      %s24 = int_to_ptr.hbm [resolvable:$true] %s23
      %s25 = sshll.u32 [#allocation3], 4
      %s26 = int_to_ptr.vmem [resolvable:$true] %s25
      %31 = dma.hbm_to_vmem [thread:$0]  %s24, 1024, %s26, [#allocation4], 128, 128, 8
    $region5: #{tpu_custom_call.1} parent=1 // pred_fallthru
      _
    // Predicated region
    $region6: #{tpu_custom_call.1} parent=1 // pred_check
      _
    $region7: #{tpu_custom_call.1} parent=1 // pred_check_branch
      %33 = sbr.rel (0) target = $region9
    $region8: #{tpu_custom_call.1} parent=1 // pred_region
      %35 = vsyncadd [#allocation7], 0
      %s37 = sshll.u32 %s1, 4
      %s38 = int_to_ptr.hbm [resolvable:$true] %s37
      %s39 = sshll.u32 [#allocation6], 4
      %s40 = int_to_ptr.vmem [resolvable:$true] %s39
      %42 = dma.hbm_to_vmem [thread:$0]  %s38, 128, %s40, [#allocation7]
    $region9: #{tpu_custom_call.1} parent=1 // pred_fallthru
      _
    // Predicated region
    $region10: #{tpu_custom_call.1} parent=1 // pred_check
      _
    $region11: #{tpu_custom_call.1} parent=1 // pred_check_branch
      %44 = sbr.rel (0) target = $region13
    $region12: #{tpu_custom_call.1} parent=1 // pred_region
      %46 = vsyncadd [#allocation7], 0
      %s47 = sshll.u32 %s2, 4
      %s48 = int_to_ptr.hbm [resolvable:$true] %s47
      %s49 = sshll.u32 [#allocation8], 4
      %s50 = int_to_ptr.vmem [resolvable:$true] %s49
      %55 = dma.hbm_to_vmem [thread:$0]  %s48, 1536, %s50, [#allocation7], 384, 384, 24
    $region13: #{tpu_custom_call.1} parent=1 // pred_fallthru
      _
    // Predicated region
    $region14: #{tpu_custom_call.1} parent=1 // pred_check
      _
    $region15: #{tpu_custom_call.1} parent=1 // pred_check_branch
      %57 = sbr.rel (0) target = $region17
    $region16: #{tpu_custom_call.1} parent=1 // pred_region
      %59 = vsyncadd [#allocation10], 0
      %s60 = sshll.u32 %s3, 4
      %s61 = int_to_ptr.hbm [resolvable:$true] %s60
      %s62 = sshll.u32 [#allocation9], 4
      %s63 = int_to_ptr.vmem [resolvable:$true] %s62
      %68 = dma.hbm_to_vmem [thread:$0]  %s61, 6144, %s63, [#allocation10], 384, 384, 24
    $region17: #{tpu_custom_call.1} parent=1 // pred_fallthru
      _
    // Predicated region
    $region18: #{tpu_custom_call.1} parent=1 // pred_check
      _
    $region19: #{tpu_custom_call.1} parent=1 // pred_check_branch
      %70 = sbr.rel (0) target = $region21
    $region20: #{tpu_custom_call.1} parent=1 // pred_region
      _
    $region21: #{tpu_custom_call.1} parent=1 // pred_fallthru
      _
    // Predicated region
    $region22: #{tpu_custom_call.1} parent=1 // pred_check
      _
    $region23: #{tpu_custom_call.1} parent=1 // pred_check_branch
      %72 = sbr.rel (0) target = $region25
    $region24: #{tpu_custom_call.1} parent=1 // pred_region
      _
    $region25: #{tpu_custom_call.1} parent=1 // pred_fallthru
      _
    // Predicated region
    $region26: #{tpu_custom_call.1} parent=1 // pred_check
      _
    $region27: #{tpu_custom_call.1} parent=1 // pred_check_branch
      %74 = sbr.rel (0) target = $region29
    $region28: #{tpu_custom_call.1} parent=1 // pred_region
      _
    $region29: #{tpu_custom_call.1} parent=1 // pred_fallthru
      _
    // Predicated region
    $region30: #{tpu_custom_call.1} parent=1 // pred_check
      _
    $region31: #{tpu_custom_call.1} parent=1 // pred_check_branch
      %76 = sbr.rel (0) target = $region33
    $region32: #{tpu_custom_call.1} parent=1 // pred_region
      _
    $region33: #{tpu_custom_call.1} parent=1 // pred_fallthru
      _
    // Predicated region
    $region34: #{tpu_custom_call.1} parent=1 // pred_check
      _
    $region35: #{tpu_custom_call.1} parent=1 // pred_check_branch
      %78 = sbr.rel (0) target = $region37
    $region36: #{tpu_custom_call.1} parent=1 // pred_region
      %80 = dma.done [#allocation4], 1024
    $region37: #{tpu_custom_call.1} parent=1 // pred_fallthru
      _
    // Predicated region
    $region38: #{tpu_custom_call.1} parent=1 // pred_check
      _
    $region39: #{tpu_custom_call.1} parent=1 // pred_check_branch
      %82 = sbr.rel (0) target = $region41
    $region40: #{tpu_custom_call.1} parent=1 // pred_region
      %84 = dma.done [#allocation7], 128
    $region41: #{tpu_custom_call.1} parent=1 // pred_fallthru
      _
    // Predicated region
    $region42: #{tpu_custom_call.1} parent=1 // pred_check
      _
    $region43: #{tpu_custom_call.1} parent=1 // pred_check_branch
      %86 = sbr.rel (0) target = $region45
    $region44: #{tpu_custom_call.1} parent=1 // pred_region
      %88 = dma.done [#allocation7], 1536
    $region45: #{tpu_custom_call.1} parent=1 // pred_fallthru
      _
    // Predicated region
    $region46: #{tpu_custom_call.1} parent=1 // pred_check
      _
    $region47: #{tpu_custom_call.1} parent=1 // pred_check_branch
      %90 = sbr.rel (0) target = $region49
    $region48: #{tpu_custom_call.1} parent=1 // pred_region
      %92 = dma.done [#allocation10], 6144
    $region49: #{tpu_custom_call.1} parent=1 // pred_fallthru
      _
    %v93 = vld [vmem:[#allocation9] sm:$0xff]
    %v94 = vld [vmem:[#allocation9 + $0x8] sm:$0xff]
    %v95 = vld [vmem:[#allocation9 + $0x10] sm:$0xff]
    %v96 = vld [vmem:[#allocation9 + $0x18] sm:$0xff]
    %v97 = vld [vmem:[#allocation9 + $0x20] sm:$0xff]
    %v98 = vld [vmem:[#allocation9 + $0x28] sm:$0xff]
    %v99 = vld [vmem:[#allocation9 + $0x30] sm:$0xff]
    %v100 = vld [vmem:[#allocation9 + $0x38] sm:$0xff]
    %v101 = vld [vmem:[#allocation9 + $0x40] sm:$0xff]
    %v102 = vld [vmem:[#allocation9 + $0x48] sm:$0xff]
    %v103 = vld [vmem:[#allocation9 + $0x50] sm:$0xff]
    %v104 = vld [vmem:[#allocation9 + $0x58] sm:$0xff]
    %v105 = vld [vmem:[#allocation9 + $0x60] sm:$0xff]
    %v106 = vld [vmem:[#allocation9 + $0x68] sm:$0xff]
    %v107 = vld [vmem:[#allocation9 + $0x70] sm:$0xff]
    %v108 = vld [vmem:[#allocation9 + $0x78] sm:$0xff]
    %v109 = vld [vmem:[#allocation9 + $0x80] sm:$0xff]
    %v110 = vld [vmem:[#allocation9 + $0x88] sm:$0xff]
    %v111 = vld [vmem:[#allocation9 + $0x90] sm:$0xff]
    %v112 = vld [vmem:[#allocation9 + $0x98] sm:$0xff]
    %v113 = vld [vmem:[#allocation9 + $0xa0] sm:$0xff]
    %v114 = vld [vmem:[#allocation9 + $0xa8] sm:$0xff]
    %v115 = vld [vmem:[#allocation9 + $0xb0] sm:$0xff]
    %v116 = vld [vmem:[#allocation9 + $0xb8] sm:$0xff]
    %v117 = vld [vmem:[#allocation9 + $0xc0] sm:$0xff]
    %v118 = vld [vmem:[#allocation9 + $0xc8] sm:$0xff]
    %v119 = vld [vmem:[#allocation9 + $0xd0] sm:$0xff]
    %v120 = vld [vmem:[#allocation9 + $0xd8] sm:$0xff]
    %v121 = vld [vmem:[#allocation9 + $0xe0] sm:$0xff]
    %v122 = vld [vmem:[#allocation9 + $0xe8] sm:$0xff]
    %v123 = vld [vmem:[#allocation9 + $0xf0] sm:$0xff]
    %v124 = vld [vmem:[#allocation9 + $0xf8] sm:$0xff]
    %v125 = vld [vmem:[#allocation9 + $0x100] sm:$0xff]
    %v126 = vld [vmem:[#allocation9 + $0x108] sm:$0xff]
    %v127 = vld [vmem:[#allocation9 + $0x110] sm:$0xff]
    %v128 = vld [vmem:[#allocation9 + $0x118] sm:$0xff]
    %v129 = vld [vmem:[#allocation9 + $0x120] sm:$0xff]
    %v130 = vld [vmem:[#allocation9 + $0x128] sm:$0xff]
    %v131 = vld [vmem:[#allocation9 + $0x130] sm:$0xff]
    %v132 = vld [vmem:[#allocation9 + $0x138] sm:$0xff]
    %v133 = vld [vmem:[#allocation9 + $0x140] sm:$0xff]
    %v134 = vld [vmem:[#allocation9 + $0x148] sm:$0xff]
    %v135 = vld [vmem:[#allocation9 + $0x150] sm:$0xff]
    %v136 = vld [vmem:[#allocation9 + $0x158] sm:$0xff]
    %v137 = vld [vmem:[#allocation9 + $0x160] sm:$0xff]
    %v138 = vld [vmem:[#allocation9 + $0x168] sm:$0xff]
    %v139 = vld [vmem:[#allocation9 + $0x170] sm:$0xff]
    %v140 = vld [vmem:[#allocation9 + $0x178] sm:$0xff]
    %v141 = vld [vmem:[%s5] sm:$0x1]
    %v142 = vld [vmem:[%s6] sm:$0x1]
    %v143 = vld [vmem:[#allocation2] sm:$0x1]
    %s144 = vtos %v143
    %v145 = vld [vmem:[#allocation3] sm:$0xff]
    %v146 = vld [vmem:[#allocation3 + $0x8] sm:$0xff]
    %v147 = vld [vmem:[#allocation3 + $0x10] sm:$0xff]
    %v148 = vld [vmem:[#allocation3 + $0x18] sm:$0xff]
    %v149 = vld [vmem:[#allocation3 + $0x20] sm:$0xff]
    %v150 = vld [vmem:[#allocation3 + $0x28] sm:$0xff]
    %v151 = vld [vmem:[#allocation3 + $0x30] sm:$0xff]
    %v152 = vld [vmem:[#allocation3 + $0x38] sm:$0xff]
    %v153 = vld [vmem:[#allocation8] sm:$0xff]
    %v154 = vld [vmem:[#allocation8 + $0x8] sm:$0xff]
    %v155 = vld [vmem:[#allocation8 + $0x10] sm:$0xff]
    %v156 = vld [vmem:[#allocation8 + $0x18] sm:$0xff]
    %v157 = vld [vmem:[#allocation8 + $0x20] sm:$0xff]
    %v158 = vld [vmem:[#allocation8 + $0x28] sm:$0xff]
    %v159 = vld [vmem:[#allocation8 + $0x30] sm:$0xff]
    %v160 = vld [vmem:[#allocation8 + $0x38] sm:$0xff]
    %v161 = vld [vmem:[#allocation8 + $0x40] sm:$0xff]
    %v162 = vld [vmem:[#allocation8 + $0x48] sm:$0xff]
    %v163 = vld [vmem:[#allocation8 + $0x50] sm:$0xff]
    %v164 = vld [vmem:[#allocation8 + $0x58] sm:$0xff]
    %v165 = vld [vmem:[%s4] sm:$0x7]
    %v167 = vperm.slane %v165, 0
    %v168 = vperm.slane %v165, 1
    %v169 = vperm.slane %v165, 2
    %vm173 = vcmask 261120
    %v175 = vsel %vm173, %v145, 0
    %v178 = vsel %vm173, %v146, 0
    %v181 = vsel %vm173, %v147, 0
    %v184 = vsel %vm173, %v148, 0
    %v187 = vsel %vm173, %v149, 0
    %v190 = vsel %vm173, %v150, 0
    %v193 = vsel %vm173, %v151, 0
    %v196 = vsel %vm173, %v152, 0
    %198 = vmatpush.msra.mxu0 0.0
    %199 = vmatpush.msra.mxu0 0.0
    %200 = vmatpush.msra.mxu0 0.0
    %201 = vmatpush.msra.mxu0 0.0
    %202 = vmatpush.msra.mxu0 0.0
    %203 = vmatpush.msra.mxu0 0.0
    %204 = vmatpush.msra.mxu0 0.0
    %205 = vmatpush.msra.mxu0 0.0
    %206 = vmatpush.msra.mxu0 0.0
    %207 = vmatpush.msra.mxu0 0.0
    %208 = vmatpush.msra.mxu0 0.0
    %209 = vmatpush.msra.mxu0 0.0
    %210 = vmatpush.msra.mxu0 %v162
    %211 = vmatpush.msra.mxu0 %v159
    %212 = vmatpush.msra.mxu0 %v156
    %213 = vmatpush.msra.mxu0 %v153
    %214 = vmatmul.f32.gmra.mxu0 %v175
    %v215 = vpop.f32.mrf.mxu0
    %v216 = vadd.f32 %v167, %v215
    %217 = vmatmul.f32.gmra.mxu0 %v178
    %v218 = vpop.f32.mrf.mxu0
    %v219 = vadd.f32 %v167, %v218
    %220 = vmatmul.f32.gmra.mxu0 %v181
    %v221 = vpop.f32.mrf.mxu0
    %v222 = vadd.f32 %v167, %v221
    %223 = vmatmul.f32.gmra.mxu0 %v184
    %v224 = vpop.f32.mrf.mxu0
    %v225 = vadd.f32 %v167, %v224
    %226 = vmatmul.f32.gmra.mxu0 %v187
    %v227 = vpop.f32.mrf.mxu0
    %v228 = vadd.f32 %v167, %v227
    %229 = vmatmul.f32.gmra.mxu0 %v190
    %v230 = vpop.f32.mrf.mxu0
    %v231 = vadd.f32 %v167, %v230
    %232 = vmatmul.f32.gmra.mxu0 %v193
    %v233 = vpop.f32.mrf.mxu0
    %v234 = vadd.f32 %v167, %v233
    %235 = vmatmul.f32.gmra.mxu0 %v196
    %v236 = vpop.f32.mrf.mxu0
    %v237 = vadd.f32 %v167, %v236
    %238 = vdwg.mxu0
    %239 = vmatpush.msra.mxu0 0.0
    %240 = vmatpush.msra.mxu0 0.0
    %241 = vmatpush.msra.mxu0 0.0
    %242 = vmatpush.msra.mxu0 0.0
    %243 = vmatpush.msra.mxu0 0.0
    %244 = vmatpush.msra.mxu0 0.0
    %245 = vmatpush.msra.mxu0 0.0
    %246 = vmatpush.msra.mxu0 0.0
    %247 = vmatpush.msra.mxu0 0.0
    %248 = vmatpush.msra.mxu0 0.0
    %249 = vmatpush.msra.mxu0 0.0
    %250 = vmatpush.msra.mxu0 0.0
    %251 = vmatpush.msra.mxu0 %v163
    %252 = vmatpush.msra.mxu0 %v160
    %253 = vmatpush.msra.mxu0 %v157
    %254 = vmatpush.msra.mxu0 %v154
    %255 = vmatmul.f32.gmra.mxu0 %v175
    %v256 = vpop.f32.mrf.mxu0
    %v257 = vadd.f32 %v168, %v256
    %258 = vmatmul.f32.gmra.mxu0 %v178
    %v259 = vpop.f32.mrf.mxu0
    %v260 = vadd.f32 %v168, %v259
    %261 = vmatmul.f32.gmra.mxu0 %v181
    %v262 = vpop.f32.mrf.mxu0
    %v263 = vadd.f32 %v168, %v262
    %264 = vmatmul.f32.gmra.mxu0 %v184
    %v265 = vpop.f32.mrf.mxu0
    %v266 = vadd.f32 %v168, %v265
    %267 = vmatmul.f32.gmra.mxu0 %v187
    %v268 = vpop.f32.mrf.mxu0
    %v269 = vadd.f32 %v168, %v268
    %270 = vmatmul.f32.gmra.mxu0 %v190
    %v271 = vpop.f32.mrf.mxu0
    %v272 = vadd.f32 %v168, %v271
    %273 = vmatmul.f32.gmra.mxu0 %v193
    %v274 = vpop.f32.mrf.mxu0
    %v275 = vadd.f32 %v168, %v274
    %276 = vmatmul.f32.gmra.mxu0 %v196
    %v277 = vpop.f32.mrf.mxu0
    %v278 = vadd.f32 %v168, %v277
    %279 = vdwg.mxu0
    %280 = vmatpush.msra.mxu0 0.0
    %281 = vmatpush.msra.mxu0 0.0
    %282 = vmatpush.msra.mxu0 0.0
    %283 = vmatpush.msra.mxu0 0.0
    %284 = vmatpush.msra.mxu0 0.0
    %285 = vmatpush.msra.mxu0 0.0
    %286 = vmatpush.msra.mxu0 0.0
    %287 = vmatpush.msra.mxu0 0.0
    %288 = vmatpush.msra.mxu0 0.0
    %289 = vmatpush.msra.mxu0 0.0
    %290 = vmatpush.msra.mxu0 0.0
    %291 = vmatpush.msra.mxu0 0.0
    %292 = vmatpush.msra.mxu0 %v164
    %293 = vmatpush.msra.mxu0 %v161
    %294 = vmatpush.msra.mxu0 %v158
    %295 = vmatpush.msra.mxu0 %v155
    %296 = vmatmul.f32.gmra.mxu0 %v175
    %v297 = vpop.f32.mrf.mxu0
    %v298 = vadd.f32 %v169, %v297
    %299 = vmatmul.f32.gmra.mxu0 %v178
    %v300 = vpop.f32.mrf.mxu0
    %v301 = vadd.f32 %v169, %v300
    %302 = vmatmul.f32.gmra.mxu0 %v181
    %v303 = vpop.f32.mrf.mxu0
    %v304 = vadd.f32 %v169, %v303
    %305 = vmatmul.f32.gmra.mxu0 %v184
    %v306 = vpop.f32.mrf.mxu0
    %v307 = vadd.f32 %v169, %v306
    %308 = vmatmul.f32.gmra.mxu0 %v187
    %v309 = vpop.f32.mrf.mxu0
    %v310 = vadd.f32 %v169, %v309
    %311 = vmatmul.f32.gmra.mxu0 %v190
    %v312 = vpop.f32.mrf.mxu0
    %v313 = vadd.f32 %v169, %v312
    %314 = vmatmul.f32.gmra.mxu0 %v193
    %v315 = vpop.f32.mrf.mxu0
    %v316 = vadd.f32 %v169, %v315
    %317 = vmatmul.f32.gmra.mxu0 %v196
    %v318 = vpop.f32.mrf.mxu0
    %v319 = vadd.f32 %v169, %v318
    %320 = vdwg.mxu0
    %v321 = vlaneseq
    %v322 = vand.u32 %v321, 127
    %v323 = vld [vmem:[#allocation6] sm:$0xff]
    %324 = vmatpush.msra.mxu0 %v138
    %325 = vmatpush.msra.mxu0 %v135
    %326 = vmatpush.msra.mxu0 %v132
    %327 = vmatpush.msra.mxu0 %v129
    %328 = vmatpush.msra.mxu0 %v126
    %329 = vmatpush.msra.mxu0 %v123
    %330 = vmatpush.msra.mxu0 %v120
    %331 = vmatpush.msra.mxu0 %v117
    %332 = vmatpush.msra.mxu0 %v114
    %333 = vmatpush.msra.mxu0 %v111
    %334 = vmatpush.msra.mxu0 %v108
    %335 = vmatpush.msra.mxu0 %v105
    %336 = vmatpush.msra.mxu0 %v102
    %337 = vmatpush.msra.mxu0 %v99
    %338 = vmatpush.msra.mxu0 %v96
    %339 = vmatpush.msra.mxu0 %v93
    %340 = vmatmul.f32.gmra.mxu0 %v323
    %v341 = vpop.f32.mrf.mxu0
    %v342 = vadd.f32 0.0, %v341
    %343 = vdwg.mxu0
    %344 = vmatpush.msra.mxu0 %v139
    %345 = vmatpush.msra.mxu0 %v136
    %346 = vmatpush.msra.mxu0 %v133
    %347 = vmatpush.msra.mxu0 %v130
    %348 = vmatpush.msra.mxu0 %v127
    %349 = vmatpush.msra.mxu0 %v124
    %350 = vmatpush.msra.mxu0 %v121
    %351 = vmatpush.msra.mxu0 %v118
    %352 = vmatpush.msra.mxu0 %v115
    %353 = vmatpush.msra.mxu0 %v112
    %354 = vmatpush.msra.mxu0 %v109
    %355 = vmatpush.msra.mxu0 %v106
    %356 = vmatpush.msra.mxu0 %v103
    %357 = vmatpush.msra.mxu0 %v100
    %358 = vmatpush.msra.mxu0 %v97
    %359 = vmatpush.msra.mxu0 %v94
    %360 = vmatmul.f32.gmra.mxu0 %v323
    %v361 = vpop.f32.mrf.mxu0
    %v362 = vadd.f32 0.0, %v361
    %363 = vdwg.mxu0
    %364 = vmatpush.msra.mxu0 %v140
    %365 = vmatpush.msra.mxu0 %v137
    %366 = vmatpush.msra.mxu0 %v134
    %367 = vmatpush.msra.mxu0 %v131
    %368 = vmatpush.msra.mxu0 %v128
    %369 = vmatpush.msra.mxu0 %v125
    %370 = vmatpush.msra.mxu0 %v122
    %371 = vmatpush.msra.mxu0 %v119
    %372 = vmatpush.msra.mxu0 %v116
    %373 = vmatpush.msra.mxu0 %v113
    %374 = vmatpush.msra.mxu0 %v110
    %375 = vmatpush.msra.mxu0 %v107
    %376 = vmatpush.msra.mxu0 %v104
    %377 = vmatpush.msra.mxu0 %v101
    %378 = vmatpush.msra.mxu0 %v98
    %379 = vmatpush.msra.mxu0 %v95
    %380 = vmatmul.f32.gmra.mxu0 %v323
    %v381 = vpop.f32.mrf.mxu0
    %v382 = vadd.f32 0.0, %v381
    %383 = vdwg.mxu0
    %v384 = vadd.f32 %v216, %v342
    %v385 = vxor.u32 %v384, 2147483648
    %v386 = vmul.f32 %v385, 1.442695
    %v387 = vpow.pop %v386
    %v388 = vadd.f32 %v387, 1.0
    %v389 = vrcp.pop %v388
    %v390 = vmul.f32 %v388, %v389
    %v391 = vsub.f32 1.0, %v390
    %v392 = vmul.f32 %v389, %v391
    %v393 = vadd.f32 %v389, %v392
    %vm394 = vweird.f32 %v388
    %vm395 = vweird.f32 %v389
    %vm396 = vmor %vm394, %vm395
    %v397 = vsel %vm396, %v389, %v393
    %v398 = vand.u32 2147483647, %v388
    %vm399 = vcmp.eq.f32.partialorder %v398, 8.507059e+37
    %v400 = vand.u32 %v388, 2147483648
    %v401 = vor.u32 1.1754944e-38, %v400
    %v402 = vsel %vm399, %v401, %v397
    %v403 = vmul.f32 1.0, %v402
    %v404 = vadd.f32 %v257, %v362
    %v405 = vxor.u32 %v404, 2147483648
    %v406 = vmul.f32 %v405, 1.442695
    %v407 = vpow.pop %v406
    %v408 = vadd.f32 %v407, 1.0
    %v409 = vrcp.pop %v408
    %v410 = vmul.f32 %v408, %v409
    %v411 = vsub.f32 1.0, %v410
    %v412 = vmul.f32 %v409, %v411
    %v413 = vadd.f32 %v409, %v412
    %vm414 = vweird.f32 %v408
    %vm415 = vweird.f32 %v409
    %vm416 = vmor %vm414, %vm415
    %v417 = vsel %vm416, %v409, %v413
    %v418 = vand.u32 2147483647, %v408
    %vm419 = vcmp.eq.f32.partialorder %v418, 8.507059e+37
    %v420 = vand.u32 %v408, 2147483648
    %v421 = vor.u32 1.1754944e-38, %v420
    %v422 = vsel %vm419, %v421, %v417
    %v423 = vmul.f32 1.0, %v422
    %v425 = vperm.slane %v141, 0
    %v427 = vadd.f32 %v382, %v425
    %v428 = vmul.f32 %v403, %v427
    %v429 = vadd.f32 %v298, %v428
    %v430 = vtanh.pop %v429
    %v431 = vsub.f32 1.0, %v423
    %v432 = vmul.f32 %v431, %v430
    %v433 = vmul.f32 %v423, %v323
    %v434 = vadd.f32 %v432, %v433
    %v436 = vperm.slane %v142, 0
    %v438 = vmul.f32 %v434, %v436
    %439 = vadd.xlane.f32.xlu0 %v438
    %v440 = vpop.xlane.xlu0 %439
    %vm441 = vcmp.eq.s32.totalorder %v322, 0
    %v442 = vsel %vm441, 1, 0
    %vm443 = vcmp.eq.s32.totalorder %v442, 1
    %v444 = vsel %vm443, %v440, 0.0
    %v445 = vadd.f32 %v444, 0.0
    %446 = vmatpush.msra.mxu0 %v138
    %447 = vmatpush.msra.mxu0 %v135
    %448 = vmatpush.msra.mxu0 %v132
    %449 = vmatpush.msra.mxu0 %v129
    %450 = vmatpush.msra.mxu0 %v126
    %451 = vmatpush.msra.mxu0 %v123
    %452 = vmatpush.msra.mxu0 %v120
    %453 = vmatpush.msra.mxu0 %v117
    %454 = vmatpush.msra.mxu0 %v114
    %455 = vmatpush.msra.mxu0 %v111
    %456 = vmatpush.msra.mxu0 %v108
    %457 = vmatpush.msra.mxu0 %v105
    %458 = vmatpush.msra.mxu0 %v102
    %459 = vmatpush.msra.mxu0 %v99
    %460 = vmatpush.msra.mxu0 %v96
    %461 = vmatpush.msra.mxu0 %v93
    %462 = vmatmul.f32.gmra.mxu0 %v434
    %v463 = vpop.f32.mrf.mxu0
    %v464 = vadd.f32 0.0, %v463
    %465 = vdwg.mxu0
    %466 = vmatpush.msra.mxu0 %v139
    %467 = vmatpush.msra.mxu0 %v136
    %468 = vmatpush.msra.mxu0 %v133
    %469 = vmatpush.msra.mxu0 %v130
    %470 = vmatpush.msra.mxu0 %v127
    %471 = vmatpush.msra.mxu0 %v124
    %472 = vmatpush.msra.mxu0 %v121
    %473 = vmatpush.msra.mxu0 %v118
    %474 = vmatpush.msra.mxu0 %v115
    %475 = vmatpush.msra.mxu0 %v112
    %476 = vmatpush.msra.mxu0 %v109
    %477 = vmatpush.msra.mxu0 %v106
    %478 = vmatpush.msra.mxu0 %v103
    %479 = vmatpush.msra.mxu0 %v100
    %480 = vmatpush.msra.mxu0 %v97
    %481 = vmatpush.msra.mxu0 %v94
    %482 = vmatmul.f32.gmra.mxu0 %v434
    %v483 = vpop.f32.mrf.mxu0
    %v484 = vadd.f32 0.0, %v483
    %485 = vdwg.mxu0
    %486 = vmatpush.msra.mxu0 %v140
    %487 = vmatpush.msra.mxu0 %v137
    %488 = vmatpush.msra.mxu0 %v134
    %489 = vmatpush.msra.mxu0 %v131
    %490 = vmatpush.msra.mxu0 %v128
    %491 = vmatpush.msra.mxu0 %v125
    %492 = vmatpush.msra.mxu0 %v122
    %493 = vmatpush.msra.mxu0 %v119
    %494 = vmatpush.msra.mxu0 %v116
    %495 = vmatpush.msra.mxu0 %v113
    %496 = vmatpush.msra.mxu0 %v110
    %497 = vmatpush.msra.mxu0 %v107
    %498 = vmatpush.msra.mxu0 %v104
    %499 = vmatpush.msra.mxu0 %v101
    %500 = vmatpush.msra.mxu0 %v98
    %501 = vmatpush.msra.mxu0 %v95
    %502 = vmatmul.f32.gmra.mxu0 %v434
    %v503 = vpop.f32.mrf.mxu0
    %v504 = vadd.f32 0.0, %v503
    %505 = vdwg.mxu0
    %v506 = vadd.f32 %v219, %v464
    %v507 = vxor.u32 %v506, 2147483648
    %v508 = vmul.f32 %v507, 1.442695
    %v509 = vpow.pop %v508
    %v510 = vadd.f32 %v509, 1.0
    %v511 = vrcp.pop %v510
    %v512 = vmul.f32 %v510, %v511
    %v513 = vsub.f32 1.0, %v512
    %v514 = vmul.f32 %v511, %v513
    %v515 = vadd.f32 %v511, %v514
    %vm516 = vweird.f32 %v510
    %vm517 = vweird.f32 %v511
    %vm518 = vmor %vm516, %vm517
    %v519 = vsel %vm518, %v511, %v515
    %v520 = vand.u32 2147483647, %v510
    %vm521 = vcmp.eq.f32.partialorder %v520, 8.507059e+37
    %v522 = vand.u32 %v510, 2147483648
    %v523 = vor.u32 1.1754944e-38, %v522
    %v524 = vsel %vm521, %v523, %v519
    %v525 = vmul.f32 1.0, %v524
    %v526 = vadd.f32 %v260, %v484
    %v527 = vxor.u32 %v526, 2147483648
    %v528 = vmul.f32 %v527, 1.442695
    %v529 = vpow.pop %v528
    %v530 = vadd.f32 %v529, 1.0
    %v531 = vrcp.pop %v530
    %v532 = vmul.f32 %v530, %v531
    %v533 = vsub.f32 1.0, %v532
    %v534 = vmul.f32 %v531, %v533
    %v535 = vadd.f32 %v531, %v534
    %vm536 = vweird.f32 %v530
    %vm537 = vweird.f32 %v531
    %vm538 = vmor %vm536, %vm537
    %v539 = vsel %vm538, %v531, %v535
    %v540 = vand.u32 2147483647, %v530
    %vm541 = vcmp.eq.f32.partialorder %v540, 8.507059e+37
    %v542 = vand.u32 %v530, 2147483648
    %v543 = vor.u32 1.1754944e-38, %v542
    %v544 = vsel %vm541, %v543, %v539
    %v545 = vmul.f32 1.0, %v544
    %v546 = vadd.f32 %v504, %v425
    %v547 = vmul.f32 %v525, %v546
    %v548 = vadd.f32 %v301, %v547
    %v549 = vtanh.pop %v548
    %v550 = vsub.f32 1.0, %v545
    %v551 = vmul.f32 %v550, %v549
    %v552 = vmul.f32 %v545, %v434
    %v553 = vadd.f32 %v551, %v552
    %v554 = vmul.f32 %v553, %v436
    %555 = vadd.xlane.f32.xlu0 %v554
    %v556 = vpop.xlane.xlu0 %555
    %vm557 = vcmp.eq.s32.totalorder %v322, 1
    %v558 = vsel %vm557, 1, 0
    %vm559 = vcmp.eq.s32.totalorder %v558, 1
    %v560 = vsel %vm559, %v556, 0.0
    %v561 = vadd.f32 %v445, %v560
    %562 = vmatpush.msra.mxu0 %v138
    %563 = vmatpush.msra.mxu0 %v135
    %564 = vmatpush.msra.mxu0 %v132
    %565 = vmatpush.msra.mxu0 %v129
    %566 = vmatpush.msra.mxu0 %v126
    %567 = vmatpush.msra.mxu0 %v123
    %568 = vmatpush.msra.mxu0 %v120
    %569 = vmatpush.msra.mxu0 %v117
    %570 = vmatpush.msra.mxu0 %v114
    %571 = vmatpush.msra.mxu0 %v111
    %572 = vmatpush.msra.mxu0 %v108
    %573 = vmatpush.msra.mxu0 %v105
    %574 = vmatpush.msra.mxu0 %v102
    %575 = vmatpush.msra.mxu0 %v99
    %576 = vmatpush.msra.mxu0 %v96
    %577 = vmatpush.msra.mxu0 %v93
    %578 = vmatmul.f32.gmra.mxu0 %v553
    %v579 = vpop.f32.mrf.mxu0
    %v580 = vadd.f32 0.0, %v579
    %581 = vdwg.mxu0
    %582 = vmatpush.msra.mxu0 %v139
    %583 = vmatpush.msra.mxu0 %v136
    %584 = vmatpush.msra.mxu0 %v133
    %585 = vmatpush.msra.mxu0 %v130
    %586 = vmatpush.msra.mxu0 %v127
    %587 = vmatpush.msra.mxu0 %v124
    %588 = vmatpush.msra.mxu0 %v121
    %589 = vmatpush.msra.mxu0 %v118
    %590 = vmatpush.msra.mxu0 %v115
    %591 = vmatpush.msra.mxu0 %v112
    %592 = vmatpush.msra.mxu0 %v109
    %593 = vmatpush.msra.mxu0 %v106
    %594 = vmatpush.msra.mxu0 %v103
    %595 = vmatpush.msra.mxu0 %v100
    %596 = vmatpush.msra.mxu0 %v97
    %597 = vmatpush.msra.mxu0 %v94
    %598 = vmatmul.f32.gmra.mxu0 %v553
    %v599 = vpop.f32.mrf.mxu0
    %v600 = vadd.f32 0.0, %v599
    %601 = vdwg.mxu0
    %602 = vmatpush.msra.mxu0 %v140
    %603 = vmatpush.msra.mxu0 %v137
    %604 = vmatpush.msra.mxu0 %v134
    %605 = vmatpush.msra.mxu0 %v131
    %606 = vmatpush.msra.mxu0 %v128
    %607 = vmatpush.msra.mxu0 %v125
    %608 = vmatpush.msra.mxu0 %v122
    %609 = vmatpush.msra.mxu0 %v119
    %610 = vmatpush.msra.mxu0 %v116
    %611 = vmatpush.msra.mxu0 %v113
    %612 = vmatpush.msra.mxu0 %v110
    %613 = vmatpush.msra.mxu0 %v107
    %614 = vmatpush.msra.mxu0 %v104
    %615 = vmatpush.msra.mxu0 %v101
    %616 = vmatpush.msra.mxu0 %v98
    %617 = vmatpush.msra.mxu0 %v95
    %618 = vmatmul.f32.gmra.mxu0 %v553
    %v619 = vpop.f32.mrf.mxu0
    %v620 = vadd.f32 0.0, %v619
    %621 = vdwg.mxu0
    %v622 = vadd.f32 %v222, %v580
    %v623 = vxor.u32 %v622, 2147483648
    %v624 = vmul.f32 %v623, 1.442695
    %v625 = vpow.pop %v624
    %v626 = vadd.f32 %v625, 1.0
    %v627 = vrcp.pop %v626
    %v628 = vmul.f32 %v626, %v627
    %v629 = vsub.f32 1.0, %v628
    %v630 = vmul.f32 %v627, %v629
    %v631 = vadd.f32 %v627, %v630
    %vm632 = vweird.f32 %v626
    %vm633 = vweird.f32 %v627
    %vm634 = vmor %vm632, %vm633
    %v635 = vsel %vm634, %v627, %v631
    %v636 = vand.u32 2147483647, %v626
    %vm637 = vcmp.eq.f32.partialorder %v636, 8.507059e+37
    %v638 = vand.u32 %v626, 2147483648
    %v639 = vor.u32 1.1754944e-38, %v638
    %v640 = vsel %vm637, %v639, %v635
    %v641 = vmul.f32 1.0, %v640
    %v642 = vadd.f32 %v263, %v600
    %v643 = vxor.u32 %v642, 2147483648
    %v644 = vmul.f32 %v643, 1.442695
    %v645 = vpow.pop %v644
    %v646 = vadd.f32 %v645, 1.0
    %v647 = vrcp.pop %v646
    %v648 = vmul.f32 %v646, %v647
    %v649 = vsub.f32 1.0, %v648
    %v650 = vmul.f32 %v647, %v649
    %v651 = vadd.f32 %v647, %v650
    %vm652 = vweird.f32 %v646
    %vm653 = vweird.f32 %v647
    %vm654 = vmor %vm652, %vm653
    %v655 = vsel %vm654, %v647, %v651
    %v656 = vand.u32 2147483647, %v646
    %vm657 = vcmp.eq.f32.partialorder %v656, 8.507059e+37
    %v658 = vand.u32 %v646, 2147483648
    %v659 = vor.u32 1.1754944e-38, %v658
    %v660 = vsel %vm657, %v659, %v655
    %v661 = vmul.f32 1.0, %v660
    %v662 = vadd.f32 %v620, %v425
    %v663 = vmul.f32 %v641, %v662
    %v664 = vadd.f32 %v304, %v663
    %v665 = vtanh.pop %v664
    %v666 = vsub.f32 1.0, %v661
    %v667 = vmul.f32 %v666, %v665
    %v668 = vmul.f32 %v661, %v553
    %v669 = vadd.f32 %v667, %v668
    %v670 = vmul.f32 %v669, %v436
    %671 = vadd.xlane.f32.xlu0 %v670
    %v672 = vpop.xlane.xlu0 %671
    %vm673 = vcmp.eq.s32.totalorder %v322, 2
    %v674 = vsel %vm673, 1, 0
    %vm675 = vcmp.eq.s32.totalorder %v674, 1
    %v676 = vsel %vm675, %v672, 0.0
    %v677 = vadd.f32 %v561, %v676
    %678 = vmatpush.msra.mxu0 %v138
    %679 = vmatpush.msra.mxu0 %v135
    %680 = vmatpush.msra.mxu0 %v132
    %681 = vmatpush.msra.mxu0 %v129
    %682 = vmatpush.msra.mxu0 %v126
    %683 = vmatpush.msra.mxu0 %v123
    %684 = vmatpush.msra.mxu0 %v120
    %685 = vmatpush.msra.mxu0 %v117
    %686 = vmatpush.msra.mxu0 %v114
    %687 = vmatpush.msra.mxu0 %v111
    %688 = vmatpush.msra.mxu0 %v108
    %689 = vmatpush.msra.mxu0 %v105
    %690 = vmatpush.msra.mxu0 %v102
    %691 = vmatpush.msra.mxu0 %v99
    %692 = vmatpush.msra.mxu0 %v96
    %693 = vmatpush.msra.mxu0 %v93
    %694 = vmatmul.f32.gmra.mxu0 %v669
    %v695 = vpop.f32.mrf.mxu0
    %v696 = vadd.f32 0.0, %v695
    %697 = vdwg.mxu0
    %698 = vmatpush.msra.mxu0 %v139
    %699 = vmatpush.msra.mxu0 %v136
    %700 = vmatpush.msra.mxu0 %v133
    %701 = vmatpush.msra.mxu0 %v130
    %702 = vmatpush.msra.mxu0 %v127
    %703 = vmatpush.msra.mxu0 %v124
    %704 = vmatpush.msra.mxu0 %v121
    %705 = vmatpush.msra.mxu0 %v118
    %706 = vmatpush.msra.mxu0 %v115
    %707 = vmatpush.msra.mxu0 %v112
    %708 = vmatpush.msra.mxu0 %v109
    %709 = vmatpush.msra.mxu0 %v106
    %710 = vmatpush.msra.mxu0 %v103
    %711 = vmatpush.msra.mxu0 %v100
    %712 = vmatpush.msra.mxu0 %v97
    %713 = vmatpush.msra.mxu0 %v94
    %714 = vmatmul.f32.gmra.mxu0 %v669
    %v715 = vpop.f32.mrf.mxu0
    %v716 = vadd.f32 0.0, %v715
    %717 = vdwg.mxu0
    %718 = vmatpush.msra.mxu0 %v140
    %719 = vmatpush.msra.mxu0 %v137
    %720 = vmatpush.msra.mxu0 %v134
    %721 = vmatpush.msra.mxu0 %v131
    %722 = vmatpush.msra.mxu0 %v128
    %723 = vmatpush.msra.mxu0 %v125
    %724 = vmatpush.msra.mxu0 %v122
    %725 = vmatpush.msra.mxu0 %v119
    %726 = vmatpush.msra.mxu0 %v116
    %727 = vmatpush.msra.mxu0 %v113
    %728 = vmatpush.msra.mxu0 %v110
    %729 = vmatpush.msra.mxu0 %v107
    %730 = vmatpush.msra.mxu0 %v104
    %731 = vmatpush.msra.mxu0 %v101
    %732 = vmatpush.msra.mxu0 %v98
    %733 = vmatpush.msra.mxu0 %v95
    %734 = vmatmul.f32.gmra.mxu0 %v669
    %v735 = vpop.f32.mrf.mxu0
    %v736 = vadd.f32 0.0, %v735
    %737 = vdwg.mxu0
    %v738 = vadd.f32 %v225, %v696
    %v739 = vxor.u32 %v738, 2147483648
    %v740 = vmul.f32 %v739, 1.442695
    %v741 = vpow.pop %v740
    %v742 = vadd.f32 %v741, 1.0
    %v743 = vrcp.pop %v742
    %v744 = vmul.f32 %v742, %v743
    %v745 = vsub.f32 1.0, %v744
    %v746 = vmul.f32 %v743, %v745
    %v747 = vadd.f32 %v743, %v746
    %vm748 = vweird.f32 %v742
    %vm749 = vweird.f32 %v743
    %vm750 = vmor %vm748, %vm749
    %v751 = vsel %vm750, %v743, %v747
    %v752 = vand.u32 2147483647, %v742
    %vm753 = vcmp.eq.f32.partialorder %v752, 8.507059e+37
    %v754 = vand.u32 %v742, 2147483648
    %v755 = vor.u32 1.1754944e-38, %v754
    %v756 = vsel %vm753, %v755, %v751
    %v757 = vmul.f32 1.0, %v756
    %v758 = vadd.f32 %v266, %v716
    %v759 = vxor.u32 %v758, 2147483648
    %v760 = vmul.f32 %v759, 1.442695
    %v761 = vpow.pop %v760
    %v762 = vadd.f32 %v761, 1.0
    %v763 = vrcp.pop %v762
    %v764 = vmul.f32 %v762, %v763
    %v765 = vsub.f32 1.0, %v764
    %v766 = vmul.f32 %v763, %v765
    %v767 = vadd.f32 %v763, %v766
    %vm768 = vweird.f32 %v762
    %vm769 = vweird.f32 %v763
    %vm770 = vmor %vm768, %vm769
    %v771 = vsel %vm770, %v763, %v767
    %v772 = vand.u32 2147483647, %v762
    %vm773 = vcmp.eq.f32.partialorder %v772, 8.507059e+37
    %v774 = vand.u32 %v762, 2147483648
    %v775 = vor.u32 1.1754944e-38, %v774
    %v776 = vsel %vm773, %v775, %v771
    %v777 = vmul.f32 1.0, %v776
    %v778 = vadd.f32 %v736, %v425
    %v779 = vmul.f32 %v757, %v778
    %v780 = vadd.f32 %v307, %v779
    %v781 = vtanh.pop %v780
    %v782 = vsub.f32 1.0, %v777
    %v783 = vmul.f32 %v782, %v781
    %v784 = vmul.f32 %v777, %v669
    %v785 = vadd.f32 %v783, %v784
    %v786 = vmul.f32 %v785, %v436
    %787 = vadd.xlane.f32.xlu0 %v786
    %v788 = vpop.xlane.xlu0 %787
    %vm789 = vcmp.eq.s32.totalorder %v322, 3
    %v790 = vsel %vm789, 1, 0
    %vm791 = vcmp.eq.s32.totalorder %v790, 1
    %v792 = vsel %vm791, %v788, 0.0
    %v793 = vadd.f32 %v677, %v792
    %794 = vmatpush.msra.mxu0 %v138
    %795 = vmatpush.msra.mxu0 %v135
    %796 = vmatpush.msra.mxu0 %v132
    %797 = vmatpush.msra.mxu0 %v129
    %798 = vmatpush.msra.mxu0 %v126
    %799 = vmatpush.msra.mxu0 %v123
    %800 = vmatpush.msra.mxu0 %v120
    %801 = vmatpush.msra.mxu0 %v117
    %802 = vmatpush.msra.mxu0 %v114
    %803 = vmatpush.msra.mxu0 %v111
    %804 = vmatpush.msra.mxu0 %v108
    %805 = vmatpush.msra.mxu0 %v105
    %806 = vmatpush.msra.mxu0 %v102
    %807 = vmatpush.msra.mxu0 %v99
    %808 = vmatpush.msra.mxu0 %v96
    %809 = vmatpush.msra.mxu0 %v93
    %810 = vmatmul.f32.gmra.mxu0 %v785
    %v811 = vpop.f32.mrf.mxu0
    %v812 = vadd.f32 0.0, %v811
    %813 = vdwg.mxu0
    %814 = vmatpush.msra.mxu0 %v139
    %815 = vmatpush.msra.mxu0 %v136
    %816 = vmatpush.msra.mxu0 %v133
    %817 = vmatpush.msra.mxu0 %v130
    %818 = vmatpush.msra.mxu0 %v127
    %819 = vmatpush.msra.mxu0 %v124
    %820 = vmatpush.msra.mxu0 %v121
    %821 = vmatpush.msra.mxu0 %v118
    %822 = vmatpush.msra.mxu0 %v115
    %823 = vmatpush.msra.mxu0 %v112
    %824 = vmatpush.msra.mxu0 %v109
    %825 = vmatpush.msra.mxu0 %v106
    %826 = vmatpush.msra.mxu0 %v103
    %827 = vmatpush.msra.mxu0 %v100
    %828 = vmatpush.msra.mxu0 %v97
    %829 = vmatpush.msra.mxu0 %v94
    %830 = vmatmul.f32.gmra.mxu0 %v785
    %v831 = vpop.f32.mrf.mxu0
    %v832 = vadd.f32 0.0, %v831
    %833 = vdwg.mxu0
    %834 = vmatpush.msra.mxu0 %v140
    %835 = vmatpush.msra.mxu0 %v137
    %836 = vmatpush.msra.mxu0 %v134
    %837 = vmatpush.msra.mxu0 %v131
    %838 = vmatpush.msra.mxu0 %v128
    %839 = vmatpush.msra.mxu0 %v125
    %840 = vmatpush.msra.mxu0 %v122
    %841 = vmatpush.msra.mxu0 %v119
    %842 = vmatpush.msra.mxu0 %v116
    %843 = vmatpush.msra.mxu0 %v113
    %844 = vmatpush.msra.mxu0 %v110
    %845 = vmatpush.msra.mxu0 %v107
    %846 = vmatpush.msra.mxu0 %v104
    %847 = vmatpush.msra.mxu0 %v101
    %848 = vmatpush.msra.mxu0 %v98
    %849 = vmatpush.msra.mxu0 %v95
    %850 = vmatmul.f32.gmra.mxu0 %v785
    %v851 = vpop.f32.mrf.mxu0
    %v852 = vadd.f32 0.0, %v851
    %853 = vdwg.mxu0
    %v854 = vadd.f32 %v228, %v812
    %v855 = vxor.u32 %v854, 2147483648
    %v856 = vmul.f32 %v855, 1.442695
    %v857 = vpow.pop %v856
    %v858 = vadd.f32 %v857, 1.0
    %v859 = vrcp.pop %v858
    %v860 = vmul.f32 %v858, %v859
    %v861 = vsub.f32 1.0, %v860
    %v862 = vmul.f32 %v859, %v861
    %v863 = vadd.f32 %v859, %v862
    %vm864 = vweird.f32 %v858
    %vm865 = vweird.f32 %v859
    %vm866 = vmor %vm864, %vm865
    %v867 = vsel %vm866, %v859, %v863
    %v868 = vand.u32 2147483647, %v858
    %vm869 = vcmp.eq.f32.partialorder %v868, 8.507059e+37
    %v870 = vand.u32 %v858, 2147483648
    %v871 = vor.u32 1.1754944e-38, %v870
    %v872 = vsel %vm869, %v871, %v867
    %v873 = vmul.f32 1.0, %v872
    %v874 = vadd.f32 %v269, %v832
    %v875 = vxor.u32 %v874, 2147483648
    %v876 = vmul.f32 %v875, 1.442695
    %v877 = vpow.pop %v876
    %v878 = vadd.f32 %v877, 1.0
    %v879 = vrcp.pop %v878
    %v880 = vmul.f32 %v878, %v879
    %v881 = vsub.f32 1.0, %v880
    %v882 = vmul.f32 %v879, %v881
    %v883 = vadd.f32 %v879, %v882
    %vm884 = vweird.f32 %v878
    %vm885 = vweird.f32 %v879
    %vm886 = vmor %vm884, %vm885
    %v887 = vsel %vm886, %v879, %v883
    %v888 = vand.u32 2147483647, %v878
    %vm889 = vcmp.eq.f32.partialorder %v888, 8.507059e+37
    %v890 = vand.u32 %v878, 2147483648
    %v891 = vor.u32 1.1754944e-38, %v890
    %v892 = vsel %vm889, %v891, %v887
    %v893 = vmul.f32 1.0, %v892
    %v894 = vadd.f32 %v852, %v425
    %v895 = vmul.f32 %v873, %v894
    %v896 = vadd.f32 %v310, %v895
    %v897 = vtanh.pop %v896
    %v898 = vsub.f32 1.0, %v893
    %v899 = vmul.f32 %v898, %v897
    %v900 = vmul.f32 %v893, %v785
    %v901 = vadd.f32 %v899, %v900
    %v902 = vmul.f32 %v901, %v436
    %903 = vadd.xlane.f32.xlu0 %v902
    %v904 = vpop.xlane.xlu0 %903
    %vm905 = vcmp.eq.s32.totalorder %v322, 4
    %v906 = vsel %vm905, 1, 0
    %vm907 = vcmp.eq.s32.totalorder %v906, 1
    %v908 = vsel %vm907, %v904, 0.0
    %v909 = vadd.f32 %v793, %v908
    %910 = vmatpush.msra.mxu0 %v138
    %911 = vmatpush.msra.mxu0 %v135
    %912 = vmatpush.msra.mxu0 %v132
    %913 = vmatpush.msra.mxu0 %v129
    %914 = vmatpush.msra.mxu0 %v126
    %915 = vmatpush.msra.mxu0 %v123
    %916 = vmatpush.msra.mxu0 %v120
    %917 = vmatpush.msra.mxu0 %v117
    %918 = vmatpush.msra.mxu0 %v114
    %919 = vmatpush.msra.mxu0 %v111
    %920 = vmatpush.msra.mxu0 %v108
    %921 = vmatpush.msra.mxu0 %v105
    %922 = vmatpush.msra.mxu0 %v102
    %923 = vmatpush.msra.mxu0 %v99
    %924 = vmatpush.msra.mxu0 %v96
    %925 = vmatpush.msra.mxu0 %v93
    %926 = vmatmul.f32.gmra.mxu0 %v901
    %v927 = vpop.f32.mrf.mxu0
    %v928 = vadd.f32 0.0, %v927
    %929 = vdwg.mxu0
    %930 = vmatpush.msra.mxu0 %v139
    %931 = vmatpush.msra.mxu0 %v136
    %932 = vmatpush.msra.mxu0 %v133
    %933 = vmatpush.msra.mxu0 %v130
    %934 = vmatpush.msra.mxu0 %v127
    %935 = vmatpush.msra.mxu0 %v124
    %936 = vmatpush.msra.mxu0 %v121
    %937 = vmatpush.msra.mxu0 %v118
    %938 = vmatpush.msra.mxu0 %v115
    %939 = vmatpush.msra.mxu0 %v112
    %940 = vmatpush.msra.mxu0 %v109
    %941 = vmatpush.msra.mxu0 %v106
    %942 = vmatpush.msra.mxu0 %v103
    %943 = vmatpush.msra.mxu0 %v100
    %944 = vmatpush.msra.mxu0 %v97
    %945 = vmatpush.msra.mxu0 %v94
    %946 = vmatmul.f32.gmra.mxu0 %v901
    %v947 = vpop.f32.mrf.mxu0
    %v948 = vadd.f32 0.0, %v947
    %949 = vdwg.mxu0
    %950 = vmatpush.msra.mxu0 %v140
    %951 = vmatpush.msra.mxu0 %v137
    %952 = vmatpush.msra.mxu0 %v134
    %953 = vmatpush.msra.mxu0 %v131
    %954 = vmatpush.msra.mxu0 %v128
    %955 = vmatpush.msra.mxu0 %v125
    %956 = vmatpush.msra.mxu0 %v122
    %957 = vmatpush.msra.mxu0 %v119
    %958 = vmatpush.msra.mxu0 %v116
    %959 = vmatpush.msra.mxu0 %v113
    %960 = vmatpush.msra.mxu0 %v110
    %961 = vmatpush.msra.mxu0 %v107
    %962 = vmatpush.msra.mxu0 %v104
    %963 = vmatpush.msra.mxu0 %v101
    %964 = vmatpush.msra.mxu0 %v98
    %965 = vmatpush.msra.mxu0 %v95
    %966 = vmatmul.f32.gmra.mxu0 %v901
    %v967 = vpop.f32.mrf.mxu0
    %v968 = vadd.f32 0.0, %v967
    %969 = vdwg.mxu0
    %v970 = vadd.f32 %v231, %v928
    %v971 = vxor.u32 %v970, 2147483648
    %v972 = vmul.f32 %v971, 1.442695
    %v973 = vpow.pop %v972
    %v974 = vadd.f32 %v973, 1.0
    %v975 = vrcp.pop %v974
    %v976 = vmul.f32 %v974, %v975
    %v977 = vsub.f32 1.0, %v976
    %v978 = vmul.f32 %v975, %v977
    %v979 = vadd.f32 %v975, %v978
    %vm980 = vweird.f32 %v974
    %vm981 = vweird.f32 %v975
    %vm982 = vmor %vm980, %vm981
    %v983 = vsel %vm982, %v975, %v979
    %v984 = vand.u32 2147483647, %v974
    %vm985 = vcmp.eq.f32.partialorder %v984, 8.507059e+37
    %v986 = vand.u32 %v974, 2147483648
    %v987 = vor.u32 1.1754944e-38, %v986
    %v988 = vsel %vm985, %v987, %v983
    %v989 = vmul.f32 1.0, %v988
    %v990 = vadd.f32 %v272, %v948
    %v991 = vxor.u32 %v990, 2147483648
    %v992 = vmul.f32 %v991, 1.442695
    %v993 = vpow.pop %v992
    %v994 = vadd.f32 %v993, 1.0
    %v995 = vrcp.pop %v994
    %v996 = vmul.f32 %v994, %v995
    %v997 = vsub.f32 1.0, %v996
    %v998 = vmul.f32 %v995, %v997
    %v999 = vadd.f32 %v995, %v998
    %vm1000 = vweird.f32 %v994
    %vm1001 = vweird.f32 %v995
    %vm1002 = vmor %vm1000, %vm1001
    %v1003 = vsel %vm1002, %v995, %v999
    %v1004 = vand.u32 2147483647, %v994
    %vm1005 = vcmp.eq.f32.partialorder %v1004, 8.507059e+37
    %v1006 = vand.u32 %v994, 2147483648
    %v1007 = vor.u32 1.1754944e-38, %v1006
    %v1008 = vsel %vm1005, %v1007, %v1003
    %v1009 = vmul.f32 1.0, %v1008
    %v1010 = vadd.f32 %v968, %v425
    %v1011 = vmul.f32 %v989, %v1010
    %v1012 = vadd.f32 %v313, %v1011
    %v1013 = vtanh.pop %v1012
    %v1014 = vsub.f32 1.0, %v1009
    %v1015 = vmul.f32 %v1014, %v1013
    %v1016 = vmul.f32 %v1009, %v901
    %v1017 = vadd.f32 %v1015, %v1016
    %v1018 = vmul.f32 %v1017, %v436
    %1019 = vadd.xlane.f32.xlu0 %v1018
    %v1020 = vpop.xlane.xlu0 %1019
    %vm1021 = vcmp.eq.s32.totalorder %v322, 5
    %v1022 = vsel %vm1021, 1, 0
    %vm1023 = vcmp.eq.s32.totalorder %v1022, 1
    %v1024 = vsel %vm1023, %v1020, 0.0
    %v1025 = vadd.f32 %v909, %v1024
    %1026 = vmatpush.msra.mxu0 %v138
    %1027 = vmatpush.msra.mxu0 %v135
    %1028 = vmatpush.msra.mxu0 %v132
    %1029 = vmatpush.msra.mxu0 %v129
    %1030 = vmatpush.msra.mxu0 %v126
    %1031 = vmatpush.msra.mxu0 %v123
    %1032 = vmatpush.msra.mxu0 %v120
    %1033 = vmatpush.msra.mxu0 %v117
    %1034 = vmatpush.msra.mxu0 %v114
    %1035 = vmatpush.msra.mxu0 %v111
    %1036 = vmatpush.msra.mxu0 %v108
    %1037 = vmatpush.msra.mxu0 %v105
    %1038 = vmatpush.msra.mxu0 %v102
    %1039 = vmatpush.msra.mxu0 %v99
    %1040 = vmatpush.msra.mxu0 %v96
    %1041 = vmatpush.msra.mxu0 %v93
    %1042 = vmatmul.f32.gmra.mxu0 %v1017
    %v1043 = vpop.f32.mrf.mxu0
    %v1044 = vadd.f32 0.0, %v1043
    %1045 = vdwg.mxu0
    %1046 = vmatpush.msra.mxu0 %v139
    %1047 = vmatpush.msra.mxu0 %v136
    %1048 = vmatpush.msra.mxu0 %v133
    %1049 = vmatpush.msra.mxu0 %v130
    %1050 = vmatpush.msra.mxu0 %v127
    %1051 = vmatpush.msra.mxu0 %v124
    %1052 = vmatpush.msra.mxu0 %v121
    %1053 = vmatpush.msra.mxu0 %v118
    %1054 = vmatpush.msra.mxu0 %v115
    %1055 = vmatpush.msra.mxu0 %v112
    %1056 = vmatpush.msra.mxu0 %v109
    %1057 = vmatpush.msra.mxu0 %v106
    %1058 = vmatpush.msra.mxu0 %v103
    %1059 = vmatpush.msra.mxu0 %v100
    %1060 = vmatpush.msra.mxu0 %v97
    %1061 = vmatpush.msra.mxu0 %v94
    %1062 = vmatmul.f32.gmra.mxu0 %v1017
    %v1063 = vpop.f32.mrf.mxu0
    %v1064 = vadd.f32 0.0, %v1063
    %1065 = vdwg.mxu0
    %1066 = vmatpush.msra.mxu0 %v140
    %1067 = vmatpush.msra.mxu0 %v137
    %1068 = vmatpush.msra.mxu0 %v134
    %1069 = vmatpush.msra.mxu0 %v131
    %1070 = vmatpush.msra.mxu0 %v128
    %1071 = vmatpush.msra.mxu0 %v125
    %1072 = vmatpush.msra.mxu0 %v122
    %1073 = vmatpush.msra.mxu0 %v119
    %1074 = vmatpush.msra.mxu0 %v116
    %1075 = vmatpush.msra.mxu0 %v113
    %1076 = vmatpush.msra.mxu0 %v110
    %1077 = vmatpush.msra.mxu0 %v107
    %1078 = vmatpush.msra.mxu0 %v104
    %1079 = vmatpush.msra.mxu0 %v101
    %1080 = vmatpush.msra.mxu0 %v98
    %1081 = vmatpush.msra.mxu0 %v95
    %1082 = vmatmul.f32.gmra.mxu0 %v1017
    %v1083 = vpop.f32.mrf.mxu0
    %v1084 = vadd.f32 0.0, %v1083
    %1085 = vdwg.mxu0
    %v1086 = vadd.f32 %v234, %v1044
    %v1087 = vxor.u32 %v1086, 2147483648
    %v1088 = vmul.f32 %v1087, 1.442695
    %v1089 = vpow.pop %v1088
    %v1090 = vadd.f32 %v1089, 1.0
    %v1091 = vrcp.pop %v1090
    %v1092 = vmul.f32 %v1090, %v1091
    %v1093 = vsub.f32 1.0, %v1092
    %v1094 = vmul.f32 %v1091, %v1093
    %v1095 = vadd.f32 %v1091, %v1094
    %vm1096 = vweird.f32 %v1090
    %vm1097 = vweird.f32 %v1091
    %vm1098 = vmor %vm1096, %vm1097
    %v1099 = vsel %vm1098, %v1091, %v1095
    %v1100 = vand.u32 2147483647, %v1090
    %vm1101 = vcmp.eq.f32.partialorder %v1100, 8.507059e+37
    %v1102 = vand.u32 %v1090, 2147483648
    %v1103 = vor.u32 1.1754944e-38, %v1102
    %v1104 = vsel %vm1101, %v1103, %v1099
    %v1105 = vmul.f32 1.0, %v1104
    %v1106 = vadd.f32 %v275, %v1064
    %v1107 = vxor.u32 %v1106, 2147483648
    %v1108 = vmul.f32 %v1107, 1.442695
    %v1109 = vpow.pop %v1108
    %v1110 = vadd.f32 %v1109, 1.0
    %v1111 = vrcp.pop %v1110
    %v1112 = vmul.f32 %v1110, %v1111
    %v1113 = vsub.f32 1.0, %v1112
    %v1114 = vmul.f32 %v1111, %v1113
    %v1115 = vadd.f32 %v1111, %v1114
    %vm1116 = vweird.f32 %v1110
    %vm1117 = vweird.f32 %v1111
    %vm1118 = vmor %vm1116, %vm1117
    %v1119 = vsel %vm1118, %v1111, %v1115
    %v1120 = vand.u32 2147483647, %v1110
    %vm1121 = vcmp.eq.f32.partialorder %v1120, 8.507059e+37
    %v1122 = vand.u32 %v1110, 2147483648
    %v1123 = vor.u32 1.1754944e-38, %v1122
    %v1124 = vsel %vm1121, %v1123, %v1119
    %v1125 = vmul.f32 1.0, %v1124
    %v1126 = vadd.f32 %v1084, %v425
    %v1127 = vmul.f32 %v1105, %v1126
    %v1128 = vadd.f32 %v316, %v1127
    %v1129 = vtanh.pop %v1128
    %v1130 = vsub.f32 1.0, %v1125
    %v1131 = vmul.f32 %v1130, %v1129
    %v1132 = vmul.f32 %v1125, %v1017
    %v1133 = vadd.f32 %v1131, %v1132
    %v1134 = vmul.f32 %v1133, %v436
    %1135 = vadd.xlane.f32.xlu0 %v1134
    %v1136 = vpop.xlane.xlu0 %1135
    %vm1137 = vcmp.eq.s32.totalorder %v322, 6
    %v1138 = vsel %vm1137, 1, 0
    %vm1139 = vcmp.eq.s32.totalorder %v1138, 1
    %v1140 = vsel %vm1139, %v1136, 0.0
    %v1141 = vadd.f32 %v1025, %v1140
    %1142 = vmatpush.msra.mxu0 %v138
    %1143 = vmatpush.msra.mxu0 %v135
    %1144 = vmatpush.msra.mxu0 %v132
    %1145 = vmatpush.msra.mxu0 %v129
    %1146 = vmatpush.msra.mxu0 %v126
    %1147 = vmatpush.msra.mxu0 %v123
    %1148 = vmatpush.msra.mxu0 %v120
    %1149 = vmatpush.msra.mxu0 %v117
    %1150 = vmatpush.msra.mxu0 %v114
    %1151 = vmatpush.msra.mxu0 %v111
    %1152 = vmatpush.msra.mxu0 %v108
    %1153 = vmatpush.msra.mxu0 %v105
    %1154 = vmatpush.msra.mxu0 %v102
    %1155 = vmatpush.msra.mxu0 %v99
    %1156 = vmatpush.msra.mxu0 %v96
    %1157 = vmatpush.msra.mxu0 %v93
    %1158 = vmatmul.f32.gmra.mxu0 %v1133
    %v1159 = vpop.f32.mrf.mxu0
    %v1160 = vadd.f32 0.0, %v1159
    %1161 = vdwg.mxu0
    %1162 = vmatpush.msra.mxu0 %v139
    %1163 = vmatpush.msra.mxu0 %v136
    %1164 = vmatpush.msra.mxu0 %v133
    %1165 = vmatpush.msra.mxu0 %v130
    %1166 = vmatpush.msra.mxu0 %v127
    %1167 = vmatpush.msra.mxu0 %v124
    %1168 = vmatpush.msra.mxu0 %v121
    %1169 = vmatpush.msra.mxu0 %v118
    %1170 = vmatpush.msra.mxu0 %v115
    %1171 = vmatpush.msra.mxu0 %v112
    %1172 = vmatpush.msra.mxu0 %v109
    %1173 = vmatpush.msra.mxu0 %v106
    %1174 = vmatpush.msra.mxu0 %v103
    %1175 = vmatpush.msra.mxu0 %v100
    %1176 = vmatpush.msra.mxu0 %v97
    %1177 = vmatpush.msra.mxu0 %v94
    %1178 = vmatmul.f32.gmra.mxu0 %v1133
    %v1179 = vpop.f32.mrf.mxu0
    %v1180 = vadd.f32 0.0, %v1179
    %1181 = vdwg.mxu0
    %1182 = vmatpush.msra.mxu0 %v140
    %1183 = vmatpush.msra.mxu0 %v137
    %1184 = vmatpush.msra.mxu0 %v134
    %1185 = vmatpush.msra.mxu0 %v131
    %1186 = vmatpush.msra.mxu0 %v128
    %1187 = vmatpush.msra.mxu0 %v125
    %1188 = vmatpush.msra.mxu0 %v122
    %1189 = vmatpush.msra.mxu0 %v119
    %1190 = vmatpush.msra.mxu0 %v116
    %1191 = vmatpush.msra.mxu0 %v113
    %1192 = vmatpush.msra.mxu0 %v110
    %1193 = vmatpush.msra.mxu0 %v107
    %1194 = vmatpush.msra.mxu0 %v104
    %1195 = vmatpush.msra.mxu0 %v101
    %1196 = vmatpush.msra.mxu0 %v98
    %1197 = vmatpush.msra.mxu0 %v95
    %1198 = vmatmul.f32.gmra.mxu0 %v1133
    %v1199 = vpop.f32.mrf.mxu0
    %v1200 = vadd.f32 0.0, %v1199
    %1201 = vdwg.mxu0
    %v1202 = vadd.f32 %v237, %v1160
    %v1203 = vxor.u32 %v1202, 2147483648
    %v1204 = vmul.f32 %v1203, 1.442695
    %v1205 = vpow.pop %v1204
    %v1206 = vadd.f32 %v1205, 1.0
    %v1207 = vrcp.pop %v1206
    %v1208 = vmul.f32 %v1206, %v1207
    %v1209 = vsub.f32 1.0, %v1208
    %v1210 = vmul.f32 %v1207, %v1209
    %v1211 = vadd.f32 %v1207, %v1210
    %vm1212 = vweird.f32 %v1206
    %vm1213 = vweird.f32 %v1207
    %vm1214 = vmor %vm1212, %vm1213
    %v1215 = vsel %vm1214, %v1207, %v1211
    %v1216 = vand.u32 2147483647, %v1206
    %vm1217 = vcmp.eq.f32.partialorder %v1216, 8.507059e+37
    %v1218 = vand.u32 %v1206, 2147483648
    %v1219 = vor.u32 1.1754944e-38, %v1218
    %v1220 = vsel %vm1217, %v1219, %v1215
    %v1221 = vmul.f32 1.0, %v1220
    %v1222 = vadd.f32 %v278, %v1180
    %v1223 = vxor.u32 %v1222, 2147483648
    %v1224 = vmul.f32 %v1223, 1.442695
    %v1225 = vpow.pop %v1224
    %v1226 = vadd.f32 %v1225, 1.0
    %v1227 = vrcp.pop %v1226
    %v1228 = vmul.f32 %v1226, %v1227
    %v1229 = vsub.f32 1.0, %v1228
    %v1230 = vmul.f32 %v1227, %v1229
    %v1231 = vadd.f32 %v1227, %v1230
    %vm1232 = vweird.f32 %v1226
    %vm1233 = vweird.f32 %v1227
    %vm1234 = vmor %vm1232, %vm1233
    %v1235 = vsel %vm1234, %v1227, %v1231
    %v1236 = vand.u32 2147483647, %v1226
    %vm1237 = vcmp.eq.f32.partialorder %v1236, 8.507059e+37
    %v1238 = vand.u32 %v1226, 2147483648
    %v1239 = vor.u32 1.1754944e-38, %v1238
    %v1240 = vsel %vm1237, %v1239, %v1235
    %v1241 = vmul.f32 1.0, %v1240
    %v1242 = vadd.f32 %v1200, %v425
    %v1243 = vmul.f32 %v1221, %v1242
    %v1244 = vadd.f32 %v319, %v1243
    %v1245 = vtanh.pop %v1244
    %v1246 = vsub.f32 1.0, %v1241
    %v1247 = vmul.f32 %v1246, %v1245
    %v1248 = vmul.f32 %v1241, %v1133
    %v1249 = vadd.f32 %v1247, %v1248
    %v1250 = vmul.f32 %v1249, %v436
    %1251 = vadd.xlane.f32.xlu0 %v1250
    %v1252 = vpop.xlane.xlu0 %1251
    %vm1253 = vcmp.eq.s32.totalorder %v322, 7
    %v1254 = vsel %vm1253, 1, 0
    %vm1255 = vcmp.eq.s32.totalorder %v1254, 1
    %v1256 = vsel %vm1255, %v1252, 0.0
    %v1257 = vadd.f32 %v1141, %v1256
    %v1258 = vstv %s144
    %v1259 = vadd.f32 %v1257, %v1258
    %vm1260 = vcmask 64512
    %1261 = vst.msk [vmem:[#allocation11] sm:$0xff] %vm1260, %v1259
    // Predicated region
    $region50: #{tpu_custom_call.1} parent=1 // pred_check
      _
    $region51: #{tpu_custom_call.1} parent=1 // pred_check_branch
      %1263 = sbr.rel (0) target = $region53
    $region52: #{tpu_custom_call.1} parent=1 // pred_region
      %1265 = vsyncadd [#allocation5], 0
      %s1267 = sshll.u32 [#allocation11], 4
      %s1268 = int_to_ptr.vmem [resolvable:$true] %s1267
      %s1269 = sshll.u32 %s8, 4
      %s1270 = int_to_ptr.hbm [resolvable:$true] %s1269
      %1272 = dma.vmem_to_hbm [thread:$0]  %s1268, 128, %s1270, [#allocation5]
    $region53: #{tpu_custom_call.1} parent=1 // pred_fallthru
      _
    // Predicated region
    $region54: #{tpu_custom_call.1} parent=1 // pred_check
      _
    $region55: #{tpu_custom_call.1} parent=1 // pred_check_branch
      %1274 = sbr.rel (0) target = $region57
    $region56: #{tpu_custom_call.1} parent=1 // pred_region
      %1276 = dma.done [#allocation5], 128
    $region57: #{tpu_custom_call.1} parent=1 // pred_fallthru
      _
    %1277 = vsyncpa [#allocation4], 1
    %1278 = vsyncpa [#allocation7], 1
    %1279 = vsyncpa [#allocation10], 1
    %1280 = vsyncpa [#allocation5], 1

</llo_original>
